<compile_context>
chip_gen: v5e
topology: v5e:2x2
jax: 0.10.0
libtpu: 0.0.40
codegen_flags: <defaults>
</compile_context>

<pallas_src>
import functools
import math

import jax
import jax.numpy as jnp
from jax import lax
from jax.experimental import pallas as pl
from jax.experimental.pallas import tpu as pltpu

LRELU_SLOPE = 0.2
LAST_COUT = 4 * 13          # ConvTranspose2d output channels (52)
LASTCONV_GROUP = 64         # each 52-ch sub-pixel group padded to 64 lanes


@functools.lru_cache(maxsize=None)
def _vmem_limit_bytes():
    """Per-generation scoped-VMEM limit (conservative fallback = 48 MiB)."""
    try:
        cap = int(pltpu.get_tpu_info().vmem_capacity_bytes)
    except Exception:  # noqa: BLE001 - any failure -> conservative default
        cap = 64 * 1024 * 1024
    return int(min(max(cap - 16 * 1024 * 1024, 32 * 1024 * 1024),
                   100 * 1024 * 1024))


def _compiler_params():
    return pltpu.CompilerParams(dimension_semantics=("parallel",),
                                vmem_limit_bytes=_vmem_limit_bytes())


# ------------------------------ Pallas kernels -------------------------------
def _s2d_conv_kernel(x_ref, w_ref, b_ref, o_ref, *, shifts, mp, slope):
    """Stride-2 3x3 conv folded to 4 shifted matmuls on the s2d input.

    x_ref: (1, Min, 4*Cin) flattened s2d grid (zero rows appended so every
    shifted read stays in-bounds).  w_ref: (4, 4*Cin, Cout).  Output rows
    follow the (Ho+1, Wo+1) s2d grid; the garbage last row/col is sliced off
    in XLA.
    """
    n = w_ref.shape[2]
    acc = jnp.zeros((mp, n), jnp.float32)
    for t, off in enumerate(shifts):
        acc = acc + jnp.dot(x_ref[0, off:off + mp, :], w_ref[t],
                            preferred_element_type=jnp.float32)
    acc = acc + b_ref[...]
    acc = jnp.where(acc > 0, acc, slope * acc)
    o_ref[0] = acc.astype(o_ref.dtype)


def _res_chain_kernel(x_ref, wr_ref, br_ref, beta_ref, wl_ref, bl_ref, mask_ref,
                      o_ref, buf_ref, *, n_layers, wp, mp, margin, slope):
    """8 x ResConv(3x3, *beta, +x, LeakyReLU) + ConvTranspose2d(4,2,1), fused.

    The feature map lives in `buf_ref` (VMEM, bf16) as flattened padded pixels:
    rows [margin, margin+mp) hold the (H+2)*(W+2) zero-padded image, channels
    in lanes; lead/trail margins stay zero.  A 3x3 tap (dh, dw) is then just a
    row-shifted slice buf[margin+off : margin+off+mp] with off = dh*(W+2)+dw,
    so every conv is 9 (M,C)@(C,N) MXU matmuls with no reshapes/gathers.
    """
    c = wr_ref.shape[2]
    mbuf = buf_ref.shape[0]
    # zero only the halo margins; the interior is overwritten just below
    buf_ref[:margin, :] = jnp.zeros((margin, c), buf_ref.dtype)
    buf_ref[margin + mp:mbuf, :] = jnp.zeros((mbuf - margin - mp, c),
                                             buf_ref.dtype)
    buf_ref[margin:margin + mp, :] = x_ref[0]

    mask = mask_ref[...]                       # (mp, 1): 1 inside, 0 on padding
    offs = [dh * wp + dw for dh in (-1, 0, 1) for dw in (-1, 0, 1)]

    def layer_body(l, carry):                  # fori: bounded live ranges
        res = buf_ref[margin:margin + mp, :].astype(jnp.float32)
        acc = jnp.zeros((mp, c), jnp.float32)
        for t in range(9):                     # taps stay unrolled
            off = offs[t]
            acc = acc + jnp.dot(buf_ref[margin + off:margin + off + mp, :],
                                wr_ref[l * 9 + t],
                                preferred_element_type=jnp.float32)
        acc = (acc + br_ref[l]) * beta_ref[l] + res
        acc = jnp.where(acc > 0, acc, slope * acc)
        # re-zero padded border so the next layer sees correct zero padding
        buf_ref[margin:margin + mp, :] = (acc * mask).astype(buf_ref.dtype)
        return carry

    lax.fori_loop(0, n_layers, layer_body, 0)

    # lastconv: ConvTranspose2d(c, 52, 4, stride=2, pad=1) folded into one
    # lane-dense 9-tap matmul against zero-stuffed per-subpixel-group weights
    # (each 52-ch group padded to 64 -> 256 lanes, full unmasked stores).
    nlast = wl_ref.shape[2]
    acc = jnp.zeros((mp, nlast), jnp.float32)
    for t in range(9):
        off = offs[t]
        acc = acc + jnp.dot(buf_ref[margin + off:margin + off + mp, :],
                            wl_ref[t], preferred_element_type=jnp.float32)
    o_ref[0] = (acc + bl_ref[...]).astype(o_ref.dtype)


# ------------------------------ kernel wrappers ------------------------------
def _space_to_depth_pad(x):
    """Pad-1 + 2x2 space-to-depth + flatten; appends zero rows for shifts."""
    b, h, w, c = x.shape
    ho = (h - 1) // 2 + 1
    wo = (w - 1) // 2 + 1
    hp2, wp2 = ho + 1, wo + 1
    xp = jnp.pad(x, ((0, 0), (1, 2 * hp2 - h - 1), (1, 2 * wp2 - w - 1), (0, 0)))
    y = xp.reshape(b, hp2, 2, wp2, 2, c)
    y = jnp.transpose(y, (0, 1, 3, 2, 4, 5)).reshape(b, hp2 * wp2, 4 * c)
    y = jnp.pad(y, ((0, 0), (0, wp2 + 2), (0, 0)))     # room for max shift wp2+1
    return y, ho, wo, wp2


def conv0_layer(x, w4, bias):
    """One conv(3,stride 2,pad 1)+LeakyReLU layer, no HBM im2col."""
    y, ho, wo, wp2 = _space_to_depth_pad(x)
    b = x.shape[0]
    cout = w4.shape[2]
    mp = (ho + 1) * wp2
    shifts = (0, 1, wp2, wp2 + 1)              # (dr, dc) = (0,0),(0,1),(1,0),(1,1)
    out = pl.pallas_call(
        functools.partial(_s2d_conv_kernel, shifts=shifts, mp=mp,
                          slope=LRELU_SLOPE),
        out_shape=jax.ShapeDtypeStruct((b, mp, cout), jnp.bfloat16),
        grid=(b,),
        in_specs=[
            pl.BlockSpec((1, y.shape[1], y.shape[2]), lambda i: (i, 0, 0)),
            pl.BlockSpec(w4.shape, lambda i: (0, 0, 0)),
            pl.BlockSpec(bias.shape, lambda i: (0, 0)),
        ],
        out_specs=pl.BlockSpec((1, mp, cout), lambda i: (i, 0, 0)),
        compiler_params=_compiler_params(),
    )(y, w4, bias)
    return out.reshape(b, ho + 1, wp2, cout)[:, :ho, :wo, :]


def resconv_chain_lastconv(feat, prep, *, n_layers=8):
    """feat: (B,Hf,Wf,C) bf16 -> (B,(Hf+2)*(Wf+2), 4*64) bf16 (padded rows)."""
    b, hf, wf, c = feat.shape
    hp, wp = hf + 2, wf + 2
    mp = hp * wp
    margin = wp + 1
    mbuf = mp + 2 * margin
    nlast = prep["last_w"].shape[2]

    xpad = jnp.pad(feat, ((0, 0), (1, 1), (1, 1), (0, 0))).reshape(b, mp, c)
    row = jnp.arange(mp, dtype=jnp.int32) // wp
    col = jnp.arange(mp, dtype=jnp.int32) % wp
    mask = ((row >= 1) & (row <= hf) & (col >= 1) & (col <= wf))
    mask = mask.astype(jnp.float32).reshape(mp, 1)

    kernel = functools.partial(_res_chain_kernel, n_layers=n_layers,
                               wp=wp, mp=mp, margin=margin, slope=LRELU_SLOPE)
    return pl.pallas_call(
        kernel,
        out_shape=jax.ShapeDtypeStruct((b, mp, nlast), jnp.bfloat16),
        grid=(b,),
        in_specs=[
            pl.BlockSpec((1, mp, c), lambda i: (i, 0, 0)),
            pl.BlockSpec(prep["res_w"].shape, lambda i: (0, 0, 0)),
            pl.BlockSpec(prep["res_b"].shape, lambda i: (0, 0, 0)),
            pl.BlockSpec(prep["res_beta"].shape, lambda i: (0, 0, 0)),
            pl.BlockSpec(prep["last_w"].shape, lambda i: (0, 0, 0)),
            pl.BlockSpec(prep["last_b"].shape, lambda i: (0, 0)),
            pl.BlockSpec((mp, 1), lambda i: (0, 0)),
        ],
        out_specs=pl.BlockSpec((1, mp, nlast), lambda i: (i, 0, 0)),
        scratch_shapes=[pltpu.VMEM((mbuf, c), jnp.bfloat16)],
        compiler_params=_compiler_params(),
    )(xpad, prep["res_w"], prep["res_b"], prep["res_beta"],
      prep["last_w"], prep["last_b"], mask)


# ------------------------------- JAX glue ops --------------------------------
def pixel_shuffle_nhwc(x, r):
    b, h, w, c = x.shape
    co = c // (r * r)
    x = x.reshape(b, h, w, co, r, r)
    x = jnp.transpose(x, (0, 1, 4, 2, 5, 3))
    return x.reshape(b, h * r, w * r, co)


def bilinear_resize_nhwc(x, scale_factor):
    """F.interpolate(..., 'bilinear', align_corners=False) semantics (NHWC)."""
    b, h, w, c = x.shape
    out_h = int(math.floor(h * scale_factor))
    out_w = int(math.floor(w * scale_factor))
    if out_h == h and out_w == w and scale_factor == 1.0:
        return x
    # TODO(synk): gather-based (jnp.take) resize is slow on TPU; replace with
    # slice-based lerp for integer-ratio scales if scale != 1 is used hot.

    def idx(out_size, in_size):
        ratio = in_size / out_size            # PyTorch align_corners=False
        d = jnp.arange(out_size, dtype=jnp.float32)
        src = jnp.maximum((d + 0.5) * ratio - 0.5, 0.0)
        lo = jnp.minimum(jnp.floor(src).astype(jnp.int32), in_size - 1)
        hi = jnp.minimum(lo + 1, in_size - 1)
        lam = src - lo.astype(jnp.float32)
        return lo, hi, lam

    hl, hh, lh = idx(out_h, h)
    wl, wh, lw = idx(out_w, w)

    def horiz(rows):
        left = jnp.take(rows, wl, axis=2)
        right = jnp.take(rows, wh, axis=2)
        return left * (1.0 - lw)[None, None, :, None] + right * lw[None, None, :, None]

    top = horiz(jnp.take(x, hl, axis=1))
    bot = horiz(jnp.take(x, hh, axis=1))
    return top * (1.0 - lh)[None, :, None, None] + bot * lh[None, :, None, None]


# ----------------------------- params & prepare ------------------------------
def init_params(key, in_planes, c):
    keys = iter(jax.random.split(key, 32))

    def w_init(k, shape, fan_in):
        bound = 1.0 / math.sqrt(fan_in)
        return jax.random.uniform(k, shape, jnp.float32, -bound, bound)

    p = {}
    p["conv0_w0"] = w_init(next(keys), (3, 3, in_planes, c // 2), 9 * in_planes)
    p["conv0_b0"] = w_init(next(keys), (c // 2,), 9 * in_planes)
    p["conv0_w1"] = w_init(next(keys), (3, 3, c // 2, c), 9 * (c // 2))
    p["conv0_b1"] = w_init(next(keys), (c,), 9 * (c // 2))
    for i in range(8):
        p[f"res{i}_w"] = w_init(next(keys), (3, 3, c, c), 9 * c)
        p[f"res{i}_b"] = w_init(next(keys), (c,), 9 * c)
        p[f"res{i}_beta"] = jnp.ones((c,), jnp.float32)    # torch.ones((1,c,1,1))
    # PyTorch ConvTranspose2d default init: fan_in = out_channels * kH * kW
    p["last_w"] = w_init(next(keys), (4, 4, c, LAST_COUT), LAST_COUT * 16)
    p["last_b"] = w_init(next(keys), (LAST_COUT,), LAST_COUT * 16)
    return p


def _build_s2d_weight(w):
    """(3,3,Cin,Cout) -> (4, 4*Cin, Cout): stride-2 3x3 conv as a 2x2 valid
    conv on the 2x2 space-to-depth input (channel block (a,b) = W[2dr+a,2dc+b])."""
    cin, cout = w.shape[2], w.shape[3]
    taps = []
    for dr in (0, 1):
        for dc in (0, 1):
            blocks = []
            for a in (0, 1):
                for bb in (0, 1):
                    kh, kw = 2 * dr + a, 2 * dc + bb
                    if kh <= 2 and kw <= 2:
                        blocks.append(w[kh, kw])
                    else:
                        blocks.append(jnp.zeros((cin, cout), w.dtype))
            taps.append(jnp.concatenate(blocks, axis=0))    # (4*Cin, Cout)
    return jnp.stack(taps, axis=0)                          # (4, 4*Cin, Cout)


def _build_lastconv_weight(wt, group_pad=LASTCONV_GROUP):
    """wt: (4,4,Cin,Cout) with PyTorch semantics oh = 2*ih - 1 + kh.
    Returns (9, Cin, 4*group_pad): for each 3x3 tap (dh,dw), sub-pixel group
    g = 2r+s gets wt[1+r-2dh, 1+s-2dw] iff dh in {r-1,r} and dw in {s-1,s},
    else zeros; each group is lane-padded Cout -> group_pad."""
    c, cout = wt.shape[2], wt.shape[3]
    taps = []
    for dh in (-1, 0, 1):
        for dw in (-1, 0, 1):
            groups = []
            for r in (0, 1):
                for s in (0, 1):
                    if dh in (r - 1, r) and dw in (s - 1, s):
                        g = wt[1 + r - 2 * dh, 1 + s - 2 * dw]
                    else:
                        g = jnp.zeros((c, cout), wt.dtype)
                    groups.append(jnp.pad(g, ((0, 0), (0, group_pad - cout))))
            taps.append(jnp.concatenate(groups, axis=1))    # (Cin, 4*group_pad)
    return jnp.stack(taps, axis=0)                          # (9, Cin, 4*group_pad)


def prepare_params(p, n_layers=8):
    """Cast / reshape weights once into kernel-ready layout (bf16 weights)."""
    c = p["res0_w"].shape[2]
    cout = p["last_w"].shape[3]
    prep = {}
    prep["conv0_w0"] = _build_s2d_weight(p["conv0_w0"]).astype(jnp.bfloat16)
    prep["conv0_b0"] = p["conv0_b0"].reshape(1, -1).astype(jnp.float32)
    prep["conv0_w1"] = _build_s2d_weight(p["conv0_w1"]).astype(jnp.bfloat16)
    prep["conv0_b1"] = p["conv0_b1"].reshape(1, -1).astype(jnp.float32)

    taps = []
    for l in range(n_layers):
        w = p[f"res{l}_w"]                                  # (3,3,c,c)
        for dh in (-1, 0, 1):
            for dw in (-1, 0, 1):
                taps.append(w[dh + 1, dw + 1])              # (c,c)
    prep["res_w"] = jnp.stack(taps, axis=0).astype(jnp.bfloat16)        # (8*9,c,c)
    prep["res_b"] = jnp.stack([p[f"res{l}_b"] for l in range(n_layers)],
                              axis=0).reshape(n_layers, 1, c).astype(jnp.float32)
    prep["res_beta"] = jnp.stack([p[f"res{l}_beta"] for l in range(n_layers)],
                                 axis=0).reshape(n_layers, 1, c).astype(jnp.float32)
    prep["last_w"] = _build_lastconv_weight(p["last_w"]).astype(jnp.bfloat16)
    bias_g = jnp.pad(p["last_b"], (0, LASTCONV_GROUP - cout))
    prep["last_b"] = jnp.tile(bias_g, 4).reshape(1, 4 * LASTCONV_GROUP).astype(jnp.float32)
    return prep


# ------------------------------- IFBlock model -------------------------------
@functools.partial(jax.jit, static_argnames=("scale",))
def ifblock_forward(prep, x_nchw, flow_nchw=None, scale=1.0):
    x = jnp.transpose(x_nchw, (0, 2, 3, 1)).astype(jnp.float32)   # NCHW -> NHWC
    x = bilinear_resize_nhwc(x, 1.0 / scale)
    if flow_nchw is not None:
        f = jnp.transpose(flow_nchw, (0, 2, 3, 1)).astype(jnp.float32)
        f = bilinear_resize_nhwc(f, 1.0 / scale) * (1.0 / scale)
        x = jnp.concatenate([x, f], axis=-1)
    x = x.astype(jnp.bfloat16)

    f1 = conv0_layer(x, prep["conv0_w0"], prep["conv0_b0"])
    feat = conv0_layer(f1, prep["conv0_w1"], prep["conv0_b1"])

    out = resconv_chain_lastconv(feat, prep)          # (B,(Hf+2)*(Wf+2),256) bf16

    b, hf, wf = feat.shape[0], feat.shape[1], feat.shape[2]
    hp, wp = hf + 2, wf + 2
    tmp = out.reshape(b, hp, wp, 4, LASTCONV_GROUP)[:, 1:1 + hf, 1:1 + wf, :, :LAST_COUT]
    tmp = tmp.reshape(b, hf, wf, 2, 2, LAST_COUT)     # (..., r, s, cout)
    tmp = jnp.transpose(tmp, (0, 1, 3, 2, 4, 5)).reshape(b, 2 * hf, 2 * wf, LAST_COUT)
    tmp = pixel_shuffle_nhwc(tmp, 2).astype(jnp.float32)   # (B, 4Hf, 4Wf, 13)
    tmp = bilinear_resize_nhwc(tmp, scale)

    flow_out = tmp[..., :4] * scale
    mask = tmp[..., 4:5]
    feat_out = tmp[..., 5:]
    to_nchw = lambda t: jnp.transpose(t, (0, 3, 1, 2))
    return to_nchw(flow_out), to_nchw(mask), to_nchw(feat_out)


# ----------------------- pure-JAX float32 reference --------------------------
def _lrelu(x):
    return jnp.where(x > 0, x, LRELU_SLOPE * x)


def _conv2d_ref(x, w, b, stride):
    y = lax.conv_general_dilated(
        x, w, (stride, stride), ((1, 1), (1, 1)),
        dimension_numbers=("NHWC", "HWIO", "NHWC"),
        precision=lax.Precision.HIGHEST)
    return y + b


def ifblock_reference(params, x_nchw, flow_nchw=None, scale=1.0, n_layers=8):
    """Float32 reference of IFBlock.forward (for scale == 1.0)."""
    x = jnp.transpose(x_nchw, (0, 2, 3, 1)).astype(jnp.float32)
    if flow_nchw is not None:
        f = jnp.transpose(flow_nchw, (0, 2, 3, 1)).astype(jnp.float32)
        x = jnp.concatenate([x, f * (1.0 / scale)], axis=-1)
    h = _lrelu(_conv2d_ref(x, params["conv0_w0"], params["conv0_b0"], 2))
    h = _lrelu(_conv2d_ref(h, params["conv0_w1"], params["conv0_b1"], 2))
    for l in range(n_layers):
        y = _conv2d_ref(h, params[f"res{l}_w"], params[f"res{l}_b"], 1)
        h = _lrelu(y * params[f"res{l}_beta"] + h)
    wt = params["last_w"]                              # (4,4,Cin,Cout), PyTorch kh/kw
    w_flip = wt[::-1, ::-1, :, :]
    y = lax.conv_general_dilated(h, w_flip, (1, 1), ((2, 2), (2, 2)),
                                 lhs_dilation=(2, 2),
                                 dimension_numbers=("NHWC", "HWIO", "NHWC"),
                                 precision=lax.Precision.HIGHEST)
    y = y + params["last_b"]
    tmp = pixel_shuffle_nhwc(y, 2)
    flow_out = tmp[..., :4] * scale
    mask = tmp[..., 4:5]
    feat_out = tmp[..., 5:]
    to_nchw = lambda t: jnp.transpose(t, (0, 3, 1, 2))
    return to_nchw(flow_out), to_nchw(mask), to_nchw(feat_out)


if __name__ == "__main__":
    key = jax.random.PRNGKey(0)
    kp, kx = jax.random.split(key)
    B, in_planes, H, W, c = 2, 7, 16, 16, 32

    params = init_params(kp, in_planes, c)
    prep = prepare_params(params)
    x = jax.random.normal(kx, (B, in_planes, H, W), jnp.float32)

    flow, mask, feat = ifblock_forward(prep, x, None, scale=1.0)
    jax.block_until_ready((flow, mask, feat))

    assert flow.shape == (B, 4, H, W)
    assert mask.shape == (B, 1, H, W)
    assert feat.shape == (B, 8, H, W)

    # numeric check vs. a pure-JAX float32 reference (bf16 path -> loose tol)
    rflow, rmask, rfeat = ifblock_reference(params, x, None, scale=1.0)
    for got, ref in ((flow, rflow), (mask, rmask), (feat, rfeat)):
        err = float(jnp.max(jnp.abs(got.astype(jnp.float32) - ref)))
        assert err < 0.05, f"mismatch vs reference: max abs err {err}"

    print("KERNEL_OK")
</pallas_src>

<mosaic_0001>
module attributes {stable_mosaic.version = 11 : i64} {
  func.func @_s2d_conv_kernel(%arg0: i32, %arg1: memref<1x92x28xbf16, #tpu.memory_space<vmem>>, %arg2: memref<4x28x16xbf16, #tpu.memory_space<vmem>>, %arg3: memref<1x16xf32, #tpu.memory_space<vmem>>, %arg4: memref<1x81x16xbf16, #tpu.memory_space<vmem>>) attributes {dimension_semantics = [#tpu.dimension_semantics<parallel>], iteration_bounds = array<i64: 2>, scalar_prefetch = 0 : i64, scratch_operands = 0 : i64, tpu.core_type = #tpu.core_type<tc>, window_params = [{transform_indices = @transform_0, window_bounds = array<i64: 1, 92, 28>}, {pipeline_mode = #tpu.pipeline_mode<synchronous>, transform_indices = @transform_1, window_bounds = array<i64: 4, 28, 16>}, {pipeline_mode = #tpu.pipeline_mode<synchronous>, transform_indices = @transform_2, window_bounds = array<i64: 1, 16>}, {transform_indices = @transform_3, window_bounds = array<i64: 1, 81, 16>}]} {
    %cst = arith.constant 0.000000e+00 : f32
    %0 = vector.broadcast %cst : f32 to vector<81x16xf32>
    %c0 = arith.constant 0 : index
    %c0_0 = arith.constant 0 : index
    %c0_1 = arith.constant 0 : index
    %1 = vector.load %arg1[%c0, %c0_0, %c0_1] : memref<1x92x28xbf16, #tpu.memory_space<vmem>>, vector<1x81x28xbf16>
    %2 = vector.shape_cast %1 : vector<1x81x28xbf16> to vector<81x28xbf16>
    %c0_2 = arith.constant 0 : index
    %c0_3 = arith.constant 0 : index
    %c0_4 = arith.constant 0 : index
    %3 = vector.load %arg2[%c0_2, %c0_3, %c0_4] : memref<4x28x16xbf16, #tpu.memory_space<vmem>>, vector<1x28x16xbf16>
    %4 = vector.shape_cast %3 : vector<1x28x16xbf16> to vector<28x16xbf16>
    %cst_5 = arith.constant dense<0.000000e+00> : vector<81x16xf32>
    %5 = tpu.matmul %2, %4, %cst_5 {dimension_numbers = #tpu.dot_dimension_numbers<[1], [0], [0], [1], [0, 0, 1, 1], [], []>} : vector<81x28xbf16>, vector<28x16xbf16>, vector<81x16xf32> -> vector<81x16xf32>
    %6 = arith.addf %0, %5 : vector<81x16xf32>
    %c0_6 = arith.constant 0 : index
    %c1 = arith.constant 1 : index
    %c0_7 = arith.constant 0 : index
    %7 = vector.load %arg1[%c0_6, %c1, %c0_7] : memref<1x92x28xbf16, #tpu.memory_space<vmem>>, vector<1x81x28xbf16>
    %8 = vector.shape_cast %7 : vector<1x81x28xbf16> to vector<81x28xbf16>
    %c1_8 = arith.constant 1 : index
    %c0_9 = arith.constant 0 : index
    %c0_10 = arith.constant 0 : index
    %9 = vector.load %arg2[%c1_8, %c0_9, %c0_10] : memref<4x28x16xbf16, #tpu.memory_space<vmem>>, vector<1x28x16xbf16>
    %10 = vector.shape_cast %9 : vector<1x28x16xbf16> to vector<28x16xbf16>
    %cst_11 = arith.constant dense<0.000000e+00> : vector<81x16xf32>
    %11 = tpu.matmul %8, %10, %cst_11 {dimension_numbers = #tpu.dot_dimension_numbers<[1], [0], [0], [1], [0, 0, 1, 1], [], []>} : vector<81x28xbf16>, vector<28x16xbf16>, vector<81x16xf32> -> vector<81x16xf32>
    %12 = arith.addf %6, %11 : vector<81x16xf32>
    %c0_12 = arith.constant 0 : index
    %c9 = arith.constant 9 : index
    %c0_13 = arith.constant 0 : index
    %13 = vector.load %arg1[%c0_12, %c9, %c0_13] : memref<1x92x28xbf16, #tpu.memory_space<vmem>>, vector<1x81x28xbf16>
    %14 = vector.shape_cast %13 : vector<1x81x28xbf16> to vector<81x28xbf16>
    %c2 = arith.constant 2 : index
    %c0_14 = arith.constant 0 : index
    %c0_15 = arith.constant 0 : index
    %15 = vector.load %arg2[%c2, %c0_14, %c0_15] : memref<4x28x16xbf16, #tpu.memory_space<vmem>>, vector<1x28x16xbf16>
    %16 = vector.shape_cast %15 : vector<1x28x16xbf16> to vector<28x16xbf16>
    %cst_16 = arith.constant dense<0.000000e+00> : vector<81x16xf32>
    %17 = tpu.matmul %14, %16, %cst_16 {dimension_numbers = #tpu.dot_dimension_numbers<[1], [0], [0], [1], [0, 0, 1, 1], [], []>} : vector<81x28xbf16>, vector<28x16xbf16>, vector<81x16xf32> -> vector<81x16xf32>
    %18 = arith.addf %12, %17 : vector<81x16xf32>
    %c0_17 = arith.constant 0 : index
    %c10 = arith.constant 10 : index
    %c0_18 = arith.constant 0 : index
    %19 = vector.load %arg1[%c0_17, %c10, %c0_18] : memref<1x92x28xbf16, #tpu.memory_space<vmem>>, vector<1x81x28xbf16>
    %20 = vector.shape_cast %19 : vector<1x81x28xbf16> to vector<81x28xbf16>
    %c3 = arith.constant 3 : index
    %c0_19 = arith.constant 0 : index
    %c0_20 = arith.constant 0 : index
    %21 = vector.load %arg2[%c3, %c0_19, %c0_20] : memref<4x28x16xbf16, #tpu.memory_space<vmem>>, vector<1x28x16xbf16>
    %22 = vector.shape_cast %21 : vector<1x28x16xbf16> to vector<28x16xbf16>
    %cst_21 = arith.constant dense<0.000000e+00> : vector<81x16xf32>
    %23 = tpu.matmul %20, %22, %cst_21 {dimension_numbers = #tpu.dot_dimension_numbers<[1], [0], [0], [1], [0, 0, 1, 1], [], []>} : vector<81x28xbf16>, vector<28x16xbf16>, vector<81x16xf32> -> vector<81x16xf32>
    %24 = arith.addf %18, %23 : vector<81x16xf32>
    %c0_22 = arith.constant 0 : index
    %c0_23 = arith.constant 0 : index
    %25 = vector.load %arg3[%c0_22, %c0_23] : memref<1x16xf32, #tpu.memory_space<vmem>>, vector<1x16xf32>
    %26 = vector.broadcast %25 : vector<1x16xf32> to vector<81x16xf32>
    %27 = arith.addf %24, %26 : vector<81x16xf32>
    %cst_24 = arith.constant 0.000000e+00 : f32
    %28 = vector.broadcast %cst_24 : f32 to vector<81x16xf32>
    %29 = arith.cmpf ogt, %27, %28 : vector<81x16xf32>
    %cst_25 = arith.constant 2.000000e-01 : f32
    %30 = vector.broadcast %cst_25 : f32 to vector<81x16xf32>
    %31 = arith.mulf %30, %27 : vector<81x16xf32>
    %32 = arith.select %29, %27, %31 : vector<81x16xi1>, vector<81x16xf32>
    %33 = arith.truncf %32 : vector<81x16xf32> to vector<81x16xbf16>
    %c0_26 = arith.constant 0 : index
    %c0_27 = arith.constant 0 : index
    %c0_28 = arith.constant 0 : index
    %34 = vector.load %arg4[%c0_26, %c0_27, %c0_28] : memref<1x81x16xbf16, #tpu.memory_space<vmem>>, vector<1x81x16xbf16>
    %35 = vector.shape_cast %34 : vector<1x81x16xbf16> to vector<81x16xbf16>
    %36 = vector.shape_cast %33 : vector<81x16xbf16> to vector<1x81x16xbf16>
    tpu.vector_store %arg4[%c0_26, %c0_27, %c0_28], %36 {strides = array<i32>} : memref<1x81x16xbf16, #tpu.memory_space<vmem>>, vector<1x81x16xbf16>,
    return
  }
  func.func @transform_0(%arg0: i32) -> (i32, i32, i32) {
    %c0_i32 = arith.constant 0 : i32
    %c0_i32_0 = arith.constant 0 : i32
    %c0_i32_1 = arith.constant 0 : i32
    return %arg0, %c0_i32, %c0_i32_0 : i32, i32, i32
  }
  func.func @transform_1(%arg0: i32) -> (i32, i32, i32) {
    %c0_i32 = arith.constant 0 : i32
    %c0_i32_0 = arith.constant 0 : i32
    %c0_i32_1 = arith.constant 0 : i32
    %c0_i32_2 = arith.constant 0 : i32
    return %c0_i32, %c0_i32_0, %c0_i32_1 : i32, i32, i32
  }
  func.func @transform_2(%arg0: i32) -> (i32, i32) {
    %c0_i32 = arith.constant 0 : i32
    %c0_i32_0 = arith.constant 0 : i32
    %c0_i32_1 = arith.constant 0 : i32
    return %c0_i32, %c0_i32_0 : i32, i32
  }
  func.func @transform_3(%arg0: i32) -> (i32, i32, i32) {
    %c0_i32 = arith.constant 0 : i32
    %c0_i32_0 = arith.constant 0 : i32
    %c0_i32_1 = arith.constant 0 : i32
    return %arg0, %c0_i32, %c0_i32_0 : i32, i32, i32
  }
}

module attributes {stable_mosaic.version = 11 : i64} {
  func.func @_s2d_conv_kernel(%arg0: i32, %arg1: memref<1x32x64xbf16, #tpu.memory_space<vmem>>, %arg2: memref<4x64x32xbf16, #tpu.memory_space<vmem>>, %arg3: memref<1x32xf32, #tpu.memory_space<vmem>>, %arg4: memref<1x25x32xbf16, #tpu.memory_space<vmem>>) attributes {dimension_semantics = [#tpu.dimension_semantics<parallel>], iteration_bounds = array<i64: 2>, scalar_prefetch = 0 : i64, scratch_operands = 0 : i64, tpu.core_type = #tpu.core_type<tc>, window_params = [{transform_indices = @transform_0, window_bounds = array<i64: 1, 32, 64>}, {pipeline_mode = #tpu.pipeline_mode<synchronous>, transform_indices = @transform_1, window_bounds = array<i64: 4, 64, 32>}, {pipeline_mode = #tpu.pipeline_mode<synchronous>, transform_indices = @transform_2, window_bounds = array<i64: 1, 32>}, {transform_indices = @transform_3, window_bounds = array<i64: 1, 25, 32>}]} {
    %cst = arith.constant 0.000000e+00 : f32
    %0 = vector.broadcast %cst : f32 to vector<25x32xf32>
    %c0 = arith.constant 0 : index
    %c0_0 = arith.constant 0 : index
    %c0_1 = arith.constant 0 : index
    %1 = vector.load %arg1[%c0, %c0_0, %c0_1] : memref<1x32x64xbf16, #tpu.memory_space<vmem>>, vector<1x25x64xbf16>
    %2 = vector.shape_cast %1 : vector<1x25x64xbf16> to vector<25x64xbf16>
    %c0_2 = arith.constant 0 : index
    %c0_3 = arith.constant 0 : index
    %c0_4 = arith.constant 0 : index
    %3 = vector.load %arg2[%c0_2, %c0_3, %c0_4] : memref<4x64x32xbf16, #tpu.memory_space<vmem>>, vector<1x64x32xbf16>
    %4 = vector.shape_cast %3 : vector<1x64x32xbf16> to vector<64x32xbf16>
    %cst_5 = arith.constant dense<0.000000e+00> : vector<25x32xf32>
    %5 = tpu.matmul %2, %4, %cst_5 {dimension_numbers = #tpu.dot_dimension_numbers<[1], [0], [0], [1], [0, 0, 1, 1], [], []>} : vector<25x64xbf16>, vector<64x32xbf16>, vector<25x32xf32> -> vector<25x32xf32>
    %6 = arith.addf %0, %5 : vector<25x32xf32>
    %c0_6 = arith.constant 0 : index
    %c1 = arith.constant 1 : index
    %c0_7 = arith.constant 0 : index
    %7 = vector.load %arg1[%c0_6, %c1, %c0_7] : memref<1x32x64xbf16, #tpu.memory_space<vmem>>, vector<1x25x64xbf16>
    %8 = vector.shape_cast %7 : vector<1x25x64xbf16> to vector<25x64xbf16>
    %c1_8 = arith.constant 1 : index
    %c0_9 = arith.constant 0 : index
    %c0_10 = arith.constant 0 : index
    %9 = vector.load %arg2[%c1_8, %c0_9, %c0_10] : memref<4x64x32xbf16, #tpu.memory_space<vmem>>, vector<1x64x32xbf16>
    %10 = vector.shape_cast %9 : vector<1x64x32xbf16> to vector<64x32xbf16>
    %cst_11 = arith.constant dense<0.000000e+00> : vector<25x32xf32>
    %11 = tpu.matmul %8, %10, %cst_11 {dimension_numbers = #tpu.dot_dimension_numbers<[1], [0], [0], [1], [0, 0, 1, 1], [], []>} : vector<25x64xbf16>, vector<64x32xbf16>, vector<25x32xf32> -> vector<25x32xf32>
    %12 = arith.addf %6, %11 : vector<25x32xf32>
    %c0_12 = arith.constant 0 : index
    %c5 = arith.constant 5 : index
    %c0_13 = arith.constant 0 : index
    %13 = vector.load %arg1[%c0_12, %c5, %c0_13] : memref<1x32x64xbf16, #tpu.memory_space<vmem>>, vector<1x25x64xbf16>
    %14 = vector.shape_cast %13 : vector<1x25x64xbf16> to vector<25x64xbf16>
    %c2 = arith.constant 2 : index
    %c0_14 = arith.constant 0 : index
    %c0_15 = arith.constant 0 : index
    %15 = vector.load %arg2[%c2, %c0_14, %c0_15] : memref<4x64x32xbf16, #tpu.memory_space<vmem>>, vector<1x64x32xbf16>
    %16 = vector.shape_cast %15 : vector<1x64x32xbf16> to vector<64x32xbf16>
    %cst_16 = arith.constant dense<0.000000e+00> : vector<25x32xf32>
    %17 = tpu.matmul %14, %16, %cst_16 {dimension_numbers = #tpu.dot_dimension_numbers<[1], [0], [0], [1], [0, 0, 1, 1], [], []>} : vector<25x64xbf16>, vector<64x32xbf16>, vector<25x32xf32> -> vector<25x32xf32>
    %18 = arith.addf %12, %17 : vector<25x32xf32>
    %c0_17 = arith.constant 0 : index
    %c6 = arith.constant 6 : index
    %c0_18 = arith.constant 0 : index
    %19 = vector.load %arg1[%c0_17, %c6, %c0_18] : memref<1x32x64xbf16, #tpu.memory_space<vmem>>, vector<1x25x64xbf16>
    %20 = vector.shape_cast %19 : vector<1x25x64xbf16> to vector<25x64xbf16>
    %c3 = arith.constant 3 : index
    %c0_19 = arith.constant 0 : index
    %c0_20 = arith.constant 0 : index
    %21 = vector.load %arg2[%c3, %c0_19, %c0_20] : memref<4x64x32xbf16, #tpu.memory_space<vmem>>, vector<1x64x32xbf16>
    %22 = vector.shape_cast %21 : vector<1x64x32xbf16> to vector<64x32xbf16>
    %cst_21 = arith.constant dense<0.000000e+00> : vector<25x32xf32>
    %23 = tpu.matmul %20, %22, %cst_21 {dimension_numbers = #tpu.dot_dimension_numbers<[1], [0], [0], [1], [0, 0, 1, 1], [], []>} : vector<25x64xbf16>, vector<64x32xbf16>, vector<25x32xf32> -> vector<25x32xf32>
    %24 = arith.addf %18, %23 : vector<25x32xf32>
    %c0_22 = arith.constant 0 : index
    %c0_23 = arith.constant 0 : index
    %25 = vector.load %arg3[%c0_22, %c0_23] : memref<1x32xf32, #tpu.memory_space<vmem>>, vector<1x32xf32>
    %26 = vector.broadcast %25 : vector<1x32xf32> to vector<25x32xf32>
    %27 = arith.addf %24, %26 : vector<25x32xf32>
    %cst_24 = arith.constant 0.000000e+00 : f32
    %28 = vector.broadcast %cst_24 : f32 to vector<25x32xf32>
    %29 = arith.cmpf ogt, %27, %28 : vector<25x32xf32>
    %cst_25 = arith.constant 2.000000e-01 : f32
    %30 = vector.broadcast %cst_25 : f32 to vector<25x32xf32>
    %31 = arith.mulf %30, %27 : vector<25x32xf32>
    %32 = arith.select %29, %27, %31 : vector<25x32xi1>, vector<25x32xf32>
    %33 = arith.truncf %32 : vector<25x32xf32> to vector<25x32xbf16>
    %c0_26 = arith.constant 0 : index
    %c0_27 = arith.constant 0 : index
    %c0_28 = arith.constant 0 : index
    %34 = vector.load %arg4[%c0_26, %c0_27, %c0_28] : memref<1x25x32xbf16, #tpu.memory_space<vmem>>, vector<1x25x32xbf16>
    %35 = vector.shape_cast %34 : vector<1x25x32xbf16> to vector<25x32xbf16>
    %36 = vector.shape_cast %33 : vector<25x32xbf16> to vector<1x25x32xbf16>
    tpu.vector_store %arg4[%c0_26, %c0_27, %c0_28], %36 {strides = array<i32>} : memref<1x25x32xbf16, #tpu.memory_space<vmem>>, vector<1x25x32xbf16>,
    return
  }
  func.func @transform_0(%arg0: i32) -> (i32, i32, i32) {
    %c0_i32 = arith.constant 0 : i32
    %c0_i32_0 = arith.constant 0 : i32
    %c0_i32_1 = arith.constant 0 : i32
    return %arg0, %c0_i32, %c0_i32_0 : i32, i32, i32
  }
  func.func @transform_1(%arg0: i32) -> (i32, i32, i32) {
    %c0_i32 = arith.constant 0 : i32
    %c0_i32_0 = arith.constant 0 : i32
    %c0_i32_1 = arith.constant 0 : i32
    %c0_i32_2 = arith.constant 0 : i32
    return %c0_i32, %c0_i32_0, %c0_i32_1 : i32, i32, i32
  }
  func.func @transform_2(%arg0: i32) -> (i32, i32) {
    %c0_i32 = arith.constant 0 : i32
    %c0_i32_0 = arith.constant 0 : i32
    %c0_i32_1 = arith.constant 0 : i32
    return %c0_i32, %c0_i32_0 : i32, i32
  }
  func.func @transform_3(%arg0: i32) -> (i32, i32, i32) {
    %c0_i32 = arith.constant 0 : i32
    %c0_i32_0 = arith.constant 0 : i32
    %c0_i32_1 = arith.constant 0 : i32
    return %arg0, %c0_i32, %c0_i32_0 : i32, i32, i32
  }
}

module attributes {stable_mosaic.version = 11 : i64} {
  func.func @_res_chain_kernel(%arg0: i32, %arg1: memref<1x36x32xbf16, #tpu.memory_space<vmem>>, %arg2: memref<72x32x32xbf16, #tpu.memory_space<vmem>>, %arg3: memref<8x1x32xf32, #tpu.memory_space<vmem>>, %arg4: memref<8x1x32xf32, #tpu.memory_space<vmem>>, %arg5: memref<9x32x256xbf16, #tpu.memory_space<vmem>>, %arg6: memref<1x256xf32, #tpu.memory_space<vmem>>, %arg7: memref<36x1xf32, #tpu.memory_space<vmem>>, %arg8: memref<1x36x256xbf16, #tpu.memory_space<vmem>>, %arg9: memref<50x32xbf16, #tpu.memory_space<vmem>>) attributes {dimension_semantics = [#tpu.dimension_semantics<parallel>], iteration_bounds = array<i64: 2>, scalar_prefetch = 0 : i64, scratch_operands = 1 : i64, tpu.core_type = #tpu.core_type<tc>, window_params = [{transform_indices = @transform_0, window_bounds = array<i64: 1, 36, 32>}, {pipeline_mode = #tpu.pipeline_mode<synchronous>, transform_indices = @transform_1, window_bounds = array<i64: 72, 32, 32>}, {pipeline_mode = #tpu.pipeline_mode<synchronous>, transform_indices = @transform_2, window_bounds = array<i64: 8, 1, 32>}, {pipeline_mode = #tpu.pipeline_mode<synchronous>, transform_indices = @transform_3, window_bounds = array<i64: 8, 1, 32>}, {pipeline_mode = #tpu.pipeline_mode<synchronous>, transform_indices = @transform_4, window_bounds = array<i64: 9, 32, 256>}, {pipeline_mode = #tpu.pipeline_mode<synchronous>, transform_indices = @transform_5, window_bounds = array<i64: 1, 256>}, {pipeline_mode = #tpu.pipeline_mode<synchronous>, transform_indices = @transform_6, window_bounds = array<i64: 36, 1>}, {transform_indices = @transform_7, window_bounds = array<i64: 1, 36, 256>}]} {
    %cst = arith.constant 0.000000e+00 : bf16
    %0 = vector.broadcast %cst : bf16 to vector<7x32xbf16>
    %c0 = arith.constant 0 : index
    %c0_0 = arith.constant 0 : index
    %1 = vector.load %arg9[%c0, %c0_0] : memref<50x32xbf16, #tpu.memory_space<vmem>>, vector<7x32xbf16>
    tpu.vector_store %arg9[%c0, %c0_0], %0 {strides = array<i32>} : memref<50x32xbf16, #tpu.memory_space<vmem>>, vector<7x32xbf16>,
    %cst_1 = arith.constant 0.000000e+00 : bf16
    %2 = vector.broadcast %cst_1 : bf16 to vector<7x32xbf16>
    %c43 = arith.constant 43 : index
    %c0_2 = arith.constant 0 : index
    %3 = vector.load %arg9[%c43, %c0_2] : memref<50x32xbf16, #tpu.memory_space<vmem>>, vector<7x32xbf16>
    tpu.vector_store %arg9[%c43, %c0_2], %2 {strides = array<i32>} : memref<50x32xbf16, #tpu.memory_space<vmem>>, vector<7x32xbf16>,
    %c0_3 = arith.constant 0 : index
    %c0_4 = arith.constant 0 : index
    %c0_5 = arith.constant 0 : index
    %4 = vector.load %arg1[%c0_3, %c0_4, %c0_5] : memref<1x36x32xbf16, #tpu.memory_space<vmem>>, vector<1x36x32xbf16>
    %5 = vector.shape_cast %4 : vector<1x36x32xbf16> to vector<36x32xbf16>
    %c7 = arith.constant 7 : index
    %c0_6 = arith.constant 0 : index
    %6 = vector.load %arg9[%c7, %c0_6] : memref<50x32xbf16, #tpu.memory_space<vmem>>, vector<36x32xbf16>
    tpu.vector_store %arg9[%c7, %c0_6], %5 {strides = array<i32>} : memref<50x32xbf16, #tpu.memory_space<vmem>>, vector<36x32xbf16>,
    %c0_7 = arith.constant 0 : index
    %c0_8 = arith.constant 0 : index
    %7 = vector.load %arg7[%c0_7, %c0_8] : memref<36x1xf32, #tpu.memory_space<vmem>>, vector<36x1xf32>
    %c0_i32 = arith.constant 0 : i32
    %c8_i32 = arith.constant 8 : i32
    %8 = arith.addi %c0_i32, %c8_i32 : i32
    %c1_i32 = arith.constant 1 : i32
    scf.for %arg10 = %c0_i32 to %8 step %c1_i32  : i32 {
      %c7_60 = arith.constant 7 : index
      %c0_61 = arith.constant 0 : index
      %62 = vector.load %arg9[%c7_60, %c0_61] : memref<50x32xbf16, #tpu.memory_space<vmem>>, vector<36x32xbf16>
      %63 = arith.extf %62 : vector<36x32xbf16> to vector<36x32xf32>
      %cst_62 = arith.constant 0.000000e+00 : f32
      %64 = vector.broadcast %cst_62 : f32 to vector<36x32xf32>
      %c0_63 = arith.constant 0 : index
      %c0_64 = arith.constant 0 : index
      %65 = vector.load %arg9[%c0_63, %c0_64] : memref<50x32xbf16, #tpu.memory_space<vmem>>, vector<36x32xbf16>
      %c9_i32 = arith.constant 9 : i32
      %66 = arith.muli %arg10, %c9_i32 : i32
      %c0_i32_65 = arith.constant 0 : i32
      %67 = arith.addi %66, %c0_i32_65 : i32
      %68 = arith.index_cast %67 : i32 to index
      %c0_66 = arith.constant 0 : index
      %c0_67 = arith.constant 0 : index
      %69 = vector.load %arg2[%68, %c0_66, %c0_67] : memref<72x32x32xbf16, #tpu.memory_space<vmem>>, vector<1x32x32xbf16>
      %70 = vector.shape_cast %69 : vector<1x32x32xbf16> to vector<32x32xbf16>
      %cst_68 = arith.constant dense<0.000000e+00> : vector<36x32xf32>
      %71 = tpu.matmul %65, %70, %cst_68 {dimension_numbers = #tpu.dot_dimension_numbers<[1], [0], [0], [1], [0, 0, 1, 1], [], []>} : vector<36x32xbf16>, vector<32x32xbf16>, vector<36x32xf32> -> vector<36x32xf32>
      %72 = arith.addf %64, %71 : vector<36x32xf32>
      %c1_69 = arith.constant 1 : index
      %c0_70 = arith.constant 0 : index
      %73 = vector.load %arg9[%c1_69, %c0_70] : memref<50x32xbf16, #tpu.memory_space<vmem>>, vector<36x32xbf16>
      %c9_i32_71 = arith.constant 9 : i32
      %74 = arith.muli %arg10, %c9_i32_71 : i32
      %c1_i32_72 = arith.constant 1 : i32
      %75 = arith.addi %74, %c1_i32_72 : i32
      %76 = arith.index_cast %75 : i32 to index
      %c0_73 = arith.constant 0 : index
      %c0_74 = arith.constant 0 : index
      %77 = vector.load %arg2[%76, %c0_73, %c0_74] : memref<72x32x32xbf16, #tpu.memory_space<vmem>>, vector<1x32x32xbf16>
      %78 = vector.shape_cast %77 : vector<1x32x32xbf16> to vector<32x32xbf16>
      %cst_75 = arith.constant dense<0.000000e+00> : vector<36x32xf32>
      %79 = tpu.matmul %73, %78, %cst_75 {dimension_numbers = #tpu.dot_dimension_numbers<[1], [0], [0], [1], [0, 0, 1, 1], [], []>} : vector<36x32xbf16>, vector<32x32xbf16>, vector<36x32xf32> -> vector<36x32xf32>
      %80 = arith.addf %72, %79 : vector<36x32xf32>
      %c2_76 = arith.constant 2 : index
      %c0_77 = arith.constant 0 : index
      %81 = vector.load %arg9[%c2_76, %c0_77] : memref<50x32xbf16, #tpu.memory_space<vmem>>, vector<36x32xbf16>
      %c9_i32_78 = arith.constant 9 : i32
      %82 = arith.muli %arg10, %c9_i32_78 : i32
      %c2_i32 = arith.constant 2 : i32
      %83 = arith.addi %82, %c2_i32 : i32
      %84 = arith.index_cast %83 : i32 to index
      %c0_79 = arith.constant 0 : index
      %c0_80 = arith.constant 0 : index
      %85 = vector.load %arg2[%84, %c0_79, %c0_80] : memref<72x32x32xbf16, #tpu.memory_space<vmem>>, vector<1x32x32xbf16>
      %86 = vector.shape_cast %85 : vector<1x32x32xbf16> to vector<32x32xbf16>
      %cst_81 = arith.constant dense<0.000000e+00> : vector<36x32xf32>
      %87 = tpu.matmul %81, %86, %cst_81 {dimension_numbers = #tpu.dot_dimension_numbers<[1], [0], [0], [1], [0, 0, 1, 1], [], []>} : vector<36x32xbf16>, vector<32x32xbf16>, vector<36x32xf32> -> vector<36x32xf32>
      %88 = arith.addf %80, %87 : vector<36x32xf32>
      %c6_82 = arith.constant 6 : index
      %c0_83 = arith.constant 0 : index
      %89 = vector.load %arg9[%c6_82, %c0_83] : memref<50x32xbf16, #tpu.memory_space<vmem>>, vector<36x32xbf16>
      %c9_i32_84 = arith.constant 9 : i32
      %90 = arith.muli %arg10, %c9_i32_84 : i32
      %c3_i32 = arith.constant 3 : i32
      %91 = arith.addi %90, %c3_i32 : i32
      %92 = arith.index_cast %91 : i32 to index
      %c0_85 = arith.constant 0 : index
      %c0_86 = arith.constant 0 : index
      %93 = vector.load %arg2[%92, %c0_85, %c0_86] : memref<72x32x32xbf16, #tpu.memory_space<vmem>>, vector<1x32x32xbf16>
      %94 = vector.shape_cast %93 : vector<1x32x32xbf16> to vector<32x32xbf16>
      %cst_87 = arith.constant dense<0.000000e+00> : vector<36x32xf32>
      %95 = tpu.matmul %89, %94, %cst_87 {dimension_numbers = #tpu.dot_dimension_numbers<[1], [0], [0], [1], [0, 0, 1, 1], [], []>} : vector<36x32xbf16>, vector<32x32xbf16>, vector<36x32xf32> -> vector<36x32xf32>
      %96 = arith.addf %88, %95 : vector<36x32xf32>
      %c7_88 = arith.constant 7 : index
      %c0_89 = arith.constant 0 : index
      %97 = vector.load %arg9[%c7_88, %c0_89] : memref<50x32xbf16, #tpu.memory_space<vmem>>, vector<36x32xbf16>
      %c9_i32_90 = arith.constant 9 : i32
      %98 = arith.muli %arg10, %c9_i32_90 : i32
      %c4_i32 = arith.constant 4 : i32
      %99 = arith.addi %98, %c4_i32 : i32
      %100 = arith.index_cast %99 : i32 to index
      %c0_91 = arith.constant 0 : index
      %c0_92 = arith.constant 0 : index
      %101 = vector.load %arg2[%100, %c0_91, %c0_92] : memref<72x32x32xbf16, #tpu.memory_space<vmem>>, vector<1x32x32xbf16>
      %102 = vector.shape_cast %101 : vector<1x32x32xbf16> to vector<32x32xbf16>
      %cst_93 = arith.constant dense<0.000000e+00> : vector<36x32xf32>
      %103 = tpu.matmul %97, %102, %cst_93 {dimension_numbers = #tpu.dot_dimension_numbers<[1], [0], [0], [1], [0, 0, 1, 1], [], []>} : vector<36x32xbf16>, vector<32x32xbf16>, vector<36x32xf32> -> vector<36x32xf32>
      %104 = arith.addf %96, %103 : vector<36x32xf32>
      %c8_94 = arith.constant 8 : index
      %c0_95 = arith.constant 0 : index
      %105 = vector.load %arg9[%c8_94, %c0_95] : memref<50x32xbf16, #tpu.memory_space<vmem>>, vector<36x32xbf16>
      %c9_i32_96 = arith.constant 9 : i32
      %106 = arith.muli %arg10, %c9_i32_96 : i32
      %c5_i32 = arith.constant 5 : i32
      %107 = arith.addi %106, %c5_i32 : i32
      %108 = arith.index_cast %107 : i32 to index
      %c0_97 = arith.constant 0 : index
      %c0_98 = arith.constant 0 : index
      %109 = vector.load %arg2[%108, %c0_97, %c0_98] : memref<72x32x32xbf16, #tpu.memory_space<vmem>>, vector<1x32x32xbf16>
      %110 = vector.shape_cast %109 : vector<1x32x32xbf16> to vector<32x32xbf16>
      %cst_99 = arith.constant dense<0.000000e+00> : vector<36x32xf32>
      %111 = tpu.matmul %105, %110, %cst_99 {dimension_numbers = #tpu.dot_dimension_numbers<[1], [0], [0], [1], [0, 0, 1, 1], [], []>} : vector<36x32xbf16>, vector<32x32xbf16>, vector<36x32xf32> -> vector<36x32xf32>
      %112 = arith.addf %104, %111 : vector<36x32xf32>
      %c12_100 = arith.constant 12 : index
      %c0_101 = arith.constant 0 : index
      %113 = vector.load %arg9[%c12_100, %c0_101] : memref<50x32xbf16, #tpu.memory_space<vmem>>, vector<36x32xbf16>
      %c9_i32_102 = arith.constant 9 : i32
      %114 = arith.muli %arg10, %c9_i32_102 : i32
      %c6_i32 = arith.constant 6 : i32
      %115 = arith.addi %114, %c6_i32 : i32
      %116 = arith.index_cast %115 : i32 to index
      %c0_103 = arith.constant 0 : index
      %c0_104 = arith.constant 0 : index
      %117 = vector.load %arg2[%116, %c0_103, %c0_104] : memref<72x32x32xbf16, #tpu.memory_space<vmem>>, vector<1x32x32xbf16>
      %118 = vector.shape_cast %117 : vector<1x32x32xbf16> to vector<32x32xbf16>
      %cst_105 = arith.constant dense<0.000000e+00> : vector<36x32xf32>
      %119 = tpu.matmul %113, %118, %cst_105 {dimension_numbers = #tpu.dot_dimension_numbers<[1], [0], [0], [1], [0, 0, 1, 1], [], []>} : vector<36x32xbf16>, vector<32x32xbf16>, vector<36x32xf32> -> vector<36x32xf32>
      %120 = arith.addf %112, %119 : vector<36x32xf32>
      %c13_106 = arith.constant 13 : index
      %c0_107 = arith.constant 0 : index
      %121 = vector.load %arg9[%c13_106, %c0_107] : memref<50x32xbf16, #tpu.memory_space<vmem>>, vector<36x32xbf16>
      %c9_i32_108 = arith.constant 9 : i32
      %122 = arith.muli %arg10, %c9_i32_108 : i32
      %c7_i32 = arith.constant 7 : i32
      %123 = arith.addi %122, %c7_i32 : i32
      %124 = arith.index_cast %123 : i32 to index
      %c0_109 = arith.constant 0 : index
      %c0_110 = arith.constant 0 : index
      %125 = vector.load %arg2[%124, %c0_109, %c0_110] : memref<72x32x32xbf16, #tpu.memory_space<vmem>>, vector<1x32x32xbf16>
      %126 = vector.shape_cast %125 : vector<1x32x32xbf16> to vector<32x32xbf16>
      %cst_111 = arith.constant dense<0.000000e+00> : vector<36x32xf32>
      %127 = tpu.matmul %121, %126, %cst_111 {dimension_numbers = #tpu.dot_dimension_numbers<[1], [0], [0], [1], [0, 0, 1, 1], [], []>} : vector<36x32xbf16>, vector<32x32xbf16>, vector<36x32xf32> -> vector<36x32xf32>
      %128 = arith.addf %120, %127 : vector<36x32xf32>
      %c14_112 = arith.constant 14 : index
      %c0_113 = arith.constant 0 : index
      %129 = vector.load %arg9[%c14_112, %c0_113] : memref<50x32xbf16, #tpu.memory_space<vmem>>, vector<36x32xbf16>
      %c9_i32_114 = arith.constant 9 : i32
      %130 = arith.muli %arg10, %c9_i32_114 : i32
      %c8_i32_115 = arith.constant 8 : i32
      %131 = arith.addi %130, %c8_i32_115 : i32
      %132 = arith.index_cast %131 : i32 to index
      %c0_116 = arith.constant 0 : index
      %c0_117 = arith.constant 0 : index
      %133 = vector.load %arg2[%132, %c0_116, %c0_117] : memref<72x32x32xbf16, #tpu.memory_space<vmem>>, vector<1x32x32xbf16>
      %134 = vector.shape_cast %133 : vector<1x32x32xbf16> to vector<32x32xbf16>
      %cst_118 = arith.constant dense<0.000000e+00> : vector<36x32xf32>
      %135 = tpu.matmul %129, %134, %cst_118 {dimension_numbers = #tpu.dot_dimension_numbers<[1], [0], [0], [1], [0, 0, 1, 1], [], []>} : vector<36x32xbf16>, vector<32x32xbf16>, vector<36x32xf32> -> vector<36x32xf32>
      %136 = arith.addf %128, %135 : vector<36x32xf32>
      %137 = arith.index_cast %arg10 : i32 to index
      %c0_119 = arith.constant 0 : index
      %c0_120 = arith.constant 0 : index
      %138 = vector.load %arg3[%137, %c0_119, %c0_120] : memref<8x1x32xf32, #tpu.memory_space<vmem>>, vector<1x1x32xf32>
      %139 = vector.shape_cast %138 : vector<1x1x32xf32> to vector<1x32xf32>
      %140 = vector.broadcast %139 : vector<1x32xf32> to vector<36x32xf32>
      %141 = arith.addf %136, %140 : vector<36x32xf32>
      %142 = arith.index_cast %arg10 : i32 to index
      %c0_121 = arith.constant 0 : index
      %c0_122 = arith.constant 0 : index
      %143 = vector.load %arg4[%142, %c0_121, %c0_122] : memref<8x1x32xf32, #tpu.memory_space<vmem>>, vector<1x1x32xf32>
      %144 = vector.shape_cast %143 : vector<1x1x32xf32> to vector<1x32xf32>
      %145 = vector.broadcast %144 : vector<1x32xf32> to vector<36x32xf32>
      %146 = arith.mulf %141, %145 : vector<36x32xf32>
      %147 = arith.addf %146, %63 : vector<36x32xf32>
      %cst_123 = arith.constant 0.000000e+00 : f32
      %148 = vector.broadcast %cst_123 : f32 to vector<36x32xf32>
      %149 = arith.cmpf ogt, %147, %148 : vector<36x32xf32>
      %cst_124 = arith.constant 2.000000e-01 : f32
      %150 = vector.broadcast %cst_124 : f32 to vector<36x32xf32>
      %151 = arith.mulf %150, %147 : vector<36x32xf32>
      %152 = arith.select %149, %147, %151 : vector<36x32xi1>, vector<36x32xf32>
      %153 = vector.broadcast %7 : vector<36x1xf32> to vector<36x32xf32>
      %154 = arith.mulf %152, %153 : vector<36x32xf32>
      %155 = arith.truncf %154 : vector<36x32xf32> to vector<36x32xbf16>
      %c7_125 = arith.constant 7 : index
      %c0_126 = arith.constant 0 : index
      %156 = vector.load %arg9[%c7_125, %c0_126] : memref<50x32xbf16, #tpu.memory_space<vmem>>, vector<36x32xbf16>
      tpu.vector_store %arg9[%c7_125, %c0_126], %155 {strides = array<i32>} : memref<50x32xbf16, #tpu.memory_space<vmem>>, vector<36x32xbf16>,
    }
    %c8_i32_9 = arith.constant 8 : i32
    %cst_10 = arith.constant 0.000000e+00 : f32
    %9 = vector.broadcast %cst_10 : f32 to vector<36x256xf32>
    %c0_11 = arith.constant 0 : index
    %c0_12 = arith.constant 0 : index
    %10 = vector.load %arg9[%c0_11, %c0_12] : memref<50x32xbf16, #tpu.memory_space<vmem>>, vector<36x32xbf16>
    %c0_13 = arith.constant 0 : index
    %c0_14 = arith.constant 0 : index
    %c0_15 = arith.constant 0 : index
    %11 = vector.load %arg5[%c0_13, %c0_14, %c0_15] : memref<9x32x256xbf16, #tpu.memory_space<vmem>>, vector<1x32x256xbf16>
    %12 = vector.shape_cast %11 : vector<1x32x256xbf16> to vector<32x256xbf16>
    %cst_16 = arith.constant dense<0.000000e+00> : vector<36x256xf32>
    %13 = tpu.matmul %10, %12, %cst_16 {dimension_numbers = #tpu.dot_dimension_numbers<[1], [0], [0], [1], [0, 0, 1, 1], [], []>} : vector<36x32xbf16>, vector<32x256xbf16>, vector<36x256xf32> -> vector<36x256xf32>
    %14 = arith.addf %9, %13 : vector<36x256xf32>
    %c1 = arith.constant 1 : index
    %c0_17 = arith.constant 0 : index
    %15 = vector.load %arg9[%c1, %c0_17] : memref<50x32xbf16, #tpu.memory_space<vmem>>, vector<36x32xbf16>
    %c1_18 = arith.constant 1 : index
    %c0_19 = arith.constant 0 : index
    %c0_20 = arith.constant 0 : index
    %16 = vector.load %arg5[%c1_18, %c0_19, %c0_20] : memref<9x32x256xbf16, #tpu.memory_space<vmem>>, vector<1x32x256xbf16>
    %17 = vector.shape_cast %16 : vector<1x32x256xbf16> to vector<32x256xbf16>
    %cst_21 = arith.constant dense<0.000000e+00> : vector<36x256xf32>
    %18 = tpu.matmul %15, %17, %cst_21 {dimension_numbers = #tpu.dot_dimension_numbers<[1], [0], [0], [1], [0, 0, 1, 1], [], []>} : vector<36x32xbf16>, vector<32x256xbf16>, vector<36x256xf32> -> vector<36x256xf32>
    %19 = arith.addf %14, %18 : vector<36x256xf32>
    %c2 = arith.constant 2 : index
    %c0_22 = arith.constant 0 : index
    %20 = vector.load %arg9[%c2, %c0_22] : memref<50x32xbf16, #tpu.memory_space<vmem>>, vector<36x32xbf16>
    %c2_23 = arith.constant 2 : index
    %c0_24 = arith.constant 0 : index
    %c0_25 = arith.constant 0 : index
    %21 = vector.load %arg5[%c2_23, %c0_24, %c0_25] : memref<9x32x256xbf16, #tpu.memory_space<vmem>>, vector<1x32x256xbf16>
    %22 = vector.shape_cast %21 : vector<1x32x256xbf16> to vector<32x256xbf16>
    %cst_26 = arith.constant dense<0.000000e+00> : vector<36x256xf32>
    %23 = tpu.matmul %20, %22, %cst_26 {dimension_numbers = #tpu.dot_dimension_numbers<[1], [0], [0], [1], [0, 0, 1, 1], [], []>} : vector<36x32xbf16>, vector<32x256xbf16>, vector<36x256xf32> -> vector<36x256xf32>
    %24 = arith.addf %19, %23 : vector<36x256xf32>
    %c6 = arith.constant 6 : index
    %c0_27 = arith.constant 0 : index
    %25 = vector.load %arg9[%c6, %c0_27] : memref<50x32xbf16, #tpu.memory_space<vmem>>, vector<36x32xbf16>
    %c3 = arith.constant 3 : index
    %c0_28 = arith.constant 0 : index
    %c0_29 = arith.constant 0 : index
    %26 = vector.load %arg5[%c3, %c0_28, %c0_29] : memref<9x32x256xbf16, #tpu.memory_space<vmem>>, vector<1x32x256xbf16>
    %27 = vector.shape_cast %26 : vector<1x32x256xbf16> to vector<32x256xbf16>
    %cst_30 = arith.constant dense<0.000000e+00> : vector<36x256xf32>
    %28 = tpu.matmul %25, %27, %cst_30 {dimension_numbers = #tpu.dot_dimension_numbers<[1], [0], [0], [1], [0, 0, 1, 1], [], []>} : vector<36x32xbf16>, vector<32x256xbf16>, vector<36x256xf32> -> vector<36x256xf32>
    %29 = arith.addf %24, %28 : vector<36x256xf32>
    %c7_31 = arith.constant 7 : index
    %c0_32 = arith.constant 0 : index
    %30 = vector.load %arg9[%c7_31, %c0_32] : memref<50x32xbf16, #tpu.memory_space<vmem>>, vector<36x32xbf16>
    %c4 = arith.constant 4 : index
    %c0_33 = arith.constant 0 : index
    %c0_34 = arith.constant 0 : index
    %31 = vector.load %arg5[%c4, %c0_33, %c0_34] : memref<9x32x256xbf16, #tpu.memory_space<vmem>>, vector<1x32x256xbf16>
    %32 = vector.shape_cast %31 : vector<1x32x256xbf16> to vector<32x256xbf16>
    %cst_35 = arith.constant dense<0.000000e+00> : vector<36x256xf32>
    %33 = tpu.matmul %30, %32, %cst_35 {dimension_numbers = #tpu.dot_dimension_numbers<[1], [0], [0], [1], [0, 0, 1, 1], [], []>} : vector<36x32xbf16>, vector<32x256xbf16>, vector<36x256xf32> -> vector<36x256xf32>
    %34 = arith.addf %29, %33 : vector<36x256xf32>
    %c8 = arith.constant 8 : index
    %c0_36 = arith.constant 0 : index
    %35 = vector.load %arg9[%c8, %c0_36] : memref<50x32xbf16, #tpu.memory_space<vmem>>, vector<36x32xbf16>
    %c5 = arith.constant 5 : index
    %c0_37 = arith.constant 0 : index
    %c0_38 = arith.constant 0 : index
    %36 = vector.load %arg5[%c5, %c0_37, %c0_38] : memref<9x32x256xbf16, #tpu.memory_space<vmem>>, vector<1x32x256xbf16>
    %37 = vector.shape_cast %36 : vector<1x32x256xbf16> to vector<32x256xbf16>
    %cst_39 = arith.constant dense<0.000000e+00> : vector<36x256xf32>
    %38 = tpu.matmul %35, %37, %cst_39 {dimension_numbers = #tpu.dot_dimension_numbers<[1], [0], [0], [1], [0, 0, 1, 1], [], []>} : vector<36x32xbf16>, vector<32x256xbf16>, vector<36x256xf32> -> vector<36x256xf32>
    %39 = arith.addf %34, %38 : vector<36x256xf32>
    %c12 = arith.constant 12 : index
    %c0_40 = arith.constant 0 : index
    %40 = vector.load %arg9[%c12, %c0_40] : memref<50x32xbf16, #tpu.memory_space<vmem>>, vector<36x32xbf16>
    %c6_41 = arith.constant 6 : index
    %c0_42 = arith.constant 0 : index
    %c0_43 = arith.constant 0 : index
    %41 = vector.load %arg5[%c6_41, %c0_42, %c0_43] : memref<9x32x256xbf16, #tpu.memory_space<vmem>>, vector<1x32x256xbf16>
    %42 = vector.shape_cast %41 : vector<1x32x256xbf16> to vector<32x256xbf16>
    %cst_44 = arith.constant dense<0.000000e+00> : vector<36x256xf32>
    %43 = tpu.matmul %40, %42, %cst_44 {dimension_numbers = #tpu.dot_dimension_numbers<[1], [0], [0], [1], [0, 0, 1, 1], [], []>} : vector<36x32xbf16>, vector<32x256xbf16>, vector<36x256xf32> -> vector<36x256xf32>
    %44 = arith.addf %39, %43 : vector<36x256xf32>
    %c13 = arith.constant 13 : index
    %c0_45 = arith.constant 0 : index
    %45 = vector.load %arg9[%c13, %c0_45] : memref<50x32xbf16, #tpu.memory_space<vmem>>, vector<36x32xbf16>
    %c7_46 = arith.constant 7 : index
    %c0_47 = arith.constant 0 : index
    %c0_48 = arith.constant 0 : index
    %46 = vector.load %arg5[%c7_46, %c0_47, %c0_48] : memref<9x32x256xbf16, #tpu.memory_space<vmem>>, vector<1x32x256xbf16>
    %47 = vector.shape_cast %46 : vector<1x32x256xbf16> to vector<32x256xbf16>
    %cst_49 = arith.constant dense<0.000000e+00> : vector<36x256xf32>
    %48 = tpu.matmul %45, %47, %cst_49 {dimension_numbers = #tpu.dot_dimension_numbers<[1], [0], [0], [1], [0, 0, 1, 1], [], []>} : vector<36x32xbf16>, vector<32x256xbf16>, vector<36x256xf32> -> vector<36x256xf32>
    %49 = arith.addf %44, %48 : vector<36x256xf32>
    %c14 = arith.constant 14 : index
    %c0_50 = arith.constant 0 : index
    %50 = vector.load %arg9[%c14, %c0_50] : memref<50x32xbf16, #tpu.memory_space<vmem>>, vector<36x32xbf16>
    %c8_51 = arith.constant 8 : index
    %c0_52 = arith.constant 0 : index
    %c0_53 = arith.constant 0 : index
    %51 = vector.load %arg5[%c8_51, %c0_52, %c0_53] : memref<9x32x256xbf16, #tpu.memory_space<vmem>>, vector<1x32x256xbf16>
    %52 = vector.shape_cast %51 : vector<1x32x256xbf16> to vector<32x256xbf16>
    %cst_54 = arith.constant dense<0.000000e+00> : vector<36x256xf32>
    %53 = tpu.matmul %50, %52, %cst_54 {dimension_numbers = #tpu.dot_dimension_numbers<[1], [0], [0], [1], [0, 0, 1, 1], [], []>} : vector<36x32xbf16>, vector<32x256xbf16>, vector<36x256xf32> -> vector<36x256xf32>
    %54 = arith.addf %49, %53 : vector<36x256xf32>
    %c0_55 = arith.constant 0 : index
    %c0_56 = arith.constant 0 : index
    %55 = vector.load %arg6[%c0_55, %c0_56] : memref<1x256xf32, #tpu.memory_space<vmem>>, vector<1x256xf32>
    %56 = vector.broadcast %55 : vector<1x256xf32> to vector<36x256xf32>
    %57 = arith.addf %54, %56 : vector<36x256xf32>
    %58 = arith.truncf %57 : vector<36x256xf32> to vector<36x256xbf16>
    %c0_57 = arith.constant 0 : index
    %c0_58 = arith.constant 0 : index
    %c0_59 = arith.constant 0 : index
    %59 = vector.load %arg8[%c0_57, %c0_58, %c0_59] : memref<1x36x256xbf16, #tpu.memory_space<vmem>>, vector<1x36x256xbf16>
    %60 = vector.shape_cast %59 : vector<1x36x256xbf16> to vector<36x256xbf16>
    %61 = vector.shape_cast %58 : vector<36x256xbf16> to vector<1x36x256xbf16>
    tpu.vector_store %arg8[%c0_57, %c0_58, %c0_59], %61 {strides = array<i32>} : memref<1x36x256xbf16, #tpu.memory_space<vmem>>, vector<1x36x256xbf16>,
    return
  }
  func.func @transform_0(%arg0: i32) -> (i32, i32, i32) {
    %c0_i32 = arith.constant 0 : i32
    %c0_i32_0 = arith.constant 0 : i32
    %c0_i32_1 = arith.constant 0 : i32
    return %arg0, %c0_i32, %c0_i32_0 : i32, i32, i32
  }
  func.func @transform_1(%arg0: i32) -> (i32, i32, i32) {
    %c0_i32 = arith.constant 0 : i32
    %c0_i32_0 = arith.constant 0 : i32
    %c0_i32_1 = arith.constant 0 : i32
    %c0_i32_2 = arith.constant 0 : i32
    return %c0_i32, %c0_i32_0, %c0_i32_1 : i32, i32, i32
  }
  func.func @transform_2(%arg0: i32) -> (i32, i32, i32) {
    %c0_i32 = arith.constant 0 : i32
    %c0_i32_0 = arith.constant 0 : i32
    %c0_i32_1 = arith.constant 0 : i32
    %c0_i32_2 = arith.constant 0 : i32
    return %c0_i32, %c0_i32_0, %c0_i32_1 : i32, i32, i32
  }
  func.func @transform_3(%arg0: i32) -> (i32, i32, i32) {
    %c0_i32 = arith.constant 0 : i32
    %c0_i32_0 = arith.constant 0 : i32
    %c0_i32_1 = arith.constant 0 : i32
    %c0_i32_2 = arith.constant 0 : i32
    return %c0_i32, %c0_i32_0, %c0_i32_1 : i32, i32, i32
  }
  func.func @transform_4(%arg0: i32) -> (i32, i32, i32) {
    %c0_i32 = arith.constant 0 : i32
    %c0_i32_0 = arith.constant 0 : i32
    %c0_i32_1 = arith.constant 0 : i32
    %c0_i32_2 = arith.constant 0 : i32
    return %c0_i32, %c0_i32_0, %c0_i32_1 : i32, i32, i32
  }
  func.func @transform_5(%arg0: i32) -> (i32, i32) {
    %c0_i32 = arith.constant 0 : i32
    %c0_i32_0 = arith.constant 0 : i32
    %c0_i32_1 = arith.constant 0 : i32
    return %c0_i32, %c0_i32_0 : i32, i32
  }
  func.func @transform_6(%arg0: i32) -> (i32, i32) {
    %c0_i32 = arith.constant 0 : i32
    %c0_i32_0 = arith.constant 0 : i32
    %c0_i32_1 = arith.constant 0 : i32
    return %c0_i32, %c0_i32_0 : i32, i32
  }
  func.func @transform_7(%arg0: i32) -> (i32, i32, i32) {
    %c0_i32 = arith.constant 0 : i32
    %c0_i32_0 = arith.constant 0 : i32
    %c0_i32_1 = arith.constant 0 : i32
    return %arg0, %c0_i32, %c0_i32_0 : i32, i32, i32
  }
}

</mosaic_0001>

<llo_original>
// kernel: ifblock_forward.3
$region0: #{ifblock_forward.3}
  #allocation0 [shape = 'u32[]', space=smem, size = 0x4, offset = 0x4, fixed_abs, tag = 'smem constant byte address 0x4 - core index']
  #allocation1 [shape = 'u32[72,128]{1,0:T(1,128)}', space=vmem, size = 0x9000, scoped, tag = 'internal scratch']
  %s0 = inlined_call_operand.vmem [shape: bf16[2,92,28], index: 0, kind: input, shape index: {}]
  %s1 = inlined_call_operand.vmem [shape: bf16[4,28,16], index: 1, kind: input, shape index: {}]
  %s2 = inlined_call_operand.hbm [shape: f32[1,16], index: 2, kind: input, shape index: {}]
  %s3 = inlined_call_operand.vmem [shape: bf16[2,81,16], index: 3, kind: output, shape index: {}]
  %s4 = sld [smem:[#allocation0]]
  $region49: #{ifblock_forward.3} parent=0
    _
  %s6 = ssub.s32 1, %s4
  %s7 = scalar_select 0, %s6, %s4
  $region1: #{ifblock_forward.3} parent=0
    #allocation2 [shape = 'u8[512]{0}', space=vmem, size = 0x400, scoped, tag = 'input window, operand 2, single buffered']
    #allocation3 [shape = 's32[2]{0}', space=sflag, size = 0x8, scoped, tag = 'scoped memory for ifblock_forward.3']
    %8 = vsyncpa [#allocation3], 0
    loop: start=0, step=1, limit=4
    $region2: #{ifblock_forward.3} parent=1 // loop_pre_header
      _
    $region3: #{ifblock_forward.3} parent=1 // loop_header
      %s10 = sphi 0, %s14
      %p11 = scmp.ge.s32.totalorder %s10, 4
      %s20 = sphi 0, %s22
      %s23 = sphi 0, %s20
      %s24 = sphi 0, %s23
      %s40 = sphi 0, %s24
      %s44 = sphi 0, %s44
      %s46 = sphi 0, %s44
      %s47 = sphi 0, %s46
      %s61 = sphi 0, %s47
      %s65 = sphi 0, %s65
      %s67 = sphi 0, %s65
      %s68 = sphi 0, %s67
      %s82 = sphi 0, %s68
      %s88 = sphi 0, %s90
      %s91 = sphi 0, %s88
      %s92 = sphi 0, %s91
      %s108 = sphi 0, %s92
    $region4: #{ifblock_forward.3} parent=1 // loop_header_branch
      %13 = sbr.rel (%p11) target = $region8
    $region5: #{ifblock_forward.3} parent=1 // loop_body
      %s15 = ssub.s32 %s10, 1
      %s16 = ssub.s32 %s10, 2
      %s17 = sadd.s32 %s10, 1
      %s18 = ssub.s32 %s10, %s17
      %p19 = scmp.eq.s32.totalorder %s18, 0
      %s21 = sadd.s32 %s20, 1
      %s22 = scalar_select %p19, %s20, %s21
      %p25 = pneg %p19
      %p26 = scmp.eq.s32.totalorder %s10, 1
      %p27 = por %p25, %p26
      %p28 = scmp.ne.s32.totalorder %s20, %s23
      %p29 = scmp.eq.s32.totalorder %s10, 0
      %p30 = por %p28, %p29
      %p31 = scmp.ne.s32.totalorder %s20, %s23
      %p32 = scmp.eq.s32.totalorder %s15, 1
      %p33 = por %p31, %p32
      %p34 = scmp.ne.s32.totalorder %s23, %s24
      %p35 = scmp.eq.s32.totalorder %s15, 0
      %p36 = por %p34, %p35
      %p37 = scmp.ne.s32.totalorder %s23, %s24
      %p38 = scmp.eq.s32.totalorder %s16, 1
      %p39 = por %p37, %p38
      %p41 = scmp.ne.s32.totalorder %s24, %s40
      %p42 = scmp.eq.s32.totalorder %s16, 0
      %p43 = por %p41, %p42
      %s45 = sadd.s32 %s44, 1
      %p48 = scmp.eq.s32.totalorder %s10, 1
      %p49 = scmp.ne.s32.totalorder %s44, %s46
      %p50 = scmp.eq.s32.totalorder %s10, 0
      %p51 = por %p49, %p50
      %p52 = scmp.ne.s32.totalorder %s44, %s46
      %p53 = scmp.eq.s32.totalorder %s15, 1
      %p54 = por %p52, %p53
      %p55 = scmp.ne.s32.totalorder %s46, %s47
      %p56 = scmp.eq.s32.totalorder %s15, 0
      %p57 = por %p55, %p56
      %p58 = scmp.ne.s32.totalorder %s46, %s47
      %p59 = scmp.eq.s32.totalorder %s16, 1
      %p60 = por %p58, %p59
      %p62 = scmp.ne.s32.totalorder %s47, %s61
      %p63 = scmp.eq.s32.totalorder %s16, 0
      %p64 = por %p62, %p63
      %s66 = sadd.s32 %s65, 1
      %p69 = scmp.eq.s32.totalorder %s10, 1
      %p70 = scmp.ne.s32.totalorder %s65, %s67
      %p71 = scmp.eq.s32.totalorder %s10, 0
      %p72 = por %p70, %p71
      %p73 = scmp.ne.s32.totalorder %s65, %s67
      %p74 = scmp.eq.s32.totalorder %s15, 1
      %p75 = por %p73, %p74
      %p76 = scmp.ne.s32.totalorder %s67, %s68
      %p77 = scmp.eq.s32.totalorder %s15, 0
      %p78 = por %p76, %p77
      %p79 = scmp.ne.s32.totalorder %s67, %s68
      %p80 = scmp.eq.s32.totalorder %s16, 1
      %p81 = por %p79, %p80
      %p83 = scmp.ne.s32.totalorder %s68, %s82
      %p84 = scmp.eq.s32.totalorder %s16, 0
      %p85 = por %p83, %p84
      %s86 = ssub.s32 %s10, %s17
      %p87 = scmp.eq.s32.totalorder %s86, 0
      %s89 = sadd.s32 %s88, 1
      %s90 = scalar_select %p87, %s88, %s89
      %p93 = pneg %p87
      %p94 = scmp.eq.s32.totalorder %s10, 1
      %p95 = por %p93, %p94
      %p96 = scmp.ne.s32.totalorder %s88, %s91
      %p97 = scmp.eq.s32.totalorder %s10, 0
      %p98 = por %p96, %p97
      %p99 = scmp.ne.s32.totalorder %s88, %s91
      %p100 = scmp.eq.s32.totalorder %s15, 1
      %p101 = por %p99, %p100
      %p102 = scmp.ne.s32.totalorder %s91, %s92
      %p103 = scmp.eq.s32.totalorder %s15, 0
      %p104 = por %p102, %p103
      %p105 = scmp.ne.s32.totalorder %s91, %s92
      %p106 = scmp.eq.s32.totalorder %s16, 1
      %p107 = por %p105, %p106
      %p109 = scmp.ne.s32.totalorder %s92, %s108
      %p110 = scmp.eq.s32.totalorder %s16, 0
      %p111 = por %p109, %p110
      %p112 = scmp.le.s32.totalorder 1, %s10
      %p113 = scmp.lt.s32.totalorder %s10, 3
      %p114 = pnand %p112, %p113
      %p115 = pneg %p114
      // Predicated region
      $region9: #{ifblock_forward.3} parent=5 // pred_check
        _
      $region10: #{ifblock_forward.3} parent=5 // pred_check_branch
        %117 = sbr.rel (%p114) target = $region12
      $region11: #{ifblock_forward.3} parent=5 // pred_region
        %s118 = ssub.s32 %s10, 1
        // Predicated region
        $region13: #{ifblock_forward.3} parent=11 // pred_check
          %p119 = pneg %p57
        $region14: #{ifblock_forward.3} parent=11 // pred_check_branch
          %121 = sbr.rel (%p119) target = $region16
        $region15: #{ifblock_forward.3} parent=11 // pred_region
          _
        $region16: #{ifblock_forward.3} parent=11 // pred_fallthru
          _
        // Predicated region
        $region17: #{ifblock_forward.3} parent=11 // pred_check
          %p122 = pneg %p78
        $region18: #{ifblock_forward.3} parent=11 // pred_check_branch
          %124 = sbr.rel (%p122) target = $region20
        $region19: #{ifblock_forward.3} parent=11 // pred_region
          %126 = vsyncadd [#allocation3], 0
          %s128 = sshll.u32 %s2, 4
          %s129 = int_to_ptr.hbm [resolvable:$true] %s128
          %s130 = sshll.u32 [#allocation2], 4
          %s131 = int_to_ptr.vmem [resolvable:$true] %s130
          %133 = dma.hbm_to_vmem [thread:$0]  %s129, 16, %s131, [#allocation3]
        $region20: #{ifblock_forward.3} parent=11 // pred_fallthru
          _
      $region12: #{ifblock_forward.3} parent=5 // pred_fallthru
        _
      %p134 = scmp.lt.s32.totalorder %s10, 2
      // Predicated region
      $region21: #{ifblock_forward.3} parent=5 // pred_check
        %p135 = pneg %p134
      $region22: #{ifblock_forward.3} parent=5 // pred_check_branch
        %137 = sbr.rel (%p135) target = $region24
      $region23: #{ifblock_forward.3} parent=5 // pred_region
        // Predicated region
        $region25: #{ifblock_forward.3} parent=23 // pred_check
          %p138 = pneg %p30
        $region26: #{ifblock_forward.3} parent=23 // pred_check_branch
          %140 = sbr.rel (%p138) target = $region28
        $region27: #{ifblock_forward.3} parent=23 // pred_region
          %p141 = scmp.lt.s32.totalorder %s10, 1
          %s142 = scalar_select %p141, %s10, 1
          %s143 = smul.addr %s142, 12
          %s144 = smul.addr %s143, 4
          %s145 = scalar_lea.vmem %s0, %s144
        $region28: #{ifblock_forward.3} parent=23 // pred_fallthru
          _
      $region24: #{ifblock_forward.3} parent=5 // pred_fallthru
        _
      %p146 = scmp.le.s32.totalorder 1, %s10
      %p147 = scmp.lt.s32.totalorder %s10, 3
      %p148 = pnand %p146, %p147
      %p149 = pneg %p148
      // Predicated region
      $region29: #{ifblock_forward.3} parent=5 // pred_check
        _
      $region30: #{ifblock_forward.3} parent=5 // pred_check_branch
        %151 = sbr.rel (%p148) target = $region32
      $region31: #{ifblock_forward.3} parent=5 // pred_region
        %s152 = ssub.s32 %s10, 1
        // Predicated region
        $region33: #{ifblock_forward.3} parent=31 // pred_check
          %p153 = pneg %p78
        $region34: #{ifblock_forward.3} parent=31 // pred_check_branch
          %155 = sbr.rel (%p153) target = $region36
        $region35: #{ifblock_forward.3} parent=31 // pred_region
          %157 = dma.done [#allocation3], 16
        $region36: #{ifblock_forward.3} parent=31 // pred_fallthru
          _
        %p158 = scmp.lt.s32.totalorder %s15, 1
        %s159 = scalar_select %p158, %s15, 1
        %s160 = smul.addr %s159, 12
        %s161 = smul.addr %s160, 4
        %s162 = scalar_lea.vmem %s0, %s161
        %p163 = pneg %p36
        %p164 = pneg %p33
        %p165 = pneg %p57
        %p166 = pneg %p54
        %p167 = pneg %p78
        %p168 = pneg %p75
        %p169 = pneg %p104
        %p170 = pneg %p101
        %p171 = scmp.lt.s32.totalorder %s15, 1
        %s172 = scalar_select %p171, %s15, 1
        %s173 = smul.addr %s172, 11
        %s174 = smul.addr %s173, 4
        %s175 = scalar_lea.vmem %s3, %s174
        %p176 = scmp.lt.s32.totalorder %s15, 1
        %s177 = scalar_select %p176, %s15, 1
        %s178 = smul.addr %s177, 12
        %s179 = smul.addr %s178, 4
        %s180 = scalar_lea.vmem %s0, %s179
        %p181 = scmp.lt.s32.totalorder %s15, 1
        %s182 = scalar_select %p181, %s15, 1
        %s183 = smul.addr %s182, 11
        %s184 = smul.addr %s183, 4
        %s185 = scalar_lea.vmem %s3, %s184
        %v187 = vld [vmem:[%s180] sm:$0xf]
        %v188 = vld [vmem:[%s180 + $0x4] sm:$0xf]
        %v189 = vld [vmem:[%s180 + $0x8] sm:$0xf]
        %v190 = vld [vmem:[%s180 + $0xc] sm:$0xf]
        %v191 = vld [vmem:[%s180 + $0x10] sm:$0xf]
        %v192 = vld [vmem:[%s180 + $0x14] sm:$0xf]
        %v193 = vld [vmem:[%s180 + $0x18] sm:$0xf]
        %v194 = vld [vmem:[%s180 + $0x1c] sm:$0xf]
        %v195 = vld [vmem:[%s180 + $0x20] sm:$0xf]
        %v196 = vld [vmem:[%s180 + $0x24] sm:$0xf]
        %v197 = vld [vmem:[%s180 + $0x28] sm:$0x1]
        %v198 = vld [vmem:[%s1] sm:$0xf]
        %v199 = vld [vmem:[%s1 + $0x4] sm:$0xf]
        %v200 = vld [vmem:[%s1 + $0x8] sm:$0xf]
        %v201 = vld [vmem:[%s1 + $0xc] sm:$0x3]
        %s202 = scalar_lea.vmem %s1, 16
        %v203 = vld [vmem:[%s202] sm:$0xf]
        %v204 = vld [vmem:[%s202 + $0x4] sm:$0xf]
        %v205 = vld [vmem:[%s202 + $0x8] sm:$0xf]
        %v206 = vld [vmem:[%s202 + $0xc] sm:$0x3]
        %v218 = vunpack.c.l.b16 %v187
        %v219 = vunpack.c.l.b16 %v188
        %v220 = vunpack.c.l.b16 %v189
        %v221 = vunpack.c.l.b16 %v190
        %v222 = vunpack.c.l.b16 %v191
        %v223 = vunpack.c.l.b16 %v192
        %v224 = vunpack.c.l.b16 %v193
        %v225 = vunpack.c.l.b16 %v194
        %v226 = vunpack.c.l.b16 %v195
        %v227 = vunpack.c.l.b16 %v196
        %v228 = vunpack.c.l.b16 %v197
        %v229 = vpack.c.b16 %v219, %v218
        %v230 = vpack.c.b16 %v221, %v220
        %v231 = vpack.c.b16 %v223, %v222
        %v232 = vpack.c.b16 %v225, %v224
        %v233 = vpack.c.b16 %v227, %v226
        %v234 = vpack.c.b16 %v228, %v228
        %vm235 = vsmask.f32 7424
        %v237 = vshrl.u32 %v229, 16
        %v239 = vshll.u32 %v229, 16
        %v241 = vrot.slane %v239, 1
        %v242 = vor.u32 %v237, %v241
        %v244 = vshll.u32 %v230, 16
        %v246 = vrot.slane %v244, 1
        %v247 = vsel %vm235, %v242, %v246
        %v248 = vshrl.u32 %v230, 16
        %v250 = vor.u32 %v248, %v246
        %v252 = vshll.u32 %v231, 16
        %v254 = vrot.slane %v252, 1
        %v255 = vsel %vm235, %v250, %v254
        %v256 = vshrl.u32 %v231, 16
        %v258 = vor.u32 %v256, %v254
        %v260 = vshll.u32 %v232, 16
        %v262 = vrot.slane %v260, 1
        %v263 = vsel %vm235, %v258, %v262
        %v264 = vshrl.u32 %v232, 16
        %v266 = vor.u32 %v264, %v262
        %v268 = vshll.u32 %v233, 16
        %v270 = vrot.slane %v268, 1
        %v271 = vsel %vm235, %v266, %v270
        %v272 = vshrl.u32 %v233, 16
        %v274 = vor.u32 %v272, %v270
        %v276 = vshll.u32 %v234, 16
        %v278 = vrot.slane %v276, 1
        %v279 = vsel %vm235, %v274, %v278
        %v280 = vshrl.u32 %v234, 16
        %v286 = vunpack.c.l.b16 %v203
        %v287 = vunpack.c.l.b16 %v204
        %v288 = vunpack.c.l.b16 %v205
        %v289 = vunpack.c.l.b16 %v206
        %v290 = vpack.c.b16 %v287, %v286
        %v291 = vpack.c.b16 %v289, %v288
        %vm293 = vcmask 228352
        %v295 = vsel %vm293, %v247, 0
        %v298 = vsel %vm293, %v255, 0
        %v301 = vsel %vm293, %v263, 0
        %v304 = vsel %vm293, %v271, 0
        %v307 = vsel %vm293, %v279, 0
        %v310 = vsel %vm293, %v280, 0
        %vm312 = vcmask 1045504
        %v314 = vsel %vm312, %v291, 0
        %316 = vmatpush.bf16.msra.mxu0 0
        %317 = vmatpush.bf16.msra.mxu0 0
        %318 = vmatpush.bf16.msra.mxu0 0
        %319 = vmatpush.bf16.msra.mxu0 0
        %320 = vmatpush.bf16.msra.mxu0 0
        %321 = vmatpush.bf16.msra.mxu0 0
        %322 = vmatpush.bf16.msra.mxu0 %v314
        %323 = vmatpush.bf16.msra.mxu0 %v290
        %324 = vmatmul.bf16.gmra.mxu0 %v295
        %v325 = vpop.f32.mrf.mxu0
        %v326 = vadd.f32 0.0, %v325
        %v327 = vpop.f32.mrf.mxu0
        %v328 = vadd.f32 0.0, %v327
        %329 = vmatmul.bf16.gmra.mxu0 %v298
        %v330 = vpop.f32.mrf.mxu0
        %v331 = vadd.f32 0.0, %v330
        %v332 = vpop.f32.mrf.mxu0
        %v333 = vadd.f32 0.0, %v332
        %334 = vmatmul.bf16.gmra.mxu0 %v301
        %v335 = vpop.f32.mrf.mxu0
        %v336 = vadd.f32 0.0, %v335
        %v337 = vpop.f32.mrf.mxu0
        %v338 = vadd.f32 0.0, %v337
        %339 = vmatmul.bf16.gmra.mxu0 %v304
        %v340 = vpop.f32.mrf.mxu0
        %v341 = vadd.f32 0.0, %v340
        %v342 = vpop.f32.mrf.mxu0
        %v343 = vadd.f32 0.0, %v342
        %344 = vmatmul.bf16.gmra.mxu0 %v307
        %v345 = vpop.f32.mrf.mxu0
        %v346 = vadd.f32 0.0, %v345
        %v347 = vpop.f32.mrf.mxu0
        %v348 = vadd.f32 0.0, %v347
        %349 = vmatmul.bf16.gmra.mxu0 %v310
        %v350 = vpop.f32.mrf.mxu0
        %v351 = vadd.f32 0.0, %v350
        %v352 = vpop.f32.mrf.mxu0
        %353 = vdwg.mxu0
        %v358 = vunpack.c.l.b16 %v198
        %v359 = vunpack.c.l.b16 %v199
        %v360 = vunpack.c.l.b16 %v200
        %v361 = vunpack.c.l.b16 %v201
        %v362 = vpack.c.b16 %v359, %v358
        %v363 = vpack.c.b16 %v361, %v360
        %v365 = vsel %vm293, %v229, 0
        %v367 = vsel %vm293, %v230, 0
        %v369 = vsel %vm293, %v231, 0
        %v371 = vsel %vm293, %v232, 0
        %v373 = vsel %vm293, %v233, 0
        %v375 = vsel %vm293, %v234, 0
        %v378 = vsel %vm312, %v363, 0
        %380 = vmatpush.bf16.msra.mxu0 0
        %381 = vmatpush.bf16.msra.mxu0 0
        %382 = vmatpush.bf16.msra.mxu0 0
        %383 = vmatpush.bf16.msra.mxu0 0
        %384 = vmatpush.bf16.msra.mxu0 0
        %385 = vmatpush.bf16.msra.mxu0 0
        %386 = vmatpush.bf16.msra.mxu0 %v378
        %387 = vmatpush.bf16.msra.mxu0 %v362
        %388 = vmatmul.bf16.gmra.mxu0 %v365
        %v389 = vpop.f32.mrf.mxu0
        %v390 = vadd.f32 %v326, %v389
        %v391 = vpop.f32.mrf.mxu0
        %v392 = vadd.f32 %v328, %v391
        %393 = vmatmul.bf16.gmra.mxu0 %v367
        %v394 = vpop.f32.mrf.mxu0
        %v395 = vadd.f32 %v331, %v394
        %v396 = vpop.f32.mrf.mxu0
        %v397 = vadd.f32 %v333, %v396
        %398 = vmatmul.bf16.gmra.mxu0 %v369
        %v399 = vpop.f32.mrf.mxu0
        %v400 = vadd.f32 %v336, %v399
        %v401 = vpop.f32.mrf.mxu0
        %v402 = vadd.f32 %v338, %v401
        %403 = vmatmul.bf16.gmra.mxu0 %v371
        %v404 = vpop.f32.mrf.mxu0
        %v405 = vadd.f32 %v341, %v404
        %v406 = vpop.f32.mrf.mxu0
        %v407 = vadd.f32 %v343, %v406
        %408 = vmatmul.bf16.gmra.mxu0 %v373
        %v409 = vpop.f32.mrf.mxu0
        %v410 = vadd.f32 %v346, %v409
        %v411 = vpop.f32.mrf.mxu0
        %v412 = vadd.f32 %v348, %v411
        %413 = vmatmul.bf16.gmra.mxu0 %v375
        %v414 = vpop.f32.mrf.mxu0
        %v415 = vadd.f32 %v351, %v414
        %v416 = vpop.f32.mrf.mxu0
        %417 = vdwg.mxu0
        %v418 = vld [vmem:[%s180 + $0x4] sm:$0xf]
        %v419 = vld [vmem:[%s180 + $0x8] sm:$0xf]
        %v420 = vld [vmem:[%s180 + $0xc] sm:$0xf]
        %v421 = vld [vmem:[%s180 + $0x10] sm:$0xf]
        %v422 = vld [vmem:[%s180 + $0x14] sm:$0xf]
        %v423 = vld [vmem:[%s180 + $0x18] sm:$0xf]
        %v424 = vld [vmem:[%s180 + $0x1c] sm:$0xf]
        %v425 = vld [vmem:[%s180 + $0x20] sm:$0xf]
        %v426 = vld [vmem:[%s180 + $0x24] sm:$0xf]
        %v427 = vld [vmem:[%s180 + $0x28] sm:$0xf]
        %v428 = vld [vmem:[%s180 + $0x2c] sm:$0x1]
        %s429 = scalar_lea.vmem %s1, 32
        %v430 = vld [vmem:[%s429] sm:$0xf]
        %v431 = vld [vmem:[%s429 + $0x4] sm:$0xf]
        %v432 = vld [vmem:[%s429 + $0x8] sm:$0xf]
        %v433 = vld [vmem:[%s429 + $0xc] sm:$0x3]
        %v445 = vunpack.c.l.b16 %v418
        %v446 = vunpack.c.l.b16 %v419
        %v447 = vunpack.c.l.b16 %v420
        %v448 = vunpack.c.l.b16 %v421
        %v449 = vunpack.c.l.b16 %v422
        %v450 = vunpack.c.l.b16 %v423
        %v451 = vunpack.c.l.b16 %v424
        %v452 = vunpack.c.l.b16 %v425
        %v453 = vunpack.c.l.b16 %v426
        %v454 = vunpack.c.l.b16 %v427
        %v455 = vunpack.c.l.b16 %v428
        %v456 = vpack.c.b16 %v446, %v445
        %v457 = vpack.c.b16 %v448, %v447
        %v458 = vpack.c.b16 %v450, %v449
        %v459 = vpack.c.b16 %v452, %v451
        %v460 = vpack.c.b16 %v454, %v453
        %v461 = vpack.c.b16 %v455, %v455
        %v463 = vshrl.u32 %v456, 16
        %v465 = vshll.u32 %v456, 16
        %v467 = vrot.slane %v465, 1
        %v468 = vor.u32 %v463, %v467
        %v470 = vshll.u32 %v457, 16
        %v472 = vrot.slane %v470, 1
        %v473 = vsel %vm235, %v468, %v472
        %v474 = vshrl.u32 %v457, 16
        %v476 = vor.u32 %v474, %v472
        %v478 = vshll.u32 %v458, 16
        %v480 = vrot.slane %v478, 1
        %v481 = vsel %vm235, %v476, %v480
        %v482 = vshrl.u32 %v458, 16
        %v484 = vor.u32 %v482, %v480
        %v486 = vshll.u32 %v459, 16
        %v488 = vrot.slane %v486, 1
        %v489 = vsel %vm235, %v484, %v488
        %v490 = vshrl.u32 %v459, 16
        %v492 = vor.u32 %v490, %v488
        %v494 = vshll.u32 %v460, 16
        %v496 = vrot.slane %v494, 1
        %v497 = vsel %vm235, %v492, %v496
        %v498 = vshrl.u32 %v460, 16
        %v500 = vor.u32 %v498, %v496
        %v502 = vshll.u32 %v461, 16
        %v504 = vrot.slane %v502, 1
        %v505 = vsel %vm235, %v500, %v504
        %v506 = vshrl.u32 %v461, 16
        %v512 = vunpack.c.l.b16 %v430
        %v513 = vunpack.c.l.b16 %v431
        %v514 = vunpack.c.l.b16 %v432
        %v515 = vunpack.c.l.b16 %v433
        %v516 = vpack.c.b16 %v513, %v512
        %v517 = vpack.c.b16 %v515, %v514
        %v520 = vsel %vm293, %v473, 0
        %v523 = vsel %vm293, %v481, 0
        %v526 = vsel %vm293, %v489, 0
        %v529 = vsel %vm293, %v497, 0
        %v532 = vsel %vm293, %v505, 0
        %v535 = vsel %vm293, %v506, 0
        %v538 = vsel %vm312, %v517, 0
        %540 = vmatpush.bf16.msra.mxu0 0
        %541 = vmatpush.bf16.msra.mxu0 0
        %542 = vmatpush.bf16.msra.mxu0 0
        %543 = vmatpush.bf16.msra.mxu0 0
        %544 = vmatpush.bf16.msra.mxu0 0
        %545 = vmatpush.bf16.msra.mxu0 0
        %546 = vmatpush.bf16.msra.mxu0 %v538
        %547 = vmatpush.bf16.msra.mxu0 %v516
        %548 = vmatmul.bf16.gmra.mxu0 %v520
        %v549 = vpop.f32.mrf.mxu0
        %v550 = vadd.f32 0.0, %v549
        %v551 = vpop.f32.mrf.mxu0
        %v552 = vadd.f32 0.0, %v551
        %553 = vmatmul.bf16.gmra.mxu0 %v523
        %v554 = vpop.f32.mrf.mxu0
        %v555 = vadd.f32 0.0, %v554
        %v556 = vpop.f32.mrf.mxu0
        %v557 = vadd.f32 0.0, %v556
        %558 = vmatmul.bf16.gmra.mxu0 %v526
        %v559 = vpop.f32.mrf.mxu0
        %v560 = vadd.f32 0.0, %v559
        %v561 = vpop.f32.mrf.mxu0
        %v562 = vadd.f32 0.0, %v561
        %563 = vmatmul.bf16.gmra.mxu0 %v529
        %v564 = vpop.f32.mrf.mxu0
        %v565 = vadd.f32 0.0, %v564
        %v566 = vpop.f32.mrf.mxu0
        %v567 = vadd.f32 0.0, %v566
        %568 = vmatmul.bf16.gmra.mxu0 %v532
        %v569 = vpop.f32.mrf.mxu0
        %v570 = vadd.f32 0.0, %v569
        %v571 = vpop.f32.mrf.mxu0
        %v572 = vadd.f32 0.0, %v571
        %573 = vmatmul.bf16.gmra.mxu0 %v535
        %v574 = vpop.f32.mrf.mxu0
        %v575 = vadd.f32 0.0, %v574
        %v576 = vpop.f32.mrf.mxu0
        %577 = vdwg.mxu0
        %v578 = vadd.f32 %v390, %v550
        %v579 = vadd.f32 %v392, %v552
        %v580 = vadd.f32 %v395, %v555
        %v581 = vadd.f32 %v397, %v557
        %v582 = vadd.f32 %v400, %v560
        %v583 = vadd.f32 %v402, %v562
        %v584 = vadd.f32 %v405, %v565
        %v585 = vadd.f32 %v407, %v567
        %v586 = vadd.f32 %v410, %v570
        %v587 = vadd.f32 %v412, %v572
        %v588 = vadd.f32 %v415, %v575
        %v589 = vld [vmem:[%s180 + $0x4] sm:$0xe]
        %v590 = vld [vmem:[%s180 + $0x2c] sm:$0x3]
        %s591 = scalar_lea.vmem %s1, 48
        %v592 = vld [vmem:[%s591] sm:$0xf]
        %v593 = vld [vmem:[%s591 + $0x4] sm:$0xf]
        %v594 = vld [vmem:[%s591 + $0x8] sm:$0xf]
        %v595 = vld [vmem:[%s591 + $0xc] sm:$0x3]
        %v598 = vunpack.c.l.b16 %v589
        %v599 = vunpack.c.l.b16 %v590
        %v600 = vpack.c.b16 %v446, %v598
        %v601 = vpack.c.b16 %v599, %v599
        %vm602 = vcmask 1046528
        %v603 = vrot.slane %v600, 1
        %v604 = vrot.slane %v457, 1
        %v605 = vsel %vm602, %v603, %v604
        %v606 = vrot.slane %v458, 1
        %v607 = vsel %vm602, %v604, %v606
        %v608 = vrot.slane %v459, 1
        %v609 = vsel %vm602, %v606, %v608
        %v610 = vrot.slane %v460, 1
        %v611 = vsel %vm602, %v608, %v610
        %v612 = vrot.slane %v601, 1
        %v613 = vsel %vm602, %v610, %v612
        %v618 = vunpack.c.l.b16 %v592
        %v619 = vunpack.c.l.b16 %v593
        %v620 = vunpack.c.l.b16 %v594
        %v621 = vunpack.c.l.b16 %v595
        %v622 = vpack.c.b16 %v619, %v618
        %v623 = vpack.c.b16 %v621, %v620
        %v626 = vsel %vm293, %v605, 0
        %v629 = vsel %vm293, %v607, 0
        %v632 = vsel %vm293, %v609, 0
        %v635 = vsel %vm293, %v611, 0
        %v638 = vsel %vm293, %v613, 0
        %v641 = vsel %vm293, %v612, 0
        %v644 = vsel %vm312, %v623, 0
        %646 = vmatpush.bf16.msra.mxu0 0
        %647 = vmatpush.bf16.msra.mxu0 0
        %648 = vmatpush.bf16.msra.mxu0 0
        %649 = vmatpush.bf16.msra.mxu0 0
        %650 = vmatpush.bf16.msra.mxu0 0
        %651 = vmatpush.bf16.msra.mxu0 0
        %652 = vmatpush.bf16.msra.mxu0 %v644
        %653 = vmatpush.bf16.msra.mxu0 %v622
        %654 = vmatmul.bf16.gmra.mxu0 %v626
        %v655 = vpop.f32.mrf.mxu0
        %v656 = vadd.f32 0.0, %v655
        %v657 = vpop.f32.mrf.mxu0
        %v658 = vadd.f32 0.0, %v657
        %659 = vmatmul.bf16.gmra.mxu0 %v629
        %v660 = vpop.f32.mrf.mxu0
        %v661 = vadd.f32 0.0, %v660
        %v662 = vpop.f32.mrf.mxu0
        %v663 = vadd.f32 0.0, %v662
        %664 = vmatmul.bf16.gmra.mxu0 %v632
        %v665 = vpop.f32.mrf.mxu0
        %v666 = vadd.f32 0.0, %v665
        %v667 = vpop.f32.mrf.mxu0
        %v668 = vadd.f32 0.0, %v667
        %669 = vmatmul.bf16.gmra.mxu0 %v635
        %v670 = vpop.f32.mrf.mxu0
        %v671 = vadd.f32 0.0, %v670
        %v672 = vpop.f32.mrf.mxu0
        %v673 = vadd.f32 0.0, %v672
        %674 = vmatmul.bf16.gmra.mxu0 %v638
        %v675 = vpop.f32.mrf.mxu0
        %v676 = vadd.f32 0.0, %v675
        %v677 = vpop.f32.mrf.mxu0
        %v678 = vadd.f32 0.0, %v677
        %679 = vmatmul.bf16.gmra.mxu0 %v641
        %v680 = vpop.f32.mrf.mxu0
        %v681 = vadd.f32 0.0, %v680
        %v682 = vpop.f32.mrf.mxu0
        %683 = vdwg.mxu0
        %v684 = vadd.f32 %v578, %v656
        %v685 = vadd.f32 %v579, %v658
        %v686 = vadd.f32 %v580, %v661
        %v687 = vadd.f32 %v581, %v663
        %v688 = vadd.f32 %v582, %v666
        %v689 = vadd.f32 %v583, %v668
        %v690 = vadd.f32 %v584, %v671
        %v691 = vadd.f32 %v585, %v673
        %v692 = vadd.f32 %v586, %v676
        %v693 = vadd.f32 %v587, %v678
        %v694 = vadd.f32 %v588, %v681
        %v695 = vld [vmem:[#allocation2] sm:$0x1]
        %v697 = vperm.slane %v695, 0
        %v699 = vadd.f32 %v684, %v697
        %v700 = vadd.f32 %v685, %v697
        %v701 = vadd.f32 %v686, %v697
        %v702 = vadd.f32 %v687, %v697
        %v703 = vadd.f32 %v688, %v697
        %v704 = vadd.f32 %v689, %v697
        %v705 = vadd.f32 %v690, %v697
        %v706 = vadd.f32 %v691, %v697
        %v707 = vadd.f32 %v692, %v697
        %v708 = vadd.f32 %v693, %v697
        %v709 = vadd.f32 %v694, %v697
        %vm710 = vcmp.gt.f32.partialorder %v699, 0.0
        %vm711 = vcmp.gt.f32.partialorder %v700, 0.0
        %vm712 = vcmp.gt.f32.partialorder %v701, 0.0
        %vm713 = vcmp.gt.f32.partialorder %v702, 0.0
        %vm714 = vcmp.gt.f32.partialorder %v703, 0.0
        %vm715 = vcmp.gt.f32.partialorder %v704, 0.0
        %vm716 = vcmp.gt.f32.partialorder %v705, 0.0
        %vm717 = vcmp.gt.f32.partialorder %v706, 0.0
        %vm718 = vcmp.gt.f32.partialorder %v707, 0.0
        %vm719 = vcmp.gt.f32.partialorder %v708, 0.0
        %vm720 = vcmp.gt.f32.partialorder %v709, 0.0
        %v721 = vmul.f32 %v699, 0.2
        %v722 = vmul.f32 %v700, 0.2
        %v723 = vmul.f32 %v701, 0.2
        %v724 = vmul.f32 %v702, 0.2
        %v725 = vmul.f32 %v703, 0.2
        %v726 = vmul.f32 %v704, 0.2
        %v727 = vmul.f32 %v705, 0.2
        %v728 = vmul.f32 %v706, 0.2
        %v729 = vmul.f32 %v707, 0.2
        %v730 = vmul.f32 %v708, 0.2
        %v731 = vmul.f32 %v709, 0.2
        %v732 = vsel %vm710, %v699, %v721
        %v733 = vsel %vm711, %v700, %v722
        %v734 = vsel %vm712, %v701, %v723
        %v735 = vsel %vm713, %v702, %v724
        %v736 = vsel %vm714, %v703, %v725
        %v737 = vsel %vm715, %v704, %v726
        %v738 = vsel %vm716, %v705, %v727
        %v739 = vsel %vm717, %v706, %v728
        %v740 = vsel %vm718, %v707, %v729
        %v741 = vsel %vm719, %v708, %v730
        %v742 = vsel %vm720, %v709, %v731
        %v743 = vpack.c.bf16 %v732, %v732
        %v744 = vpack.c.bf16 %v733, %v733
        %v745 = vpack.c.bf16 %v734, %v734
        %v746 = vpack.c.bf16 %v735, %v735
        %v747 = vpack.c.bf16 %v736, %v736
        %v748 = vpack.c.bf16 %v737, %v737
        %v749 = vpack.c.bf16 %v738, %v738
        %v750 = vpack.c.bf16 %v739, %v739
        %v751 = vpack.c.bf16 %v740, %v740
        %v752 = vpack.c.bf16 %v741, %v741
        %v753 = vpack.c.bf16 %v742, %v742
        %vm754 = vcmask 125952
        %755 = vst.msk [vmem:[%s185] sm:$0xf] %vm754, %v743
        %756 = vst.msk [vmem:[%s185 + $0x4] sm:$0xf] %vm754, %v744
        %757 = vst.msk [vmem:[%s185 + $0x8] sm:$0xf] %vm754, %v745
        %758 = vst.msk [vmem:[%s185 + $0xc] sm:$0xf] %vm754, %v746
        %759 = vst.msk [vmem:[%s185 + $0x10] sm:$0xf] %vm754, %v747
        %760 = vst.msk [vmem:[%s185 + $0x14] sm:$0xf] %vm754, %v748
        %761 = vst.msk [vmem:[%s185 + $0x18] sm:$0xf] %vm754, %v749
        %762 = vst.msk [vmem:[%s185 + $0x1c] sm:$0xf] %vm754, %v750
        %763 = vst.msk [vmem:[%s185 + $0x20] sm:$0xf] %vm754, %v751
        %764 = vst.msk [vmem:[%s185 + $0x24] sm:$0xf] %vm754, %v752
        %vm765 = vcmask 122880
        %vm766 = vsmask.f32 256
        %vm767 = vmand %vm765, %vm766
        %v768 = vld [vmem:[%s185 + $0x28] sm:$0x1]
        %v769 = vsel %vm767, %v753, %v768
        %770 = vst [vmem:[%s185 + $0x28] sm:$0x1] %v769
        %p771 = scmp.lt.s32.totalorder %s15, 1
        %s772 = scalar_select %p771, %s15, 1
        %s773 = smul.addr %s772, 11
        %s774 = smul.addr %s773, 4
        %s775 = scalar_lea.vmem %s3, %s774
        // Predicated region
        $region37: #{ifblock_forward.3} parent=31 // pred_check
          %p776 = pneg %p101
        $region38: #{ifblock_forward.3} parent=31 // pred_check_branch
          %778 = sbr.rel (%p776) target = $region40
        $region39: #{ifblock_forward.3} parent=31 // pred_region
          _
        $region40: #{ifblock_forward.3} parent=31 // pred_fallthru
          _
      $region32: #{ifblock_forward.3} parent=5 // pred_fallthru
        _
      %p779 = scmp.le.s32.totalorder 2, %s10
      // Predicated region
      $region41: #{ifblock_forward.3} parent=5 // pred_check
        %p780 = pneg %p779
      $region42: #{ifblock_forward.3} parent=5 // pred_check_branch
        %782 = sbr.rel (%p780) target = $region44
      $region43: #{ifblock_forward.3} parent=5 // pred_region
        %s783 = ssub.s32 %s10, 2
        // Predicated region
        $region45: #{ifblock_forward.3} parent=43 // pred_check
          %p784 = pneg %p107
        $region46: #{ifblock_forward.3} parent=43 // pred_check_branch
          %786 = sbr.rel (%p784) target = $region48
        $region47: #{ifblock_forward.3} parent=43 // pred_region
          %p787 = scmp.lt.s32.totalorder %s16, 1
          %s788 = scalar_select %p787, %s16, 1
          %s789 = smul.addr %s788, 11
          %s790 = smul.addr %s789, 4
          %s791 = scalar_lea.vmem %s3, %s790
        $region48: #{ifblock_forward.3} parent=43 // pred_fallthru
          _
      $region44: #{ifblock_forward.3} parent=5 // pred_fallthru
        _
    $region6: #{ifblock_forward.3} parent=1 // loop_footer
      %s14 = sadd.s32 1, %s10
    $region7: #{ifblock_forward.3} parent=1 // loop_footer_branch
      %9 = sbr.rel target = $region3
    $region8: #{ifblock_forward.3} parent=1 // loop_exit
      _
    %792 = vsyncpa [#allocation3], 1
    %s793 = scalar_lea.sflag [#allocation3], 1
    %794 = vsyncpa %s793, 1

// kernel: ifblock_forward.4
$region0: #{ifblock_forward.4}
  #allocation0 [shape = 'u32[]', space=smem, size = 0x4, offset = 0x4, fixed_abs, tag = 'smem constant byte address 0x4 - core index']
  #allocation1 [shape = 'u32[72,128]{1,0:T(1,128)}', space=vmem, size = 0x9000, scoped, tag = 'internal scratch']
  %s0 = inlined_call_operand.vmem [shape: bf16[2,32,64], index: 0, kind: input, shape index: {}]
  %s1 = inlined_call_operand.vmem [shape: bf16[4,64,32], index: 1, kind: input, shape index: {}]
  %s2 = inlined_call_operand.vmem [shape: f32[1,32], index: 2, kind: input, shape index: {}]
  %s3 = inlined_call_operand.vmem [shape: bf16[2,25,32], index: 3, kind: output, shape index: {}]
  %s4 = sld [smem:[#allocation0]]
  $region45: #{ifblock_forward.4} parent=0
    _
  %s6 = ssub.s32 1, %s4
  %s7 = scalar_select 0, %s6, %s4
  loop: start=0, step=1, limit=4
  $region2: #{ifblock_forward.4} parent=0 // loop_pre_header
    _
  $region3: #{ifblock_forward.4} parent=0 // loop_header
    %s9 = sphi 0, %s13
    %p10 = scmp.ge.s32.totalorder %s9, 4
    %s19 = sphi 0, %s21
    %s22 = sphi 0, %s19
    %s23 = sphi 0, %s22
    %s39 = sphi 0, %s23
    %s43 = sphi 0, %s43
    %s45 = sphi 0, %s43
    %s46 = sphi 0, %s45
    %s60 = sphi 0, %s46
    %s64 = sphi 0, %s64
    %s66 = sphi 0, %s64
    %s67 = sphi 0, %s66
    %s81 = sphi 0, %s67
    %s87 = sphi 0, %s89
    %s90 = sphi 0, %s87
    %s91 = sphi 0, %s90
    %s107 = sphi 0, %s91
  $region4: #{ifblock_forward.4} parent=0 // loop_header_branch
    %12 = sbr.rel (%p10) target = $region8
  $region5: #{ifblock_forward.4} parent=0 // loop_body
    %s14 = ssub.s32 %s9, 1
    %s15 = ssub.s32 %s9, 2
    %s16 = sadd.s32 %s9, 1
    %s17 = ssub.s32 %s9, %s16
    %p18 = scmp.eq.s32.totalorder %s17, 0
    %s20 = sadd.s32 %s19, 1
    %s21 = scalar_select %p18, %s19, %s20
    %p24 = pneg %p18
    %p25 = scmp.eq.s32.totalorder %s9, 1
    %p26 = por %p24, %p25
    %p27 = scmp.ne.s32.totalorder %s19, %s22
    %p28 = scmp.eq.s32.totalorder %s9, 0
    %p29 = por %p27, %p28
    %p30 = scmp.ne.s32.totalorder %s19, %s22
    %p31 = scmp.eq.s32.totalorder %s14, 1
    %p32 = por %p30, %p31
    %p33 = scmp.ne.s32.totalorder %s22, %s23
    %p34 = scmp.eq.s32.totalorder %s14, 0
    %p35 = por %p33, %p34
    %p36 = scmp.ne.s32.totalorder %s22, %s23
    %p37 = scmp.eq.s32.totalorder %s15, 1
    %p38 = por %p36, %p37
    %p40 = scmp.ne.s32.totalorder %s23, %s39
    %p41 = scmp.eq.s32.totalorder %s15, 0
    %p42 = por %p40, %p41
    %s44 = sadd.s32 %s43, 1
    %p47 = scmp.eq.s32.totalorder %s9, 1
    %p48 = scmp.ne.s32.totalorder %s43, %s45
    %p49 = scmp.eq.s32.totalorder %s9, 0
    %p50 = por %p48, %p49
    %p51 = scmp.ne.s32.totalorder %s43, %s45
    %p52 = scmp.eq.s32.totalorder %s14, 1
    %p53 = por %p51, %p52
    %p54 = scmp.ne.s32.totalorder %s45, %s46
    %p55 = scmp.eq.s32.totalorder %s14, 0
    %p56 = por %p54, %p55
    %p57 = scmp.ne.s32.totalorder %s45, %s46
    %p58 = scmp.eq.s32.totalorder %s15, 1
    %p59 = por %p57, %p58
    %p61 = scmp.ne.s32.totalorder %s46, %s60
    %p62 = scmp.eq.s32.totalorder %s15, 0
    %p63 = por %p61, %p62
    %s65 = sadd.s32 %s64, 1
    %p68 = scmp.eq.s32.totalorder %s9, 1
    %p69 = scmp.ne.s32.totalorder %s64, %s66
    %p70 = scmp.eq.s32.totalorder %s9, 0
    %p71 = por %p69, %p70
    %p72 = scmp.ne.s32.totalorder %s64, %s66
    %p73 = scmp.eq.s32.totalorder %s14, 1
    %p74 = por %p72, %p73
    %p75 = scmp.ne.s32.totalorder %s66, %s67
    %p76 = scmp.eq.s32.totalorder %s14, 0
    %p77 = por %p75, %p76
    %p78 = scmp.ne.s32.totalorder %s66, %s67
    %p79 = scmp.eq.s32.totalorder %s15, 1
    %p80 = por %p78, %p79
    %p82 = scmp.ne.s32.totalorder %s67, %s81
    %p83 = scmp.eq.s32.totalorder %s15, 0
    %p84 = por %p82, %p83
    %s85 = ssub.s32 %s9, %s16
    %p86 = scmp.eq.s32.totalorder %s85, 0
    %s88 = sadd.s32 %s87, 1
    %s89 = scalar_select %p86, %s87, %s88
    %p92 = pneg %p86
    %p93 = scmp.eq.s32.totalorder %s9, 1
    %p94 = por %p92, %p93
    %p95 = scmp.ne.s32.totalorder %s87, %s90
    %p96 = scmp.eq.s32.totalorder %s9, 0
    %p97 = por %p95, %p96
    %p98 = scmp.ne.s32.totalorder %s87, %s90
    %p99 = scmp.eq.s32.totalorder %s14, 1
    %p100 = por %p98, %p99
    %p101 = scmp.ne.s32.totalorder %s90, %s91
    %p102 = scmp.eq.s32.totalorder %s14, 0
    %p103 = por %p101, %p102
    %p104 = scmp.ne.s32.totalorder %s90, %s91
    %p105 = scmp.eq.s32.totalorder %s15, 1
    %p106 = por %p104, %p105
    %p108 = scmp.ne.s32.totalorder %s91, %s107
    %p109 = scmp.eq.s32.totalorder %s15, 0
    %p110 = por %p108, %p109
    %p111 = scmp.le.s32.totalorder 1, %s9
    %p112 = scmp.lt.s32.totalorder %s9, 3
    %p113 = pnand %p111, %p112
    %p114 = pneg %p113
    // Predicated region
    $region9: #{ifblock_forward.4} parent=5 // pred_check
      _
    $region10: #{ifblock_forward.4} parent=5 // pred_check_branch
      %116 = sbr.rel (%p113) target = $region12
    $region11: #{ifblock_forward.4} parent=5 // pred_region
      %s117 = ssub.s32 %s9, 1
      // Predicated region
      $region13: #{ifblock_forward.4} parent=11 // pred_check
        %p118 = pneg %p56
      $region14: #{ifblock_forward.4} parent=11 // pred_check_branch
        %120 = sbr.rel (%p118) target = $region16
      $region15: #{ifblock_forward.4} parent=11 // pred_region
        _
      $region16: #{ifblock_forward.4} parent=11 // pred_fallthru
        _
      // Predicated region
      $region17: #{ifblock_forward.4} parent=11 // pred_check
        %p121 = pneg %p77
      $region18: #{ifblock_forward.4} parent=11 // pred_check_branch
        %123 = sbr.rel (%p121) target = $region20
      $region19: #{ifblock_forward.4} parent=11 // pred_region
        _
      $region20: #{ifblock_forward.4} parent=11 // pred_fallthru
        _
    $region12: #{ifblock_forward.4} parent=5 // pred_fallthru
      _
    %p124 = scmp.lt.s32.totalorder %s9, 2
    // Predicated region
    $region21: #{ifblock_forward.4} parent=5 // pred_check
      %p125 = pneg %p124
    $region22: #{ifblock_forward.4} parent=5 // pred_check_branch
      %127 = sbr.rel (%p125) target = $region24
    $region23: #{ifblock_forward.4} parent=5 // pred_region
      // Predicated region
      $region25: #{ifblock_forward.4} parent=23 // pred_check
        %p128 = pneg %p29
      $region26: #{ifblock_forward.4} parent=23 // pred_check_branch
        %130 = sbr.rel (%p128) target = $region28
      $region27: #{ifblock_forward.4} parent=23 // pred_region
        %p131 = scmp.lt.s32.totalorder %s9, 1
        %s132 = scalar_select %p131, %s9, 1
        %s133 = smul.addr %s132, 4
        %s134 = smul.addr %s133, 4
        %s135 = scalar_lea.vmem %s0, %s134
      $region28: #{ifblock_forward.4} parent=23 // pred_fallthru
        _
    $region24: #{ifblock_forward.4} parent=5 // pred_fallthru
      _
    %p136 = scmp.le.s32.totalorder 1, %s9
    %p137 = scmp.lt.s32.totalorder %s9, 3
    %p138 = pnand %p136, %p137
    %p139 = pneg %p138
    // Predicated region
    $region29: #{ifblock_forward.4} parent=5 // pred_check
      _
    $region30: #{ifblock_forward.4} parent=5 // pred_check_branch
      %141 = sbr.rel (%p138) target = $region32
    $region31: #{ifblock_forward.4} parent=5 // pred_region
      %s142 = ssub.s32 %s9, 1
      %p143 = scmp.lt.s32.totalorder %s14, 1
      %s144 = scalar_select %p143, %s14, 1
      %s145 = smul.addr %s144, 4
      %s146 = smul.addr %s145, 4
      %s147 = scalar_lea.vmem %s0, %s146
      %p148 = pneg %p35
      %p149 = pneg %p32
      %p150 = pneg %p56
      %p151 = pneg %p53
      %p152 = pneg %p77
      %p153 = pneg %p74
      %p154 = pneg %p103
      %p155 = pneg %p100
      %p156 = scmp.lt.s32.totalorder %s14, 1
      %s157 = scalar_select %p156, %s14, 1
      %s158 = smul.addr %s157, 4
      %s159 = smul.addr %s158, 4
      %s160 = scalar_lea.vmem %s3, %s159
      %p161 = scmp.lt.s32.totalorder %s14, 1
      %s162 = scalar_select %p161, %s14, 1
      %s163 = smul.addr %s162, 4
      %s164 = smul.addr %s163, 4
      %s165 = scalar_lea.vmem %s0, %s164
      %p166 = scmp.lt.s32.totalorder %s14, 1
      %s167 = scalar_select %p166, %s14, 1
      %s168 = smul.addr %s167, 4
      %s169 = smul.addr %s168, 4
      %s170 = scalar_lea.vmem %s3, %s169
      %v172 = vld [vmem:[%s165] sm:$0xf]
      %v173 = vld [vmem:[%s165 + $0x4] sm:$0xf]
      %v174 = vld [vmem:[%s165 + $0x8] sm:$0xf]
      %v175 = vld [vmem:[%s165 + $0xc] sm:$0x1]
      %v176 = vld [vmem:[%s1] sm:$0xf]
      %v177 = vld [vmem:[%s1 + $0x4] sm:$0xf]
      %v178 = vld [vmem:[%s1 + $0x8] sm:$0xf]
      %v179 = vld [vmem:[%s1 + $0xc] sm:$0xf]
      %v180 = vld [vmem:[%s1 + $0x10] sm:$0xf]
      %v181 = vld [vmem:[%s1 + $0x14] sm:$0xf]
      %v182 = vld [vmem:[%s1 + $0x18] sm:$0xf]
      %v183 = vld [vmem:[%s1 + $0x1c] sm:$0xf]
      %s184 = scalar_lea.vmem %s1, 32
      %v185 = vld [vmem:[%s184] sm:$0xf]
      %v186 = vld [vmem:[%s184 + $0x4] sm:$0xf]
      %v187 = vld [vmem:[%s184 + $0x8] sm:$0xf]
      %v188 = vld [vmem:[%s184 + $0xc] sm:$0xf]
      %v189 = vld [vmem:[%s184 + $0x10] sm:$0xf]
      %v190 = vld [vmem:[%s184 + $0x14] sm:$0xf]
      %v191 = vld [vmem:[%s184 + $0x18] sm:$0xf]
      %v192 = vld [vmem:[%s184 + $0x1c] sm:$0xf]
      %v197 = vunpack.c.l.b16 %v172
      %v198 = vunpack.c.l.b16 %v173
      %v199 = vunpack.c.l.b16 %v174
      %v200 = vunpack.c.l.b16 %v175
      %v201 = vpack.c.b16 %v198, %v197
      %v202 = vpack.c.b16 %v200, %v199
      %vm203 = vsmask.f32 7424
      %v205 = vshrl.u32 %v201, 16
      %v207 = vshll.u32 %v201, 16
      %v209 = vrot.slane %v207, 1
      %v210 = vor.u32 %v205, %v209
      %v212 = vshll.u32 %v202, 16
      %v214 = vrot.slane %v212, 1
      %v215 = vsel %vm203, %v210, %v214
      %v216 = vshrl.u32 %v202, 16
      %v218 = vor.u32 %v216, %v214
      %v227 = vunpack.c.l.b16 %v185
      %v228 = vunpack.c.l.b16 %v186
      %v229 = vunpack.c.l.b16 %v187
      %v230 = vunpack.c.l.b16 %v188
      %v231 = vunpack.c.l.b16 %v189
      %v232 = vunpack.c.l.b16 %v190
      %v233 = vunpack.c.l.b16 %v191
      %v234 = vunpack.c.l.b16 %v192
      %v235 = vpack.c.b16 %v228, %v227
      %v236 = vpack.c.b16 %v230, %v229
      %v237 = vpack.c.b16 %v232, %v231
      %v238 = vpack.c.b16 %v234, %v233
      %vm243 = vcmask 523264
      %v245 = vsel %vm243, %v215, 0
      %v248 = vsel %vm243, %v218, 0
      %250 = vmatpush.bf16.msra.mxu0 0
      %251 = vmatpush.bf16.msra.mxu0 0
      %252 = vmatpush.bf16.msra.mxu0 0
      %253 = vmatpush.bf16.msra.mxu0 0
      %254 = vmatpush.bf16.msra.mxu0 %v238
      %255 = vmatpush.bf16.msra.mxu0 %v237
      %256 = vmatpush.bf16.msra.mxu0 %v236
      %257 = vmatpush.bf16.msra.mxu0 %v235
      %258 = vmatmul.bf16.gmra.mxu0 %v245
      %v259 = vpop.f32.mrf.mxu0
      %v260 = vadd.f32 0.0, %v259
      %v261 = vpop.f32.mrf.mxu0
      %v262 = vadd.f32 0.0, %v261
      %263 = vmatmul.bf16.gmra.mxu0 %v248
      %v264 = vpop.f32.mrf.mxu0
      %v265 = vadd.f32 0.0, %v264
      %v266 = vpop.f32.mrf.mxu0
      %v267 = vadd.f32 0.0, %v266
      %268 = vdwg.mxu0
      %v277 = vunpack.c.l.b16 %v176
      %v278 = vunpack.c.l.b16 %v177
      %v279 = vunpack.c.l.b16 %v178
      %v280 = vunpack.c.l.b16 %v179
      %v281 = vunpack.c.l.b16 %v180
      %v282 = vunpack.c.l.b16 %v181
      %v283 = vunpack.c.l.b16 %v182
      %v284 = vunpack.c.l.b16 %v183
      %v285 = vpack.c.b16 %v278, %v277
      %v286 = vpack.c.b16 %v280, %v279
      %v287 = vpack.c.b16 %v282, %v281
      %v288 = vpack.c.b16 %v284, %v283
      %v293 = vsel %vm243, %v201, 0
      %v295 = vsel %vm243, %v202, 0
      %297 = vmatpush.bf16.msra.mxu0 0
      %298 = vmatpush.bf16.msra.mxu0 0
      %299 = vmatpush.bf16.msra.mxu0 0
      %300 = vmatpush.bf16.msra.mxu0 0
      %301 = vmatpush.bf16.msra.mxu0 %v288
      %302 = vmatpush.bf16.msra.mxu0 %v287
      %303 = vmatpush.bf16.msra.mxu0 %v286
      %304 = vmatpush.bf16.msra.mxu0 %v285
      %305 = vmatmul.bf16.gmra.mxu0 %v293
      %v306 = vpop.f32.mrf.mxu0
      %v307 = vadd.f32 %v260, %v306
      %v308 = vpop.f32.mrf.mxu0
      %v309 = vadd.f32 %v262, %v308
      %310 = vmatmul.bf16.gmra.mxu0 %v295
      %v311 = vpop.f32.mrf.mxu0
      %v312 = vadd.f32 %v265, %v311
      %v313 = vpop.f32.mrf.mxu0
      %v314 = vadd.f32 %v267, %v313
      %315 = vdwg.mxu0
      %v316 = vld [vmem:[%s165] sm:$0xc]
      %v317 = vld [vmem:[%s165 + $0xc] sm:$0x7]
      %s318 = scalar_lea.vmem %s1, 64
      %v319 = vld [vmem:[%s318] sm:$0xf]
      %v320 = vld [vmem:[%s318 + $0x4] sm:$0xf]
      %v321 = vld [vmem:[%s318 + $0x8] sm:$0xf]
      %v322 = vld [vmem:[%s318 + $0xc] sm:$0xf]
      %v323 = vld [vmem:[%s318 + $0x10] sm:$0xf]
      %v324 = vld [vmem:[%s318 + $0x14] sm:$0xf]
      %v325 = vld [vmem:[%s318 + $0x18] sm:$0xf]
      %v326 = vld [vmem:[%s318 + $0x1c] sm:$0xf]
      %v329 = vunpack.c.l.b16 %v316
      %v330 = vunpack.c.l.b16 %v317
      %v331 = vpack.c.b16 %v198, %v329
      %v332 = vpack.c.b16 %v330, %v199
      %vm333 = vsmask.f32 5376
      %v335 = vshrl.u32 %v331, 16
      %v337 = vrot.slane %v335, 2
      %v338 = vshll.u32 %v331, 16
      %v340 = vrot.slane %v338, 3
      %v341 = vor.u32 %v337, %v340
      %v343 = vshrl.u32 %v332, 16
      %v345 = vrot.slane %v343, 2
      %v346 = vshll.u32 %v332, 16
      %v348 = vrot.slane %v346, 3
      %v349 = vor.u32 %v345, %v348
      %v350 = vsel %vm333, %v341, %v349
      %v359 = vunpack.c.l.b16 %v319
      %v360 = vunpack.c.l.b16 %v320
      %v361 = vunpack.c.l.b16 %v321
      %v362 = vunpack.c.l.b16 %v322
      %v363 = vunpack.c.l.b16 %v323
      %v364 = vunpack.c.l.b16 %v324
      %v365 = vunpack.c.l.b16 %v325
      %v366 = vunpack.c.l.b16 %v326
      %v367 = vpack.c.b16 %v360, %v359
      %v368 = vpack.c.b16 %v362, %v361
      %v369 = vpack.c.b16 %v364, %v363
      %v370 = vpack.c.b16 %v366, %v365
      %v376 = vsel %vm243, %v350, 0
      %v379 = vsel %vm243, %v349, 0
      %381 = vmatpush.bf16.msra.mxu0 0
      %382 = vmatpush.bf16.msra.mxu0 0
      %383 = vmatpush.bf16.msra.mxu0 0
      %384 = vmatpush.bf16.msra.mxu0 0
      %385 = vmatpush.bf16.msra.mxu0 %v370
      %386 = vmatpush.bf16.msra.mxu0 %v369
      %387 = vmatpush.bf16.msra.mxu0 %v368
      %388 = vmatpush.bf16.msra.mxu0 %v367
      %389 = vmatmul.bf16.gmra.mxu0 %v376
      %v390 = vpop.f32.mrf.mxu0
      %v391 = vadd.f32 0.0, %v390
      %v392 = vpop.f32.mrf.mxu0
      %v393 = vadd.f32 0.0, %v392
      %394 = vmatmul.bf16.gmra.mxu0 %v379
      %v395 = vpop.f32.mrf.mxu0
      %v396 = vadd.f32 0.0, %v395
      %v397 = vpop.f32.mrf.mxu0
      %v398 = vadd.f32 0.0, %v397
      %399 = vdwg.mxu0
      %v400 = vadd.f32 %v307, %v391
      %v401 = vadd.f32 %v309, %v393
      %v402 = vadd.f32 %v312, %v396
      %v403 = vadd.f32 %v314, %v398
      %v404 = vld [vmem:[%s165] sm:$0x8]
      %v405 = vld [vmem:[%s165 + $0xc] sm:$0xf]
      %s406 = scalar_lea.vmem %s1, 96
      %v407 = vld [vmem:[%s406] sm:$0xf]
      %v408 = vld [vmem:[%s406 + $0x4] sm:$0xf]
      %v409 = vld [vmem:[%s406 + $0x8] sm:$0xf]
      %v410 = vld [vmem:[%s406 + $0xc] sm:$0xf]
      %v411 = vld [vmem:[%s406 + $0x10] sm:$0xf]
      %v412 = vld [vmem:[%s406 + $0x14] sm:$0xf]
      %v413 = vld [vmem:[%s406 + $0x18] sm:$0xf]
      %v414 = vld [vmem:[%s406 + $0x1c] sm:$0xf]
      %v417 = vunpack.c.l.b16 %v404
      %v418 = vunpack.c.l.b16 %v405
      %v419 = vpack.c.b16 %v198, %v417
      %v420 = vpack.c.b16 %v418, %v199
      %vm421 = vcmask 1044480
      %v422 = vrot.slane %v419, 3
      %v423 = vrot.slane %v420, 3
      %v424 = vsel %vm421, %v422, %v423
      %v433 = vunpack.c.l.b16 %v407
      %v434 = vunpack.c.l.b16 %v408
      %v435 = vunpack.c.l.b16 %v409
      %v436 = vunpack.c.l.b16 %v410
      %v437 = vunpack.c.l.b16 %v411
      %v438 = vunpack.c.l.b16 %v412
      %v439 = vunpack.c.l.b16 %v413
      %v440 = vunpack.c.l.b16 %v414
      %v441 = vpack.c.b16 %v434, %v433
      %v442 = vpack.c.b16 %v436, %v435
      %v443 = vpack.c.b16 %v438, %v437
      %v444 = vpack.c.b16 %v440, %v439
      %v450 = vsel %vm243, %v424, 0
      %v453 = vsel %vm243, %v423, 0
      %455 = vmatpush.bf16.msra.mxu0 0
      %456 = vmatpush.bf16.msra.mxu0 0
      %457 = vmatpush.bf16.msra.mxu0 0
      %458 = vmatpush.bf16.msra.mxu0 0
      %459 = vmatpush.bf16.msra.mxu0 %v444
      %460 = vmatpush.bf16.msra.mxu0 %v443
      %461 = vmatpush.bf16.msra.mxu0 %v442
      %462 = vmatpush.bf16.msra.mxu0 %v441
      %463 = vmatmul.bf16.gmra.mxu0 %v450
      %v464 = vpop.f32.mrf.mxu0
      %v465 = vadd.f32 0.0, %v464
      %v466 = vpop.f32.mrf.mxu0
      %v467 = vadd.f32 0.0, %v466
      %468 = vmatmul.bf16.gmra.mxu0 %v453
      %v469 = vpop.f32.mrf.mxu0
      %v470 = vadd.f32 0.0, %v469
      %v471 = vpop.f32.mrf.mxu0
      %v472 = vadd.f32 0.0, %v471
      %473 = vdwg.mxu0
      %v474 = vadd.f32 %v400, %v465
      %v475 = vadd.f32 %v401, %v467
      %v476 = vadd.f32 %v402, %v470
      %v477 = vadd.f32 %v403, %v472
      %v478 = vld [vmem:[%s2] sm:$0x1]
      %v480 = vperm.slane %v478, 0
      %v482 = vadd.f32 %v474, %v480
      %v483 = vadd.f32 %v475, %v480
      %v484 = vadd.f32 %v476, %v480
      %v485 = vadd.f32 %v477, %v480
      %vm486 = vcmp.gt.f32.partialorder %v482, 0.0
      %vm487 = vcmp.gt.f32.partialorder %v483, 0.0
      %vm488 = vcmp.gt.f32.partialorder %v484, 0.0
      %vm489 = vcmp.gt.f32.partialorder %v485, 0.0
      %v490 = vmul.f32 %v482, 0.2
      %v491 = vmul.f32 %v483, 0.2
      %v492 = vmul.f32 %v484, 0.2
      %v493 = vmul.f32 %v485, 0.2
      %v494 = vsel %vm486, %v482, %v490
      %v495 = vsel %vm487, %v483, %v491
      %v496 = vsel %vm488, %v484, %v492
      %v497 = vsel %vm489, %v485, %v493
      %v498 = vpack.c.bf16 %v494, %v494
      %v499 = vpack.c.bf16 %v495, %v495
      %v500 = vpack.c.bf16 %v496, %v496
      %v501 = vpack.c.bf16 %v497, %v497
      %vm502 = vcmask 257024
      %503 = vst.msk [vmem:[%s170] sm:$0xf] %vm502, %v498
      %504 = vst.msk [vmem:[%s170 + $0x4] sm:$0xf] %vm502, %v499
      %505 = vst.msk [vmem:[%s170 + $0x8] sm:$0xf] %vm502, %v500
      %vm506 = vcmask 253952
      %vm507 = vsmask.f32 256
      %vm508 = vmand %vm506, %vm507
      %v509 = vld [vmem:[%s170 + $0xc] sm:$0x1]
      %v510 = vsel %vm508, %v501, %v509
      %511 = vst [vmem:[%s170 + $0xc] sm:$0x1] %v510
      %p512 = scmp.lt.s32.totalorder %s14, 1
      %s513 = scalar_select %p512, %s14, 1
      %s514 = smul.addr %s513, 4
      %s515 = smul.addr %s514, 4
      %s516 = scalar_lea.vmem %s3, %s515
      // Predicated region
      $region33: #{ifblock_forward.4} parent=31 // pred_check
        %p517 = pneg %p100
      $region34: #{ifblock_forward.4} parent=31 // pred_check_branch
        %519 = sbr.rel (%p517) target = $region36
      $region35: #{ifblock_forward.4} parent=31 // pred_region
        _
      $region36: #{ifblock_forward.4} parent=31 // pred_fallthru
        _
    $region32: #{ifblock_forward.4} parent=5 // pred_fallthru
      _
    %p520 = scmp.le.s32.totalorder 2, %s9
    // Predicated region
    $region37: #{ifblock_forward.4} parent=5 // pred_check
      %p521 = pneg %p520
    $region38: #{ifblock_forward.4} parent=5 // pred_check_branch
      %523 = sbr.rel (%p521) target = $region40
    $region39: #{ifblock_forward.4} parent=5 // pred_region
      %s524 = ssub.s32 %s9, 2
      // Predicated region
      $region41: #{ifblock_forward.4} parent=39 // pred_check
        %p525 = pneg %p106
      $region42: #{ifblock_forward.4} parent=39 // pred_check_branch
        %527 = sbr.rel (%p525) target = $region44
      $region43: #{ifblock_forward.4} parent=39 // pred_region
        %p528 = scmp.lt.s32.totalorder %s15, 1
        %s529 = scalar_select %p528, %s15, 1
        %s530 = smul.addr %s529, 4
        %s531 = smul.addr %s530, 4
        %s532 = scalar_lea.vmem %s3, %s531
      $region44: #{ifblock_forward.4} parent=39 // pred_fallthru
        _
    $region40: #{ifblock_forward.4} parent=5 // pred_fallthru
      _
  $region6: #{ifblock_forward.4} parent=0 // loop_footer
    %s13 = sadd.s32 1, %s9
  $region7: #{ifblock_forward.4} parent=0 // loop_footer_branch
    %8 = sbr.rel target = $region3
  $region8: #{ifblock_forward.4} parent=0 // loop_exit
    _

// kernel: ifblock_forward.5
$region0: #{ifblock_forward.5}
  #allocation0 [shape = 'u32[]', space=smem, size = 0x4, offset = 0x4, fixed_abs, tag = 'smem constant byte address 0x4 - core index']
  #allocation1 [shape = 'u32[72,128]{1,0:T(1,128)}', space=vmem, size = 0x9000, scoped, tag = 'internal scratch']
  #allocation2 [shape = 'bf16[50,32]{1,0:T(8,128)(2,1)}', space=vmem, size = 0x3800, scoped, tag = 'scratch operand']
  %s0 = inlined_call_operand.vmem [shape: bf16[2,36,32], index: 0, kind: input, shape index: {}]
  %s1 = inlined_call_operand.vmem [shape: bf16[72,32,32], index: 1, kind: input, shape index: {}]
  %s2 = inlined_call_operand.vmem [shape: f32[8,1,32], index: 2, kind: input, shape index: {}]
  %s3 = inlined_call_operand.vmem [shape: f32[8,1,32], index: 3, kind: input, shape index: {}]
  %s4 = inlined_call_operand.vmem [shape: bf16[9,32,256], index: 4, kind: input, shape index: {}]
  %s5 = inlined_call_operand.vmem [shape: f32[1,256], index: 5, kind: input, shape index: {}]
  %s6 = inlined_call_operand.vmem [shape: f32[36,1], index: 6, kind: input, shape index: {}]
  %s7 = inlined_call_operand.vmem [shape: bf16[2,36,256], index: 7, kind: output, shape index: {}]
  %s8 = sld [smem:[#allocation0]]
  $region68: #{ifblock_forward.5} parent=0
    _
  %s10 = ssub.s32 1, %s8
  %s11 = scalar_select 0, %s10, %s8
  loop: start=0, step=1, limit=4
  $region2: #{ifblock_forward.5} parent=0 // loop_pre_header
    _
  $region3: #{ifblock_forward.5} parent=0 // loop_header
    %s13 = sphi 0, %s17
    %p14 = scmp.ge.s32.totalorder %s13, 4
    %s23 = sphi 0, %s25
    %s26 = sphi 0, %s23
    %s27 = sphi 0, %s26
    %s43 = sphi 0, %s27
    %s47 = sphi 0, %s47
    %s49 = sphi 0, %s47
    %s50 = sphi 0, %s49
    %s64 = sphi 0, %s50
    %s68 = sphi 0, %s68
    %s70 = sphi 0, %s68
    %s71 = sphi 0, %s70
    %s85 = sphi 0, %s71
    %s89 = sphi 0, %s89
    %s91 = sphi 0, %s89
    %s92 = sphi 0, %s91
    %s106 = sphi 0, %s92
    %s110 = sphi 0, %s110
    %s112 = sphi 0, %s110
    %s113 = sphi 0, %s112
    %s127 = sphi 0, %s113
    %s131 = sphi 0, %s131
    %s133 = sphi 0, %s131
    %s134 = sphi 0, %s133
    %s148 = sphi 0, %s134
    %s152 = sphi 0, %s152
    %s154 = sphi 0, %s152
    %s155 = sphi 0, %s154
    %s169 = sphi 0, %s155
    %s175 = sphi 0, %s177
    %s178 = sphi 0, %s175
    %s179 = sphi 0, %s178
    %s195 = sphi 0, %s179
  $region4: #{ifblock_forward.5} parent=0 // loop_header_branch
    %16 = sbr.rel (%p14) target = $region8
  $region5: #{ifblock_forward.5} parent=0 // loop_body
    %s18 = ssub.s32 %s13, 1
    %s19 = ssub.s32 %s13, 2
    %s20 = sadd.s32 %s13, 1
    %s21 = ssub.s32 %s13, %s20
    %p22 = scmp.eq.s32.totalorder %s21, 0
    %s24 = sadd.s32 %s23, 1
    %s25 = scalar_select %p22, %s23, %s24
    %p28 = pneg %p22
    %p29 = scmp.eq.s32.totalorder %s13, 1
    %p30 = por %p28, %p29
    %p31 = scmp.ne.s32.totalorder %s23, %s26
    %p32 = scmp.eq.s32.totalorder %s13, 0
    %p33 = por %p31, %p32
    %p34 = scmp.ne.s32.totalorder %s23, %s26
    %p35 = scmp.eq.s32.totalorder %s18, 1
    %p36 = por %p34, %p35
    %p37 = scmp.ne.s32.totalorder %s26, %s27
    %p38 = scmp.eq.s32.totalorder %s18, 0
    %p39 = por %p37, %p38
    %p40 = scmp.ne.s32.totalorder %s26, %s27
    %p41 = scmp.eq.s32.totalorder %s19, 1
    %p42 = por %p40, %p41
    %p44 = scmp.ne.s32.totalorder %s27, %s43
    %p45 = scmp.eq.s32.totalorder %s19, 0
    %p46 = por %p44, %p45
    %s48 = sadd.s32 %s47, 1
    %p51 = scmp.eq.s32.totalorder %s13, 1
    %p52 = scmp.ne.s32.totalorder %s47, %s49
    %p53 = scmp.eq.s32.totalorder %s13, 0
    %p54 = por %p52, %p53
    %p55 = scmp.ne.s32.totalorder %s47, %s49
    %p56 = scmp.eq.s32.totalorder %s18, 1
    %p57 = por %p55, %p56
    %p58 = scmp.ne.s32.totalorder %s49, %s50
    %p59 = scmp.eq.s32.totalorder %s18, 0
    %p60 = por %p58, %p59
    %p61 = scmp.ne.s32.totalorder %s49, %s50
    %p62 = scmp.eq.s32.totalorder %s19, 1
    %p63 = por %p61, %p62
    %p65 = scmp.ne.s32.totalorder %s50, %s64
    %p66 = scmp.eq.s32.totalorder %s19, 0
    %p67 = por %p65, %p66
    %s69 = sadd.s32 %s68, 1
    %p72 = scmp.eq.s32.totalorder %s13, 1
    %p73 = scmp.ne.s32.totalorder %s68, %s70
    %p74 = scmp.eq.s32.totalorder %s13, 0
    %p75 = por %p73, %p74
    %p76 = scmp.ne.s32.totalorder %s68, %s70
    %p77 = scmp.eq.s32.totalorder %s18, 1
    %p78 = por %p76, %p77
    %p79 = scmp.ne.s32.totalorder %s70, %s71
    %p80 = scmp.eq.s32.totalorder %s18, 0
    %p81 = por %p79, %p80
    %p82 = scmp.ne.s32.totalorder %s70, %s71
    %p83 = scmp.eq.s32.totalorder %s19, 1
    %p84 = por %p82, %p83
    %p86 = scmp.ne.s32.totalorder %s71, %s85
    %p87 = scmp.eq.s32.totalorder %s19, 0
    %p88 = por %p86, %p87
    %s90 = sadd.s32 %s89, 1
    %p93 = scmp.eq.s32.totalorder %s13, 1
    %p94 = scmp.ne.s32.totalorder %s89, %s91
    %p95 = scmp.eq.s32.totalorder %s13, 0
    %p96 = por %p94, %p95
    %p97 = scmp.ne.s32.totalorder %s89, %s91
    %p98 = scmp.eq.s32.totalorder %s18, 1
    %p99 = por %p97, %p98
    %p100 = scmp.ne.s32.totalorder %s91, %s92
    %p101 = scmp.eq.s32.totalorder %s18, 0
    %p102 = por %p100, %p101
    %p103 = scmp.ne.s32.totalorder %s91, %s92
    %p104 = scmp.eq.s32.totalorder %s19, 1
    %p105 = por %p103, %p104
    %p107 = scmp.ne.s32.totalorder %s92, %s106
    %p108 = scmp.eq.s32.totalorder %s19, 0
    %p109 = por %p107, %p108
    %s111 = sadd.s32 %s110, 1
    %p114 = scmp.eq.s32.totalorder %s13, 1
    %p115 = scmp.ne.s32.totalorder %s110, %s112
    %p116 = scmp.eq.s32.totalorder %s13, 0
    %p117 = por %p115, %p116
    %p118 = scmp.ne.s32.totalorder %s110, %s112
    %p119 = scmp.eq.s32.totalorder %s18, 1
    %p120 = por %p118, %p119
    %p121 = scmp.ne.s32.totalorder %s112, %s113
    %p122 = scmp.eq.s32.totalorder %s18, 0
    %p123 = por %p121, %p122
    %p124 = scmp.ne.s32.totalorder %s112, %s113
    %p125 = scmp.eq.s32.totalorder %s19, 1
    %p126 = por %p124, %p125
    %p128 = scmp.ne.s32.totalorder %s113, %s127
    %p129 = scmp.eq.s32.totalorder %s19, 0
    %p130 = por %p128, %p129
    %s132 = sadd.s32 %s131, 1
    %p135 = scmp.eq.s32.totalorder %s13, 1
    %p136 = scmp.ne.s32.totalorder %s131, %s133
    %p137 = scmp.eq.s32.totalorder %s13, 0
    %p138 = por %p136, %p137
    %p139 = scmp.ne.s32.totalorder %s131, %s133
    %p140 = scmp.eq.s32.totalorder %s18, 1
    %p141 = por %p139, %p140
    %p142 = scmp.ne.s32.totalorder %s133, %s134
    %p143 = scmp.eq.s32.totalorder %s18, 0
    %p144 = por %p142, %p143
    %p145 = scmp.ne.s32.totalorder %s133, %s134
    %p146 = scmp.eq.s32.totalorder %s19, 1
    %p147 = por %p145, %p146
    %p149 = scmp.ne.s32.totalorder %s134, %s148
    %p150 = scmp.eq.s32.totalorder %s19, 0
    %p151 = por %p149, %p150
    %s153 = sadd.s32 %s152, 1
    %p156 = scmp.eq.s32.totalorder %s13, 1
    %p157 = scmp.ne.s32.totalorder %s152, %s154
    %p158 = scmp.eq.s32.totalorder %s13, 0
    %p159 = por %p157, %p158
    %p160 = scmp.ne.s32.totalorder %s152, %s154
    %p161 = scmp.eq.s32.totalorder %s18, 1
    %p162 = por %p160, %p161
    %p163 = scmp.ne.s32.totalorder %s154, %s155
    %p164 = scmp.eq.s32.totalorder %s18, 0
    %p165 = por %p163, %p164
    %p166 = scmp.ne.s32.totalorder %s154, %s155
    %p167 = scmp.eq.s32.totalorder %s19, 1
    %p168 = por %p166, %p167
    %p170 = scmp.ne.s32.totalorder %s155, %s169
    %p171 = scmp.eq.s32.totalorder %s19, 0
    %p172 = por %p170, %p171
    %s173 = ssub.s32 %s13, %s20
    %p174 = scmp.eq.s32.totalorder %s173, 0
    %s176 = sadd.s32 %s175, 1
    %s177 = scalar_select %p174, %s175, %s176
    %p180 = pneg %p174
    %p181 = scmp.eq.s32.totalorder %s13, 1
    %p182 = por %p180, %p181
    %p183 = scmp.ne.s32.totalorder %s175, %s178
    %p184 = scmp.eq.s32.totalorder %s13, 0
    %p185 = por %p183, %p184
    %p186 = scmp.ne.s32.totalorder %s175, %s178
    %p187 = scmp.eq.s32.totalorder %s18, 1
    %p188 = por %p186, %p187
    %p189 = scmp.ne.s32.totalorder %s178, %s179
    %p190 = scmp.eq.s32.totalorder %s18, 0
    %p191 = por %p189, %p190
    %p192 = scmp.ne.s32.totalorder %s178, %s179
    %p193 = scmp.eq.s32.totalorder %s19, 1
    %p194 = por %p192, %p193
    %p196 = scmp.ne.s32.totalorder %s179, %s195
    %p197 = scmp.eq.s32.totalorder %s19, 0
    %p198 = por %p196, %p197
    %p199 = scmp.le.s32.totalorder 1, %s13
    %p200 = scmp.lt.s32.totalorder %s13, 3
    %p201 = pnand %p199, %p200
    %p202 = pneg %p201
    // Predicated region
    $region9: #{ifblock_forward.5} parent=5 // pred_check
      _
    $region10: #{ifblock_forward.5} parent=5 // pred_check_branch
      %204 = sbr.rel (%p201) target = $region12
    $region11: #{ifblock_forward.5} parent=5 // pred_region
      %s205 = ssub.s32 %s13, 1
      // Predicated region
      $region13: #{ifblock_forward.5} parent=11 // pred_check
        %p206 = pneg %p60
      $region14: #{ifblock_forward.5} parent=11 // pred_check_branch
        %208 = sbr.rel (%p206) target = $region16
      $region15: #{ifblock_forward.5} parent=11 // pred_region
        _
      $region16: #{ifblock_forward.5} parent=11 // pred_fallthru
        _
      // Predicated region
      $region17: #{ifblock_forward.5} parent=11 // pred_check
        %p209 = pneg %p81
      $region18: #{ifblock_forward.5} parent=11 // pred_check_branch
        %211 = sbr.rel (%p209) target = $region20
      $region19: #{ifblock_forward.5} parent=11 // pred_region
        _
      $region20: #{ifblock_forward.5} parent=11 // pred_fallthru
        _
      // Predicated region
      $region21: #{ifblock_forward.5} parent=11 // pred_check
        %p212 = pneg %p102
      $region22: #{ifblock_forward.5} parent=11 // pred_check_branch
        %214 = sbr.rel (%p212) target = $region24
      $region23: #{ifblock_forward.5} parent=11 // pred_region
        _
      $region24: #{ifblock_forward.5} parent=11 // pred_fallthru
        _
      // Predicated region
      $region25: #{ifblock_forward.5} parent=11 // pred_check
        %p215 = pneg %p123
      $region26: #{ifblock_forward.5} parent=11 // pred_check_branch
        %217 = sbr.rel (%p215) target = $region28
      $region27: #{ifblock_forward.5} parent=11 // pred_region
        _
      $region28: #{ifblock_forward.5} parent=11 // pred_fallthru
        _
      // Predicated region
      $region29: #{ifblock_forward.5} parent=11 // pred_check
        %p218 = pneg %p144
      $region30: #{ifblock_forward.5} parent=11 // pred_check_branch
        %220 = sbr.rel (%p218) target = $region32
      $region31: #{ifblock_forward.5} parent=11 // pred_region
        _
      $region32: #{ifblock_forward.5} parent=11 // pred_fallthru
        _
      // Predicated region
      $region33: #{ifblock_forward.5} parent=11 // pred_check
        %p221 = pneg %p165
      $region34: #{ifblock_forward.5} parent=11 // pred_check_branch
        %223 = sbr.rel (%p221) target = $region36
      $region35: #{ifblock_forward.5} parent=11 // pred_region
        _
      $region36: #{ifblock_forward.5} parent=11 // pred_fallthru
        _
    $region12: #{ifblock_forward.5} parent=5 // pred_fallthru
      _
    %p224 = scmp.lt.s32.totalorder %s13, 2
    // Predicated region
    $region37: #{ifblock_forward.5} parent=5 // pred_check
      %p225 = pneg %p224
    $region38: #{ifblock_forward.5} parent=5 // pred_check_branch
      %227 = sbr.rel (%p225) target = $region40
    $region39: #{ifblock_forward.5} parent=5 // pred_region
      // Predicated region
      $region41: #{ifblock_forward.5} parent=39 // pred_check
        %p228 = pneg %p33
      $region42: #{ifblock_forward.5} parent=39 // pred_check_branch
        %230 = sbr.rel (%p228) target = $region44
      $region43: #{ifblock_forward.5} parent=39 // pred_region
        %p231 = scmp.lt.s32.totalorder %s13, 1
        %s232 = scalar_select %p231, %s13, 1
        %s233 = smul.addr %s232, 5
        %s234 = smul.addr %s233, 4
        %s235 = scalar_lea.vmem %s0, %s234
      $region44: #{ifblock_forward.5} parent=39 // pred_fallthru
        _
    $region40: #{ifblock_forward.5} parent=5 // pred_fallthru
      _
    %p236 = scmp.le.s32.totalorder 1, %s13
    %p237 = scmp.lt.s32.totalorder %s13, 3
    %p238 = pnand %p236, %p237
    %p239 = pneg %p238
    // Predicated region
    $region45: #{ifblock_forward.5} parent=5 // pred_check
      _
    $region46: #{ifblock_forward.5} parent=5 // pred_check_branch
      %241 = sbr.rel (%p238) target = $region48
    $region47: #{ifblock_forward.5} parent=5 // pred_region
      %s242 = ssub.s32 %s13, 1
      %p243 = scmp.lt.s32.totalorder %s18, 1
      %s244 = scalar_select %p243, %s18, 1
      %s245 = smul.addr %s244, 5
      %s246 = smul.addr %s245, 4
      %s247 = scalar_lea.vmem %s0, %s246
      %p248 = pneg %p39
      %p249 = pneg %p36
      %p250 = pneg %p60
      %p251 = pneg %p57
      %p252 = pneg %p81
      %p253 = pneg %p78
      %p254 = pneg %p102
      %p255 = pneg %p99
      %p256 = pneg %p123
      %p257 = pneg %p120
      %p258 = pneg %p144
      %p259 = pneg %p141
      %p260 = pneg %p165
      %p261 = pneg %p162
      %p262 = pneg %p191
      %p263 = pneg %p188
      %p264 = scmp.lt.s32.totalorder %s18, 1
      %s265 = scalar_select %p264, %s18, 1
      %s266 = smul.addr %s265, 10
      %s267 = smul.addr %s266, 4
      %s268 = scalar_lea.vmem %s7, %s267
      %p269 = scmp.lt.s32.totalorder %s18, 1
      %s270 = scalar_select %p269, %s18, 1
      %s271 = smul.addr %s270, 5
      %s272 = smul.addr %s271, 4
      %s273 = scalar_lea.vmem %s0, %s272
      %p274 = scmp.lt.s32.totalorder %s18, 1
      %s275 = scalar_select %p274, %s18, 1
      %s276 = smul.addr %s275, 10
      %s277 = smul.addr %s276, 4
      %s278 = scalar_lea.vmem %s7, %s277
      %vm280 = vcmask 257024
      %vm281 = vsmask.f32 3328
      %vm282 = vmand %vm280, %vm281
      %v283 = vld [vmem:[#allocation2] sm:$0xf]
      %v284 = vsel %vm282, 0, %v283
      %285 = vst [vmem:[#allocation2] sm:$0xf] %v284
      %vm286 = vcmask 257025
      %vm287 = vsmask.f32 7942
      %vm288 = vmand %vm286, %vm287
      %v289 = vld [vmem:[#allocation2 + $0x14] sm:$0xe]
      %v290 = vsel %vm288, 0, %v289
      %291 = vst [vmem:[#allocation2 + $0x14] sm:$0xe] %v290
      %vm292 = vcmask 253952
      %293 = vst.msk [vmem:[#allocation2 + $0x18] sm:$0x1] %vm292, 0
      %v294 = vld [vmem:[%s273] sm:$0xf]
      %v295 = vld [vmem:[%s273 + $0x4] sm:$0xf]
      %v296 = vld [vmem:[%s273 + $0x8] sm:$0xf]
      %v297 = vld [vmem:[%s273 + $0xc] sm:$0xf]
      %v298 = vld [vmem:[%s273 + $0x10] sm:$0x3]
      %vm299 = vsmask.f32 7440
      %vm300 = vmor %vm281, %vm299
      %v302 = vshll.u32 %v294, 16
      %v304 = vrot.slane %v302, 5
      %v305 = vshrl.u32 %v294, 16
      %v307 = vrot.slane %v305, 4
      %v308 = vor.u32 %v307, %v304
      %v309 = vrot.slane %v308, 4
      %v311 = vshll.u32 %v295, 16
      %v313 = vrot.slane %v311, 5
      %v314 = vsel %vm300, %v309, %v313
      %v315 = vshrl.u32 %v295, 16
      %v317 = vrot.slane %v315, 4
      %v318 = vor.u32 %v317, %v313
      %v319 = vrot.slane %v318, 4
      %v321 = vshll.u32 %v296, 16
      %v323 = vrot.slane %v321, 5
      %v324 = vsel %vm300, %v319, %v323
      %v325 = vshrl.u32 %v296, 16
      %v327 = vrot.slane %v325, 4
      %v328 = vor.u32 %v327, %v323
      %v329 = vrot.slane %v328, 4
      %v331 = vshll.u32 %v297, 16
      %v333 = vrot.slane %v331, 5
      %v334 = vsel %vm300, %v329, %v333
      %v335 = vshrl.u32 %v297, 16
      %v337 = vrot.slane %v335, 4
      %v338 = vor.u32 %v337, %v333
      %v339 = vrot.slane %v338, 4
      %v341 = vshll.u32 %v298, 16
      %v343 = vrot.slane %v341, 5
      %v344 = vsel %vm300, %v339, %v343
      %v345 = vshrl.u32 %v298, 16
      %v347 = vrot.slane %v345, 4
      %v348 = vor.u32 %v347, %v343
      %v349 = vrot.slane %v348, 4
      %vm356 = vcmask 257027
      %vm357 = vsmask.f32 7950
      %vm358 = vmand %vm356, %vm357
      %v359 = vld [vmem:[#allocation2] sm:$0x8]
      %v360 = vsel %vm358, %v304, %v359
      %361 = vst [vmem:[#allocation2] sm:$0x8] %v360
      %vm362 = vcmask 257024
      %363 = vst.msk [vmem:[#allocation2 + $0x4] sm:$0xf] %vm362, %v314
      %364 = vst.msk [vmem:[#allocation2 + $0x8] sm:$0xf] %vm362, %v324
      %365 = vst.msk [vmem:[#allocation2 + $0xc] sm:$0xf] %vm362, %v334
      %366 = vst.msk [vmem:[#allocation2 + $0x10] sm:$0xf] %vm362, %v344
      %vm367 = vcmask 254976
      %vm368 = vsmask.f32 1280
      %vm369 = vmand %vm367, %vm368
      %v370 = vld [vmem:[#allocation2 + $0x14] sm:$0x3]
      %v371 = vsel %vm369, %v349, %v370
      %372 = vst [vmem:[#allocation2 + $0x14] sm:$0x3] %v371
      %v373 = vld [vmem:[%s6] sm:$0xff]
      %v374 = vld [vmem:[%s6 + $0x8] sm:$0xff]
      %v375 = vld [vmem:[%s6 + $0x10] sm:$0xff]
      %v376 = vld [vmem:[%s6 + $0x18] sm:$0xff]
      %v377 = vld [vmem:[%s6 + $0x20] sm:$0xf]
      loop: start=0, step=1, limit=8
      $region49: #{ifblock_forward.5} parent=47 // loop_pre_header
        _
      $region50: #{ifblock_forward.5} parent=47 // loop_header
        %s379 = sphi 0, %s383
        %p380 = scmp.ge.s32.totalorder %s379, 8
      $region51: #{ifblock_forward.5} parent=47 // loop_header_branch
        %382 = sbr.rel (%p380) target = $region55
      $region52: #{ifblock_forward.5} parent=47 // loop_body
        %v384 = vld [vmem:[#allocation2] sm:$0x8]
        %v385 = vld [vmem:[#allocation2 + $0x4] sm:$0xf]
        %v386 = vld [vmem:[#allocation2 + $0x8] sm:$0xf]
        %v387 = vld [vmem:[#allocation2 + $0xc] sm:$0xf]
        %v388 = vld [vmem:[#allocation2 + $0x10] sm:$0xf]
        %v389 = vld [vmem:[#allocation2 + $0x14] sm:$0x3]
        %v390 = vunpack.c.l.bf16 %v384
        %v391 = vunpack.c.l.bf16 %v385
        %v392 = vunpack.c.l.bf16 %v386
        %v393 = vunpack.c.l.bf16 %v387
        %v394 = vunpack.c.l.bf16 %v388
        %v395 = vunpack.c.l.bf16 %v389
        %v396 = vld [vmem:[#allocation2] sm:$0xf]
        %v397 = vld [vmem:[#allocation2 + $0x10] sm:$0x3]
        %s398 = smul.u32 %s379, 9
        %s399 = smul.u32 %s398, 4
        %s400 = smul.addr %s399, 4
        %s401 = scalar_lea.vmem %s1, %s400
        %v402 = vld [vmem:[%s401] sm:$0xf]
        %v403 = vld [vmem:[%s401 + $0x4] sm:$0xf]
        %v404 = vld [vmem:[%s401 + $0x8] sm:$0xf]
        %v405 = vld [vmem:[%s401 + $0xc] sm:$0xf]
        %v406 = vld [vmem:[#allocation2 + $0x10] sm:$0x7]
        %s407 = sadd.s32 %s398, 1
        %s408 = smul.u32 %s407, 4
        %s409 = smul.addr %s408, 4
        %s410 = scalar_lea.vmem %s1, %s409
        %v411 = vld [vmem:[%s410] sm:$0xf]
        %v412 = vld [vmem:[%s410 + $0x4] sm:$0xf]
        %v413 = vld [vmem:[%s410 + $0x8] sm:$0xf]
        %v414 = vld [vmem:[%s410 + $0xc] sm:$0xf]
        %v420 = vunpack.c.l.b16 %v396
        %v421 = vunpack.c.l.b16 %v385
        %v422 = vunpack.c.l.b16 %v386
        %v423 = vunpack.c.l.b16 %v387
        %v424 = vunpack.c.l.b16 %v406
        %v425 = vpack.c.b16 %v421, %v420
        %v426 = vpack.c.b16 %v423, %v422
        %v427 = vpack.c.b16 %v424, %v424
        %vm428 = vsmask.f32 7424
        %v430 = vshrl.u32 %v425, 16
        %v432 = vshll.u32 %v425, 16
        %v434 = vrot.slane %v432, 1
        %v435 = vor.u32 %v430, %v434
        %v437 = vshll.u32 %v426, 16
        %v439 = vrot.slane %v437, 1
        %v440 = vsel %vm428, %v435, %v439
        %v441 = vshrl.u32 %v426, 16
        %v443 = vor.u32 %v441, %v439
        %v445 = vshll.u32 %v427, 16
        %v447 = vrot.slane %v445, 1
        %v448 = vsel %vm428, %v443, %v447
        %v449 = vshrl.u32 %v427, 16
        %v451 = vor.u32 %v449, %v447
        %v456 = vunpack.c.l.b16 %v411
        %v457 = vunpack.c.l.b16 %v412
        %v458 = vunpack.c.l.b16 %v413
        %v459 = vunpack.c.l.b16 %v414
        %v460 = vpack.c.b16 %v457, %v456
        %v461 = vpack.c.b16 %v459, %v458
        %vm464 = vcmask 261120
        %v466 = vsel %vm464, %v440, 0
        %v469 = vsel %vm464, %v448, 0
        %v472 = vsel %vm464, %v451, 0
        %474 = vmatpush.bf16.msra.mxu0 0
        %475 = vmatpush.bf16.msra.mxu0 0
        %476 = vmatpush.bf16.msra.mxu0 0
        %477 = vmatpush.bf16.msra.mxu0 0
        %478 = vmatpush.bf16.msra.mxu0 0
        %479 = vmatpush.bf16.msra.mxu0 0
        %480 = vmatpush.bf16.msra.mxu0 %v461
        %481 = vmatpush.bf16.msra.mxu0 %v460
        %482 = vmatmul.bf16.gmra.mxu0 %v466
        %v483 = vpop.f32.mrf.mxu0
        %v484 = vadd.f32 0.0, %v483
        %v485 = vpop.f32.mrf.mxu0
        %v486 = vadd.f32 0.0, %v485
        %487 = vmatmul.bf16.gmra.mxu0 %v469
        %v488 = vpop.f32.mrf.mxu0
        %v489 = vadd.f32 0.0, %v488
        %v490 = vpop.f32.mrf.mxu0
        %v491 = vadd.f32 0.0, %v490
        %492 = vmatmul.bf16.gmra.mxu0 %v472
        %v493 = vpop.f32.mrf.mxu0
        %v494 = vadd.f32 0.0, %v493
        %v495 = vpop.f32.mrf.mxu0
        %496 = vdwg.mxu0
        %v498 = vunpack.c.l.b16 %v397
        %v499 = vpack.c.b16 %v498, %v498
        %v504 = vunpack.c.l.b16 %v402
        %v505 = vunpack.c.l.b16 %v403
        %v506 = vunpack.c.l.b16 %v404
        %v507 = vunpack.c.l.b16 %v405
        %v508 = vpack.c.b16 %v505, %v504
        %v509 = vpack.c.b16 %v507, %v506
        %v512 = vsel %vm464, %v425, 0
        %v514 = vsel %vm464, %v426, 0
        %v517 = vsel %vm464, %v499, 0
        %519 = vmatpush.bf16.msra.mxu0 0
        %520 = vmatpush.bf16.msra.mxu0 0
        %521 = vmatpush.bf16.msra.mxu0 0
        %522 = vmatpush.bf16.msra.mxu0 0
        %523 = vmatpush.bf16.msra.mxu0 0
        %524 = vmatpush.bf16.msra.mxu0 0
        %525 = vmatpush.bf16.msra.mxu0 %v509
        %526 = vmatpush.bf16.msra.mxu0 %v508
        %527 = vmatmul.bf16.gmra.mxu0 %v512
        %v528 = vpop.f32.mrf.mxu0
        %v529 = vadd.f32 %v484, %v528
        %v530 = vpop.f32.mrf.mxu0
        %v531 = vadd.f32 %v486, %v530
        %532 = vmatmul.bf16.gmra.mxu0 %v514
        %v533 = vpop.f32.mrf.mxu0
        %v534 = vadd.f32 %v489, %v533
        %v535 = vpop.f32.mrf.mxu0
        %v536 = vadd.f32 %v491, %v535
        %537 = vmatmul.bf16.gmra.mxu0 %v517
        %v538 = vpop.f32.mrf.mxu0
        %v539 = vadd.f32 %v494, %v538
        %v540 = vpop.f32.mrf.mxu0
        %541 = vdwg.mxu0
        %v542 = vld [vmem:[#allocation2] sm:$0xe]
        %s543 = sadd.s32 %s398, 2
        %s544 = smul.u32 %s543, 4
        %s545 = smul.addr %s544, 4
        %s546 = scalar_lea.vmem %s1, %s545
        %v547 = vld [vmem:[%s546] sm:$0xf]
        %v548 = vld [vmem:[%s546 + $0x4] sm:$0xf]
        %v549 = vld [vmem:[%s546 + $0x8] sm:$0xf]
        %v550 = vld [vmem:[%s546 + $0xc] sm:$0xf]
        %v552 = vunpack.c.l.b16 %v542
        %v553 = vpack.c.b16 %v421, %v552
        %vm554 = vcmask 1046528
        %v555 = vrot.slane %v553, 1
        %v556 = vrot.slane %v426, 1
        %v557 = vsel %vm554, %v555, %v556
        %v558 = vrot.slane %v427, 1
        %v559 = vsel %vm554, %v556, %v558
        %v564 = vunpack.c.l.b16 %v547
        %v565 = vunpack.c.l.b16 %v548
        %v566 = vunpack.c.l.b16 %v549
        %v567 = vunpack.c.l.b16 %v550
        %v568 = vpack.c.b16 %v565, %v564
        %v569 = vpack.c.b16 %v567, %v566
        %v573 = vsel %vm464, %v557, 0
        %v576 = vsel %vm464, %v559, 0
        %v579 = vsel %vm464, %v558, 0
        %581 = vmatpush.bf16.msra.mxu0 0
        %582 = vmatpush.bf16.msra.mxu0 0
        %583 = vmatpush.bf16.msra.mxu0 0
        %584 = vmatpush.bf16.msra.mxu0 0
        %585 = vmatpush.bf16.msra.mxu0 0
        %586 = vmatpush.bf16.msra.mxu0 0
        %587 = vmatpush.bf16.msra.mxu0 %v569
        %588 = vmatpush.bf16.msra.mxu0 %v568
        %589 = vmatmul.bf16.gmra.mxu0 %v573
        %v590 = vpop.f32.mrf.mxu0
        %v591 = vadd.f32 0.0, %v590
        %v592 = vpop.f32.mrf.mxu0
        %v593 = vadd.f32 0.0, %v592
        %594 = vmatmul.bf16.gmra.mxu0 %v576
        %v595 = vpop.f32.mrf.mxu0
        %v596 = vadd.f32 0.0, %v595
        %v597 = vpop.f32.mrf.mxu0
        %v598 = vadd.f32 0.0, %v597
        %599 = vmatmul.bf16.gmra.mxu0 %v579
        %v600 = vpop.f32.mrf.mxu0
        %v601 = vadd.f32 0.0, %v600
        %v602 = vpop.f32.mrf.mxu0
        %603 = vdwg.mxu0
        %v604 = vadd.f32 %v529, %v591
        %v605 = vadd.f32 %v531, %v593
        %v606 = vadd.f32 %v534, %v596
        %v607 = vadd.f32 %v536, %v598
        %v608 = vadd.f32 %v539, %v601
        %v609 = vld [vmem:[#allocation2 + $0x14] sm:$0x1]
        %s610 = sadd.s32 %s398, 3
        %s611 = smul.u32 %s610, 4
        %s612 = smul.addr %s611, 4
        %s613 = scalar_lea.vmem %s1, %s612
        %v614 = vld [vmem:[%s613] sm:$0xf]
        %v615 = vld [vmem:[%s613 + $0x4] sm:$0xf]
        %v616 = vld [vmem:[%s613 + $0x8] sm:$0xf]
        %v617 = vld [vmem:[%s613 + $0xc] sm:$0xf]
        %v621 = vunpack.c.l.b16 %v384
        %v622 = vunpack.c.l.b16 %v388
        %v623 = vunpack.c.l.b16 %v609
        %v624 = vpack.c.b16 %v421, %v621
        %v625 = vpack.c.b16 %v623, %v622
        %vm626 = vcmask 1044480
        %v627 = vrot.slane %v624, 3
        %v628 = vrot.slane %v426, 3
        %v629 = vsel %vm626, %v627, %v628
        %v630 = vrot.slane %v625, 3
        %v631 = vsel %vm626, %v628, %v630
        %v636 = vunpack.c.l.b16 %v614
        %v637 = vunpack.c.l.b16 %v615
        %v638 = vunpack.c.l.b16 %v616
        %v639 = vunpack.c.l.b16 %v617
        %v640 = vpack.c.b16 %v637, %v636
        %v641 = vpack.c.b16 %v639, %v638
        %v645 = vsel %vm464, %v629, 0
        %v648 = vsel %vm464, %v631, 0
        %v651 = vsel %vm464, %v630, 0
        %653 = vmatpush.bf16.msra.mxu0 0
        %654 = vmatpush.bf16.msra.mxu0 0
        %655 = vmatpush.bf16.msra.mxu0 0
        %656 = vmatpush.bf16.msra.mxu0 0
        %657 = vmatpush.bf16.msra.mxu0 0
        %658 = vmatpush.bf16.msra.mxu0 0
        %659 = vmatpush.bf16.msra.mxu0 %v641
        %660 = vmatpush.bf16.msra.mxu0 %v640
        %661 = vmatmul.bf16.gmra.mxu0 %v645
        %v662 = vpop.f32.mrf.mxu0
        %v663 = vadd.f32 0.0, %v662
        %v664 = vpop.f32.mrf.mxu0
        %v665 = vadd.f32 0.0, %v664
        %666 = vmatmul.bf16.gmra.mxu0 %v648
        %v667 = vpop.f32.mrf.mxu0
        %v668 = vadd.f32 0.0, %v667
        %v669 = vpop.f32.mrf.mxu0
        %v670 = vadd.f32 0.0, %v669
        %671 = vmatmul.bf16.gmra.mxu0 %v651
        %v672 = vpop.f32.mrf.mxu0
        %v673 = vadd.f32 0.0, %v672
        %v674 = vpop.f32.mrf.mxu0
        %675 = vdwg.mxu0
        %v676 = vadd.f32 %v604, %v663
        %v677 = vadd.f32 %v605, %v665
        %v678 = vadd.f32 %v606, %v668
        %v679 = vadd.f32 %v607, %v670
        %v680 = vadd.f32 %v608, %v673
        %s681 = sadd.s32 %s398, 4
        %s682 = smul.u32 %s681, 4
        %s683 = smul.addr %s682, 4
        %s684 = scalar_lea.vmem %s1, %s683
        %v685 = vld [vmem:[%s684] sm:$0xf]
        %v686 = vld [vmem:[%s684 + $0x4] sm:$0xf]
        %v687 = vld [vmem:[%s684 + $0x8] sm:$0xf]
        %v688 = vld [vmem:[%s684 + $0xc] sm:$0xf]
        %v690 = vunpack.c.l.b16 %v389
        %v691 = vpack.c.b16 %v690, %v622
        %vm692 = vsmask.f32 4352
        %v694 = vshrl.u32 %v624, 16
        %v696 = vrot.slane %v694, 3
        %v697 = vshll.u32 %v624, 16
        %v699 = vrot.slane %v697, 4
        %v700 = vor.u32 %v696, %v699
        %v701 = vrot.slane %v441, 3
        %v702 = vrot.slane %v437, 4
        %v703 = vor.u32 %v701, %v702
        %v704 = vsel %vm692, %v700, %v703
        %v706 = vshrl.u32 %v691, 16
        %v708 = vrot.slane %v706, 3
        %v709 = vshll.u32 %v691, 16
        %v711 = vrot.slane %v709, 4
        %v712 = vor.u32 %v708, %v711
        %v713 = vsel %vm692, %v703, %v712
        %v718 = vunpack.c.l.b16 %v685
        %v719 = vunpack.c.l.b16 %v686
        %v720 = vunpack.c.l.b16 %v687
        %v721 = vunpack.c.l.b16 %v688
        %v722 = vpack.c.b16 %v719, %v718
        %v723 = vpack.c.b16 %v721, %v720
        %v727 = vsel %vm464, %v704, 0
        %v730 = vsel %vm464, %v713, 0
        %v733 = vsel %vm464, %v712, 0
        %735 = vmatpush.bf16.msra.mxu0 0
        %736 = vmatpush.bf16.msra.mxu0 0
        %737 = vmatpush.bf16.msra.mxu0 0
        %738 = vmatpush.bf16.msra.mxu0 0
        %739 = vmatpush.bf16.msra.mxu0 0
        %740 = vmatpush.bf16.msra.mxu0 0
        %741 = vmatpush.bf16.msra.mxu0 %v723
        %742 = vmatpush.bf16.msra.mxu0 %v722
        %743 = vmatmul.bf16.gmra.mxu0 %v727
        %v744 = vpop.f32.mrf.mxu0
        %v745 = vadd.f32 0.0, %v744
        %v746 = vpop.f32.mrf.mxu0
        %v747 = vadd.f32 0.0, %v746
        %748 = vmatmul.bf16.gmra.mxu0 %v730
        %v749 = vpop.f32.mrf.mxu0
        %v750 = vadd.f32 0.0, %v749
        %v751 = vpop.f32.mrf.mxu0
        %v752 = vadd.f32 0.0, %v751
        %753 = vmatmul.bf16.gmra.mxu0 %v733
        %v754 = vpop.f32.mrf.mxu0
        %v755 = vadd.f32 0.0, %v754
        %v756 = vpop.f32.mrf.mxu0
        %757 = vdwg.mxu0
        %v758 = vadd.f32 %v676, %v745
        %v759 = vadd.f32 %v677, %v747
        %v760 = vadd.f32 %v678, %v750
        %v761 = vadd.f32 %v679, %v752
        %v762 = vadd.f32 %v680, %v755
        %s763 = sadd.s32 %s398, 5
        %s764 = smul.u32 %s763, 4
        %s765 = smul.addr %s764, 4
        %s766 = scalar_lea.vmem %s1, %s765
        %v767 = vld [vmem:[%s766] sm:$0xf]
        %v768 = vld [vmem:[%s766 + $0x4] sm:$0xf]
        %v769 = vld [vmem:[%s766 + $0x8] sm:$0xf]
        %v770 = vld [vmem:[%s766 + $0xc] sm:$0xf]
        %v771 = vpack.c.b16 %v422, %v421
        %v772 = vpack.c.b16 %v622, %v423
        %v773 = vpack.c.b16 %v690, %v690
        %v778 = vunpack.c.l.b16 %v767
        %v779 = vunpack.c.l.b16 %v768
        %v780 = vunpack.c.l.b16 %v769
        %v781 = vunpack.c.l.b16 %v770
        %v782 = vpack.c.b16 %v779, %v778
        %v783 = vpack.c.b16 %v781, %v780
        %v787 = vsel %vm464, %v771, 0
        %v790 = vsel %vm464, %v772, 0
        %v793 = vsel %vm464, %v773, 0
        %795 = vmatpush.bf16.msra.mxu0 0
        %796 = vmatpush.bf16.msra.mxu0 0
        %797 = vmatpush.bf16.msra.mxu0 0
        %798 = vmatpush.bf16.msra.mxu0 0
        %799 = vmatpush.bf16.msra.mxu0 0
        %800 = vmatpush.bf16.msra.mxu0 0
        %801 = vmatpush.bf16.msra.mxu0 %v783
        %802 = vmatpush.bf16.msra.mxu0 %v782
        %803 = vmatmul.bf16.gmra.mxu0 %v787
        %v804 = vpop.f32.mrf.mxu0
        %v805 = vadd.f32 0.0, %v804
        %v806 = vpop.f32.mrf.mxu0
        %v807 = vadd.f32 0.0, %v806
        %808 = vmatmul.bf16.gmra.mxu0 %v790
        %v809 = vpop.f32.mrf.mxu0
        %v810 = vadd.f32 0.0, %v809
        %v811 = vpop.f32.mrf.mxu0
        %v812 = vadd.f32 0.0, %v811
        %813 = vmatmul.bf16.gmra.mxu0 %v793
        %v814 = vpop.f32.mrf.mxu0
        %v815 = vadd.f32 0.0, %v814
        %v816 = vpop.f32.mrf.mxu0
        %817 = vdwg.mxu0
        %v818 = vadd.f32 %v758, %v805
        %v819 = vadd.f32 %v759, %v807
        %v820 = vadd.f32 %v760, %v810
        %v821 = vadd.f32 %v761, %v812
        %v822 = vadd.f32 %v762, %v815
        %v823 = vld [vmem:[#allocation2 + $0x4] sm:$0xc]
        %v824 = vld [vmem:[#allocation2 + $0x14] sm:$0xf]
        %s825 = sadd.s32 %s398, 6
        %s826 = smul.u32 %s825, 4
        %s827 = smul.addr %s826, 4
        %s828 = scalar_lea.vmem %s1, %s827
        %v829 = vld [vmem:[%s828] sm:$0xf]
        %v830 = vld [vmem:[%s828 + $0x4] sm:$0xf]
        %v831 = vld [vmem:[%s828 + $0x8] sm:$0xf]
        %v832 = vld [vmem:[%s828 + $0xc] sm:$0xf]
        %v835 = vunpack.c.l.b16 %v823
        %v836 = vunpack.c.l.b16 %v824
        %v837 = vpack.c.b16 %v422, %v835
        %v838 = vpack.c.b16 %v836, %v836
        %vm839 = vcmask 1045504
        %v840 = vrot.slane %v837, 2
        %v841 = vrot.slane %v772, 2
        %v842 = vsel %vm839, %v840, %v841
        %v843 = vrot.slane %v838, 2
        %v844 = vsel %vm839, %v841, %v843
        %v849 = vunpack.c.l.b16 %v829
        %v850 = vunpack.c.l.b16 %v830
        %v851 = vunpack.c.l.b16 %v831
        %v852 = vunpack.c.l.b16 %v832
        %v853 = vpack.c.b16 %v850, %v849
        %v854 = vpack.c.b16 %v852, %v851
        %v858 = vsel %vm464, %v842, 0
        %v861 = vsel %vm464, %v844, 0
        %v864 = vsel %vm464, %v843, 0
        %866 = vmatpush.bf16.msra.mxu0 0
        %867 = vmatpush.bf16.msra.mxu0 0
        %868 = vmatpush.bf16.msra.mxu0 0
        %869 = vmatpush.bf16.msra.mxu0 0
        %870 = vmatpush.bf16.msra.mxu0 0
        %871 = vmatpush.bf16.msra.mxu0 0
        %872 = vmatpush.bf16.msra.mxu0 %v854
        %873 = vmatpush.bf16.msra.mxu0 %v853
        %874 = vmatmul.bf16.gmra.mxu0 %v858
        %v875 = vpop.f32.mrf.mxu0
        %v876 = vadd.f32 0.0, %v875
        %v877 = vpop.f32.mrf.mxu0
        %v878 = vadd.f32 0.0, %v877
        %879 = vmatmul.bf16.gmra.mxu0 %v861
        %v880 = vpop.f32.mrf.mxu0
        %v881 = vadd.f32 0.0, %v880
        %v882 = vpop.f32.mrf.mxu0
        %v883 = vadd.f32 0.0, %v882
        %884 = vmatmul.bf16.gmra.mxu0 %v864
        %v885 = vpop.f32.mrf.mxu0
        %v886 = vadd.f32 0.0, %v885
        %v887 = vpop.f32.mrf.mxu0
        %888 = vdwg.mxu0
        %v889 = vadd.f32 %v818, %v876
        %v890 = vadd.f32 %v819, %v878
        %v891 = vadd.f32 %v820, %v881
        %v892 = vadd.f32 %v821, %v883
        %v893 = vadd.f32 %v822, %v886
        %v894 = vld [vmem:[#allocation2 + $0x4] sm:$0xc]
        %v895 = vld [vmem:[#allocation2 + $0x8] sm:$0xf]
        %v896 = vld [vmem:[#allocation2 + $0xc] sm:$0xf]
        %v897 = vld [vmem:[#allocation2 + $0x10] sm:$0xf]
        %v898 = vld [vmem:[#allocation2 + $0x14] sm:$0xf]
        %v899 = vld [vmem:[#allocation2 + $0x18] sm:$0x1]
        %s900 = sadd.s32 %s398, 7
        %s901 = smul.u32 %s900, 4
        %s902 = smul.addr %s901, 4
        %s903 = scalar_lea.vmem %s1, %s902
        %v904 = vld [vmem:[%s903] sm:$0xf]
        %v905 = vld [vmem:[%s903 + $0x4] sm:$0xf]
        %v906 = vld [vmem:[%s903 + $0x8] sm:$0xf]
        %v907 = vld [vmem:[%s903 + $0xc] sm:$0xf]
        %v914 = vunpack.c.l.b16 %v894
        %v915 = vunpack.c.l.b16 %v895
        %v916 = vunpack.c.l.b16 %v896
        %v917 = vunpack.c.l.b16 %v897
        %v918 = vunpack.c.l.b16 %v898
        %v919 = vunpack.c.l.b16 %v899
        %v920 = vpack.c.b16 %v915, %v914
        %v921 = vpack.c.b16 %v917, %v916
        %v922 = vpack.c.b16 %v919, %v918
        %vm923 = vsmask.f32 5376
        %v925 = vshrl.u32 %v920, 16
        %v927 = vrot.slane %v925, 2
        %v928 = vshll.u32 %v920, 16
        %v930 = vrot.slane %v928, 3
        %v931 = vor.u32 %v927, %v930
        %v933 = vshrl.u32 %v921, 16
        %v935 = vrot.slane %v933, 2
        %v936 = vshll.u32 %v921, 16
        %v938 = vrot.slane %v936, 3
        %v939 = vor.u32 %v935, %v938
        %v940 = vsel %vm923, %v931, %v939
        %v942 = vshrl.u32 %v922, 16
        %v944 = vrot.slane %v942, 2
        %v945 = vshll.u32 %v922, 16
        %v947 = vrot.slane %v945, 3
        %v948 = vor.u32 %v944, %v947
        %v949 = vsel %vm923, %v939, %v948
        %v954 = vunpack.c.l.b16 %v904
        %v955 = vunpack.c.l.b16 %v905
        %v956 = vunpack.c.l.b16 %v906
        %v957 = vunpack.c.l.b16 %v907
        %v958 = vpack.c.b16 %v955, %v954
        %v959 = vpack.c.b16 %v957, %v956
        %v963 = vsel %vm464, %v940, 0
        %v966 = vsel %vm464, %v949, 0
        %v969 = vsel %vm464, %v948, 0
        %971 = vmatpush.bf16.msra.mxu0 0
        %972 = vmatpush.bf16.msra.mxu0 0
        %973 = vmatpush.bf16.msra.mxu0 0
        %974 = vmatpush.bf16.msra.mxu0 0
        %975 = vmatpush.bf16.msra.mxu0 0
        %976 = vmatpush.bf16.msra.mxu0 0
        %977 = vmatpush.bf16.msra.mxu0 %v959
        %978 = vmatpush.bf16.msra.mxu0 %v958
        %979 = vmatmul.bf16.gmra.mxu0 %v963
        %v980 = vpop.f32.mrf.mxu0
        %v981 = vadd.f32 0.0, %v980
        %v982 = vpop.f32.mrf.mxu0
        %v983 = vadd.f32 0.0, %v982
        %984 = vmatmul.bf16.gmra.mxu0 %v966
        %v985 = vpop.f32.mrf.mxu0
        %v986 = vadd.f32 0.0, %v985
        %v987 = vpop.f32.mrf.mxu0
        %v988 = vadd.f32 0.0, %v987
        %989 = vmatmul.bf16.gmra.mxu0 %v969
        %v990 = vpop.f32.mrf.mxu0
        %v991 = vadd.f32 0.0, %v990
        %v992 = vpop.f32.mrf.mxu0
        %993 = vdwg.mxu0
        %v994 = vadd.f32 %v889, %v981
        %v995 = vadd.f32 %v890, %v983
        %v996 = vadd.f32 %v891, %v986
        %v997 = vadd.f32 %v892, %v988
        %v998 = vadd.f32 %v893, %v991
        %v999 = vld [vmem:[#allocation2 + $0x4] sm:$0x8]
        %s1000 = sadd.s32 %s398, 8
        %s1001 = smul.u32 %s1000, 4
        %s1002 = smul.addr %s1001, 4
        %s1003 = scalar_lea.vmem %s1, %s1002
        %v1004 = vld [vmem:[%s1003] sm:$0xf]
        %v1005 = vld [vmem:[%s1003 + $0x4] sm:$0xf]
        %v1006 = vld [vmem:[%s1003 + $0x8] sm:$0xf]
        %v1007 = vld [vmem:[%s1003 + $0xc] sm:$0xf]
        %v1009 = vunpack.c.l.b16 %v999
        %v1010 = vpack.c.b16 %v915, %v1009
        %v1011 = vrot.slane %v1010, 3
        %v1012 = vrot.slane %v921, 3
        %v1013 = vsel %vm626, %v1011, %v1012
        %v1014 = vrot.slane %v922, 3
        %v1015 = vsel %vm626, %v1012, %v1014
        %v1020 = vunpack.c.l.b16 %v1004
        %v1021 = vunpack.c.l.b16 %v1005
        %v1022 = vunpack.c.l.b16 %v1006
        %v1023 = vunpack.c.l.b16 %v1007
        %v1024 = vpack.c.b16 %v1021, %v1020
        %v1025 = vpack.c.b16 %v1023, %v1022
        %v1029 = vsel %vm464, %v1013, 0
        %v1032 = vsel %vm464, %v1015, 0
        %v1035 = vsel %vm464, %v1014, 0
        %1037 = vmatpush.bf16.msra.mxu0 0
        %1038 = vmatpush.bf16.msra.mxu0 0
        %1039 = vmatpush.bf16.msra.mxu0 0
        %1040 = vmatpush.bf16.msra.mxu0 0
        %1041 = vmatpush.bf16.msra.mxu0 0
        %1042 = vmatpush.bf16.msra.mxu0 0
        %1043 = vmatpush.bf16.msra.mxu0 %v1025
        %1044 = vmatpush.bf16.msra.mxu0 %v1024
        %1045 = vmatmul.bf16.gmra.mxu0 %v1029
        %v1046 = vpop.f32.mrf.mxu0
        %v1047 = vadd.f32 0.0, %v1046
        %v1048 = vpop.f32.mrf.mxu0
        %v1049 = vadd.f32 0.0, %v1048
        %1050 = vmatmul.bf16.gmra.mxu0 %v1032
        %v1051 = vpop.f32.mrf.mxu0
        %v1052 = vadd.f32 0.0, %v1051
        %v1053 = vpop.f32.mrf.mxu0
        %v1054 = vadd.f32 0.0, %v1053
        %1055 = vmatmul.bf16.gmra.mxu0 %v1035
        %v1056 = vpop.f32.mrf.mxu0
        %v1057 = vadd.f32 0.0, %v1056
        %v1058 = vpop.f32.mrf.mxu0
        %1059 = vdwg.mxu0
        %v1060 = vadd.f32 %v994, %v1047
        %v1061 = vadd.f32 %v995, %v1049
        %v1062 = vadd.f32 %v996, %v1052
        %v1063 = vadd.f32 %v997, %v1054
        %v1064 = vadd.f32 %v998, %v1057
        %s1065 = scalar_lea.vmem %s2, %s379
        %v1066 = vld [vmem:[%s1065] sm:$0x1]
        %v1068 = vperm.slane %v1066, 0
        %v1070 = vadd.f32 %v1060, %v1068
        %v1071 = vadd.f32 %v1061, %v1068
        %v1072 = vadd.f32 %v1062, %v1068
        %v1073 = vadd.f32 %v1063, %v1068
        %v1074 = vadd.f32 %v1064, %v1068
        %s1075 = scalar_lea.vmem %s3, %s379
        %v1076 = vld [vmem:[%s1075] sm:$0x1]
        %v1078 = vperm.slane %v1076, 0
        %v1080 = vmul.f32 %v1070, %v1078
        %v1081 = vmul.f32 %v1071, %v1078
        %v1082 = vmul.f32 %v1072, %v1078
        %v1083 = vmul.f32 %v1073, %v1078
        %v1084 = vmul.f32 %v1074, %v1078
        %vm1091 = vcmask 1040384
        %v1092 = vrot.slane %v390, 7
        %v1093 = vrot.slane %v391, 7
        %v1094 = vsel %vm1091, %v1092, %v1093
        %v1095 = vrot.slane %v392, 7
        %v1096 = vsel %vm1091, %v1093, %v1095
        %v1097 = vrot.slane %v393, 7
        %v1098 = vsel %vm1091, %v1095, %v1097
        %v1099 = vrot.slane %v394, 7
        %v1100 = vsel %vm1091, %v1097, %v1099
        %v1101 = vrot.slane %v395, 7
        %v1102 = vsel %vm1091, %v1099, %v1101
        %v1108 = vadd.f32 %v1080, %v1094
        %v1109 = vadd.f32 %v1081, %v1096
        %v1110 = vadd.f32 %v1082, %v1098
        %v1111 = vadd.f32 %v1083, %v1100
        %v1112 = vadd.f32 %v1084, %v1102
        %vm1113 = vcmp.gt.f32.partialorder %v1108, 0.0
        %vm1114 = vcmp.gt.f32.partialorder %v1109, 0.0
        %vm1115 = vcmp.gt.f32.partialorder %v1110, 0.0
        %vm1116 = vcmp.gt.f32.partialorder %v1111, 0.0
        %vm1117 = vcmp.gt.f32.partialorder %v1112, 0.0
        %v1118 = vmul.f32 %v1108, 0.2
        %v1119 = vmul.f32 %v1109, 0.2
        %v1120 = vmul.f32 %v1110, 0.2
        %v1121 = vmul.f32 %v1111, 0.2
        %v1122 = vmul.f32 %v1112, 0.2
        %v1123 = vsel %vm1113, %v1108, %v1118
        %v1124 = vsel %vm1114, %v1109, %v1119
        %v1125 = vsel %vm1115, %v1110, %v1120
        %v1126 = vsel %vm1116, %v1111, %v1121
        %v1127 = vsel %vm1117, %v1112, %v1122
        %1129 = vset.pattern.permute.xlu0 0
        %1130 = vperm.xlu0 %1129, %v373
        %v1131 = vpop.permute.xlu0 %1130
        %1134 = vset.pattern.permute.xlu0 0
        %1135 = vperm.xlu0 %1134, %v374
        %v1136 = vpop.permute.xlu0 %1135
        %1139 = vset.pattern.permute.xlu0 0
        %1140 = vperm.xlu0 %1139, %v375
        %v1141 = vpop.permute.xlu0 %1140
        %1144 = vset.pattern.permute.xlu0 0
        %1145 = vperm.xlu0 %1144, %v376
        %v1146 = vpop.permute.xlu0 %1145
        %1149 = vset.pattern.permute.xlu0 0
        %1150 = vperm.xlu0 %1149, %v377
        %v1151 = vpop.permute.xlu0 %1150
        %v1153 = vmul.f32 %v1123, %v1131
        %v1154 = vmul.f32 %v1124, %v1136
        %v1155 = vmul.f32 %v1125, %v1141
        %v1156 = vmul.f32 %v1126, %v1146
        %v1157 = vmul.f32 %v1127, %v1151
        %v1158 = vpack.c.bf16 %v1153, %v1153
        %v1159 = vpack.c.bf16 %v1154, %v1154
        %v1160 = vpack.c.bf16 %v1155, %v1155
        %v1161 = vpack.c.bf16 %v1156, %v1156
        %v1162 = vpack.c.bf16 %v1157, %v1157
        %v1164 = vshll.u32 %v1158, 16
        %v1166 = vrot.slane %v1164, 5
        %v1167 = vshrl.u32 %v1158, 16
        %v1169 = vrot.slane %v1167, 4
        %v1170 = vor.u32 %v1169, %v1166
        %v1171 = vrot.slane %v1170, 4
        %v1173 = vshll.u32 %v1159, 16
        %v1175 = vrot.slane %v1173, 5
        %v1176 = vsel %vm300, %v1171, %v1175
        %v1177 = vshrl.u32 %v1159, 16
        %v1179 = vrot.slane %v1177, 4
        %v1180 = vor.u32 %v1179, %v1175
        %v1181 = vrot.slane %v1180, 4
        %v1183 = vshll.u32 %v1160, 16
        %v1185 = vrot.slane %v1183, 5
        %v1186 = vsel %vm300, %v1181, %v1185
        %v1187 = vshrl.u32 %v1160, 16
        %v1189 = vrot.slane %v1187, 4
        %v1190 = vor.u32 %v1189, %v1185
        %v1191 = vrot.slane %v1190, 4
        %v1193 = vshll.u32 %v1161, 16
        %v1195 = vrot.slane %v1193, 5
        %v1196 = vsel %vm300, %v1191, %v1195
        %v1197 = vshrl.u32 %v1161, 16
        %v1199 = vrot.slane %v1197, 4
        %v1200 = vor.u32 %v1199, %v1195
        %v1201 = vrot.slane %v1200, 4
        %v1203 = vshll.u32 %v1162, 16
        %v1205 = vrot.slane %v1203, 5
        %v1206 = vsel %vm300, %v1201, %v1205
        %v1207 = vshrl.u32 %v1162, 16
        %v1209 = vrot.slane %v1207, 4
        %v1210 = vor.u32 %v1209, %v1205
        %v1211 = vrot.slane %v1210, 4
        %v1218 = vsel %vm358, %v1166, %v384
        %1219 = vst [vmem:[#allocation2] sm:$0x8] %v1218
        %1220 = vst.msk [vmem:[#allocation2 + $0x4] sm:$0xf] %vm362, %v1176
        %1221 = vst.msk [vmem:[#allocation2 + $0x8] sm:$0xf] %vm362, %v1186
        %1222 = vst.msk [vmem:[#allocation2 + $0xc] sm:$0xf] %vm362, %v1196
        %1223 = vst.msk [vmem:[#allocation2 + $0x10] sm:$0xf] %vm362, %v1206
        %v1224 = vld [vmem:[#allocation2 + $0x14] sm:$0x3]
        %v1225 = vsel %vm369, %v1211, %v1224
        %1226 = vst [vmem:[#allocation2 + $0x14] sm:$0x3] %v1225
      $region53: #{ifblock_forward.5} parent=47 // loop_footer
        %s383 = sadd.s32 1, %s379
      $region54: #{ifblock_forward.5} parent=47 // loop_footer_branch
        %378 = sbr.rel target = $region50
      $region55: #{ifblock_forward.5} parent=47 // loop_exit
        _
      %v1227 = vld [vmem:[#allocation2] sm:$0xf]
      %v1228 = vld [vmem:[#allocation2 + $0x4] sm:$0xf]
      %v1229 = vld [vmem:[#allocation2 + $0x8] sm:$0xf]
      %v1230 = vld [vmem:[#allocation2 + $0xc] sm:$0xf]
      %v1231 = vld [vmem:[#allocation2 + $0x10] sm:$0x3]
      %v1232 = vld [vmem:[%s4] sm:$0xff]
      %v1233 = vld [vmem:[%s4 + $0x8] sm:$0xff]
      %v1234 = vld [vmem:[%s4 + $0x10] sm:$0xff]
      %v1235 = vld [vmem:[%s4 + $0x18] sm:$0xff]
      %v1236 = vld [vmem:[#allocation2 + $0x10] sm:$0x7]
      %s1237 = scalar_lea.vmem %s4, 32
      %v1238 = vld [vmem:[%s1237] sm:$0xff]
      %v1239 = vld [vmem:[%s1237 + $0x8] sm:$0xff]
      %v1240 = vld [vmem:[%s1237 + $0x10] sm:$0xff]
      %v1241 = vld [vmem:[%s1237 + $0x18] sm:$0xff]
      %v1247 = vunpack.c.l.b16 %v1227
      %v1248 = vunpack.c.l.b16 %v1228
      %v1249 = vunpack.c.l.b16 %v1229
      %v1250 = vunpack.c.l.b16 %v1230
      %v1251 = vunpack.c.l.b16 %v1236
      %v1252 = vpack.c.b16 %v1248, %v1247
      %v1253 = vpack.c.b16 %v1250, %v1249
      %v1254 = vpack.c.b16 %v1251, %v1251
      %vm1255 = vsmask.f32 7424
      %v1257 = vshrl.u32 %v1252, 16
      %v1259 = vshll.u32 %v1252, 16
      %v1261 = vrot.slane %v1259, 1
      %v1262 = vor.u32 %v1257, %v1261
      %v1264 = vshll.u32 %v1253, 16
      %v1266 = vrot.slane %v1264, 1
      %v1267 = vsel %vm1255, %v1262, %v1266
      %v1268 = vshrl.u32 %v1253, 16
      %v1270 = vor.u32 %v1268, %v1266
      %v1272 = vshll.u32 %v1254, 16
      %v1274 = vrot.slane %v1272, 1
      %v1275 = vsel %vm1255, %v1270, %v1274
      %v1276 = vshrl.u32 %v1254, 16
      %v1278 = vor.u32 %v1276, %v1274
      %v1283 = vunpack.c.l.b16 %v1238
      %v1284 = vunpack.c.h.b16 %v1238
      %v1285 = vunpack.c.l.b16 %v1239
      %v1286 = vunpack.c.h.b16 %v1239
      %v1287 = vunpack.c.l.b16 %v1240
      %v1288 = vunpack.c.h.b16 %v1240
      %v1289 = vunpack.c.l.b16 %v1241
      %v1290 = vunpack.c.h.b16 %v1241
      %v1291 = vpack.c.b16 %v1285, %v1283
      %v1292 = vpack.c.b16 %v1286, %v1284
      %v1293 = vpack.c.b16 %v1289, %v1287
      %v1294 = vpack.c.b16 %v1290, %v1288
      %vm1299 = vcmask 261120
      %v1301 = vsel %vm1299, %v1267, 0
      %v1304 = vsel %vm1299, %v1275, 0
      %v1307 = vsel %vm1299, %v1278, 0
      %1309 = vmatpush.bf16.msra.mxu0 0
      %1310 = vmatpush.bf16.msra.mxu0 0
      %1311 = vmatpush.bf16.msra.mxu0 0
      %1312 = vmatpush.bf16.msra.mxu0 0
      %1313 = vmatpush.bf16.msra.mxu0 0
      %1314 = vmatpush.bf16.msra.mxu0 0
      %1315 = vmatpush.bf16.msra.mxu0 %v1293
      %1316 = vmatpush.bf16.msra.mxu0 %v1291
      %1317 = vmatmul.bf16.gmra.mxu0 %v1301
      %v1318 = vpop.f32.mrf.mxu0
      %v1319 = vadd.f32 0.0, %v1318
      %v1320 = vpop.f32.mrf.mxu0
      %v1321 = vadd.f32 0.0, %v1320
      %1322 = vmatmul.bf16.gmra.mxu0 %v1304
      %v1323 = vpop.f32.mrf.mxu0
      %v1324 = vadd.f32 0.0, %v1323
      %v1325 = vpop.f32.mrf.mxu0
      %v1326 = vadd.f32 0.0, %v1325
      %1327 = vmatmul.bf16.gmra.mxu0 %v1307
      %v1328 = vpop.f32.mrf.mxu0
      %v1329 = vadd.f32 0.0, %v1328
      %v1330 = vpop.f32.mrf.mxu0
      %1331 = vdwg.mxu0
      %1332 = vmatpush.bf16.msra.mxu0 0
      %1333 = vmatpush.bf16.msra.mxu0 0
      %1334 = vmatpush.bf16.msra.mxu0 0
      %1335 = vmatpush.bf16.msra.mxu0 0
      %1336 = vmatpush.bf16.msra.mxu0 0
      %1337 = vmatpush.bf16.msra.mxu0 0
      %1338 = vmatpush.bf16.msra.mxu0 %v1294
      %1339 = vmatpush.bf16.msra.mxu0 %v1292
      %1340 = vmatmul.bf16.gmra.mxu0 %v1301
      %v1341 = vpop.f32.mrf.mxu0
      %v1342 = vadd.f32 0.0, %v1341
      %v1343 = vpop.f32.mrf.mxu0
      %v1344 = vadd.f32 0.0, %v1343
      %1345 = vmatmul.bf16.gmra.mxu0 %v1304
      %v1346 = vpop.f32.mrf.mxu0
      %v1347 = vadd.f32 0.0, %v1346
      %v1348 = vpop.f32.mrf.mxu0
      %v1349 = vadd.f32 0.0, %v1348
      %1350 = vmatmul.bf16.gmra.mxu0 %v1307
      %v1351 = vpop.f32.mrf.mxu0
      %v1352 = vadd.f32 0.0, %v1351
      %v1353 = vpop.f32.mrf.mxu0
      %1354 = vdwg.mxu0
      %v1356 = vunpack.c.l.b16 %v1231
      %v1357 = vpack.c.b16 %v1356, %v1356
      %v1362 = vunpack.c.l.b16 %v1232
      %v1363 = vunpack.c.h.b16 %v1232
      %v1364 = vunpack.c.l.b16 %v1233
      %v1365 = vunpack.c.h.b16 %v1233
      %v1366 = vunpack.c.l.b16 %v1234
      %v1367 = vunpack.c.h.b16 %v1234
      %v1368 = vunpack.c.l.b16 %v1235
      %v1369 = vunpack.c.h.b16 %v1235
      %v1370 = vpack.c.b16 %v1364, %v1362
      %v1371 = vpack.c.b16 %v1365, %v1363
      %v1372 = vpack.c.b16 %v1368, %v1366
      %v1373 = vpack.c.b16 %v1369, %v1367
      %v1378 = vsel %vm1299, %v1252, 0
      %v1380 = vsel %vm1299, %v1253, 0
      %v1383 = vsel %vm1299, %v1357, 0
      %1385 = vmatpush.bf16.msra.mxu0 0
      %1386 = vmatpush.bf16.msra.mxu0 0
      %1387 = vmatpush.bf16.msra.mxu0 0
      %1388 = vmatpush.bf16.msra.mxu0 0
      %1389 = vmatpush.bf16.msra.mxu0 0
      %1390 = vmatpush.bf16.msra.mxu0 0
      %1391 = vmatpush.bf16.msra.mxu0 %v1372
      %1392 = vmatpush.bf16.msra.mxu0 %v1370
      %1393 = vmatmul.bf16.gmra.mxu0 %v1378
      %v1394 = vpop.f32.mrf.mxu0
      %v1395 = vadd.f32 %v1319, %v1394
      %v1396 = vpop.f32.mrf.mxu0
      %v1397 = vadd.f32 %v1321, %v1396
      %1398 = vmatmul.bf16.gmra.mxu0 %v1380
      %v1399 = vpop.f32.mrf.mxu0
      %v1400 = vadd.f32 %v1324, %v1399
      %v1401 = vpop.f32.mrf.mxu0
      %v1402 = vadd.f32 %v1326, %v1401
      %1403 = vmatmul.bf16.gmra.mxu0 %v1383
      %v1404 = vpop.f32.mrf.mxu0
      %v1405 = vadd.f32 %v1329, %v1404
      %v1406 = vpop.f32.mrf.mxu0
      %1407 = vdwg.mxu0
      %1408 = vmatpush.bf16.msra.mxu0 0
      %1409 = vmatpush.bf16.msra.mxu0 0
      %1410 = vmatpush.bf16.msra.mxu0 0
      %1411 = vmatpush.bf16.msra.mxu0 0
      %1412 = vmatpush.bf16.msra.mxu0 0
      %1413 = vmatpush.bf16.msra.mxu0 0
      %1414 = vmatpush.bf16.msra.mxu0 %v1373
      %1415 = vmatpush.bf16.msra.mxu0 %v1371
      %1416 = vmatmul.bf16.gmra.mxu0 %v1378
      %v1417 = vpop.f32.mrf.mxu0
      %v1418 = vadd.f32 %v1342, %v1417
      %v1419 = vpop.f32.mrf.mxu0
      %v1420 = vadd.f32 %v1344, %v1419
      %1421 = vmatmul.bf16.gmra.mxu0 %v1380
      %v1422 = vpop.f32.mrf.mxu0
      %v1423 = vadd.f32 %v1347, %v1422
      %v1424 = vpop.f32.mrf.mxu0
      %v1425 = vadd.f32 %v1349, %v1424
      %1426 = vmatmul.bf16.gmra.mxu0 %v1383
      %v1427 = vpop.f32.mrf.mxu0
      %v1428 = vadd.f32 %v1352, %v1427
      %v1429 = vpop.f32.mrf.mxu0
      %1430 = vdwg.mxu0
      %v1431 = vld [vmem:[#allocation2] sm:$0xe]
      %s1432 = scalar_lea.vmem %s4, 64
      %v1433 = vld [vmem:[%s1432] sm:$0xff]
      %v1434 = vld [vmem:[%s1432 + $0x8] sm:$0xff]
      %v1435 = vld [vmem:[%s1432 + $0x10] sm:$0xff]
      %v1436 = vld [vmem:[%s1432 + $0x18] sm:$0xff]
      %v1438 = vunpack.c.l.b16 %v1431
      %v1439 = vpack.c.b16 %v1248, %v1438
      %vm1440 = vcmask 1046528
      %v1441 = vrot.slane %v1439, 1
      %v1442 = vrot.slane %v1253, 1
      %v1443 = vsel %vm1440, %v1441, %v1442
      %v1444 = vrot.slane %v1254, 1
      %v1445 = vsel %vm1440, %v1442, %v1444
      %v1450 = vunpack.c.l.b16 %v1433
      %v1451 = vunpack.c.h.b16 %v1433
      %v1452 = vunpack.c.l.b16 %v1434
      %v1453 = vunpack.c.h.b16 %v1434
      %v1454 = vunpack.c.l.b16 %v1435
      %v1455 = vunpack.c.h.b16 %v1435
      %v1456 = vunpack.c.l.b16 %v1436
      %v1457 = vunpack.c.h.b16 %v1436
      %v1458 = vpack.c.b16 %v1452, %v1450
      %v1459 = vpack.c.b16 %v1453, %v1451
      %v1460 = vpack.c.b16 %v1456, %v1454
      %v1461 = vpack.c.b16 %v1457, %v1455
      %v1467 = vsel %vm1299, %v1443, 0
      %v1470 = vsel %vm1299, %v1445, 0
      %v1473 = vsel %vm1299, %v1444, 0
      %1475 = vmatpush.bf16.msra.mxu0 0
      %1476 = vmatpush.bf16.msra.mxu0 0
      %1477 = vmatpush.bf16.msra.mxu0 0
      %1478 = vmatpush.bf16.msra.mxu0 0
      %1479 = vmatpush.bf16.msra.mxu0 0
      %1480 = vmatpush.bf16.msra.mxu0 0
      %1481 = vmatpush.bf16.msra.mxu0 %v1460
      %1482 = vmatpush.bf16.msra.mxu0 %v1458
      %1483 = vmatmul.bf16.gmra.mxu0 %v1467
      %v1484 = vpop.f32.mrf.mxu0
      %v1485 = vadd.f32 0.0, %v1484
      %v1486 = vpop.f32.mrf.mxu0
      %v1487 = vadd.f32 0.0, %v1486
      %1488 = vmatmul.bf16.gmra.mxu0 %v1470
      %v1489 = vpop.f32.mrf.mxu0
      %v1490 = vadd.f32 0.0, %v1489
      %v1491 = vpop.f32.mrf.mxu0
      %v1492 = vadd.f32 0.0, %v1491
      %1493 = vmatmul.bf16.gmra.mxu0 %v1473
      %v1494 = vpop.f32.mrf.mxu0
      %v1495 = vadd.f32 0.0, %v1494
      %v1496 = vpop.f32.mrf.mxu0
      %1497 = vdwg.mxu0
      %1498 = vmatpush.bf16.msra.mxu0 0
      %1499 = vmatpush.bf16.msra.mxu0 0
      %1500 = vmatpush.bf16.msra.mxu0 0
      %1501 = vmatpush.bf16.msra.mxu0 0
      %1502 = vmatpush.bf16.msra.mxu0 0
      %1503 = vmatpush.bf16.msra.mxu0 0
      %1504 = vmatpush.bf16.msra.mxu0 %v1461
      %1505 = vmatpush.bf16.msra.mxu0 %v1459
      %1506 = vmatmul.bf16.gmra.mxu0 %v1467
      %v1507 = vpop.f32.mrf.mxu0
      %v1508 = vadd.f32 0.0, %v1507
      %v1509 = vpop.f32.mrf.mxu0
      %v1510 = vadd.f32 0.0, %v1509
      %1511 = vmatmul.bf16.gmra.mxu0 %v1470
      %v1512 = vpop.f32.mrf.mxu0
      %v1513 = vadd.f32 0.0, %v1512
      %v1514 = vpop.f32.mrf.mxu0
      %v1515 = vadd.f32 0.0, %v1514
      %1516 = vmatmul.bf16.gmra.mxu0 %v1473
      %v1517 = vpop.f32.mrf.mxu0
      %v1518 = vadd.f32 0.0, %v1517
      %v1519 = vpop.f32.mrf.mxu0
      %1520 = vdwg.mxu0
      %v1521 = vadd.f32 %v1395, %v1485
      %v1522 = vadd.f32 %v1418, %v1508
      %v1523 = vadd.f32 %v1397, %v1487
      %v1524 = vadd.f32 %v1420, %v1510
      %v1525 = vadd.f32 %v1400, %v1490
      %v1526 = vadd.f32 %v1423, %v1513
      %v1527 = vadd.f32 %v1402, %v1492
      %v1528 = vadd.f32 %v1425, %v1515
      %v1529 = vadd.f32 %v1405, %v1495
      %v1530 = vadd.f32 %v1428, %v1518
      %v1531 = vld [vmem:[#allocation2] sm:$0x8]
      %v1532 = vld [vmem:[#allocation2 + $0x4] sm:$0xf]
      %v1533 = vld [vmem:[#allocation2 + $0x8] sm:$0xf]
      %v1534 = vld [vmem:[#allocation2 + $0xc] sm:$0xf]
      %v1535 = vld [vmem:[#allocation2 + $0x10] sm:$0xf]
      %v1536 = vld [vmem:[#allocation2 + $0x14] sm:$0x1]
      %s1537 = scalar_lea.vmem %s4, 96
      %v1538 = vld [vmem:[%s1537] sm:$0xff]
      %v1539 = vld [vmem:[%s1537 + $0x8] sm:$0xff]
      %v1540 = vld [vmem:[%s1537 + $0x10] sm:$0xff]
      %v1541 = vld [vmem:[%s1537 + $0x18] sm:$0xff]
      %v1548 = vunpack.c.l.b16 %v1531
      %v1549 = vunpack.c.l.b16 %v1532
      %v1550 = vunpack.c.l.b16 %v1533
      %v1551 = vunpack.c.l.b16 %v1534
      %v1552 = vunpack.c.l.b16 %v1535
      %v1553 = vunpack.c.l.b16 %v1536
      %v1554 = vpack.c.b16 %v1549, %v1548
      %v1555 = vpack.c.b16 %v1551, %v1550
      %v1556 = vpack.c.b16 %v1553, %v1552
      %vm1557 = vcmask 1044480
      %v1558 = vrot.slane %v1554, 3
      %v1559 = vrot.slane %v1555, 3
      %v1560 = vsel %vm1557, %v1558, %v1559
      %v1561 = vrot.slane %v1556, 3
      %v1562 = vsel %vm1557, %v1559, %v1561
      %v1567 = vunpack.c.l.b16 %v1538
      %v1568 = vunpack.c.h.b16 %v1538
      %v1569 = vunpack.c.l.b16 %v1539
      %v1570 = vunpack.c.h.b16 %v1539
      %v1571 = vunpack.c.l.b16 %v1540
      %v1572 = vunpack.c.h.b16 %v1540
      %v1573 = vunpack.c.l.b16 %v1541
      %v1574 = vunpack.c.h.b16 %v1541
      %v1575 = vpack.c.b16 %v1569, %v1567
      %v1576 = vpack.c.b16 %v1570, %v1568
      %v1577 = vpack.c.b16 %v1573, %v1571
      %v1578 = vpack.c.b16 %v1574, %v1572
      %v1584 = vsel %vm1299, %v1560, 0
      %v1587 = vsel %vm1299, %v1562, 0
      %v1590 = vsel %vm1299, %v1561, 0
      %1592 = vmatpush.bf16.msra.mxu0 0
      %1593 = vmatpush.bf16.msra.mxu0 0
      %1594 = vmatpush.bf16.msra.mxu0 0
      %1595 = vmatpush.bf16.msra.mxu0 0
      %1596 = vmatpush.bf16.msra.mxu0 0
      %1597 = vmatpush.bf16.msra.mxu0 0
      %1598 = vmatpush.bf16.msra.mxu0 %v1577
      %1599 = vmatpush.bf16.msra.mxu0 %v1575
      %1600 = vmatmul.bf16.gmra.mxu0 %v1584
      %v1601 = vpop.f32.mrf.mxu0
      %v1602 = vadd.f32 0.0, %v1601
      %v1603 = vpop.f32.mrf.mxu0
      %v1604 = vadd.f32 0.0, %v1603
      %1605 = vmatmul.bf16.gmra.mxu0 %v1587
      %v1606 = vpop.f32.mrf.mxu0
      %v1607 = vadd.f32 0.0, %v1606
      %v1608 = vpop.f32.mrf.mxu0
      %v1609 = vadd.f32 0.0, %v1608
      %1610 = vmatmul.bf16.gmra.mxu0 %v1590
      %v1611 = vpop.f32.mrf.mxu0
      %v1612 = vadd.f32 0.0, %v1611
      %v1613 = vpop.f32.mrf.mxu0
      %1614 = vdwg.mxu0
      %1615 = vmatpush.bf16.msra.mxu0 0
      %1616 = vmatpush.bf16.msra.mxu0 0
      %1617 = vmatpush.bf16.msra.mxu0 0
      %1618 = vmatpush.bf16.msra.mxu0 0
      %1619 = vmatpush.bf16.msra.mxu0 0
      %1620 = vmatpush.bf16.msra.mxu0 0
      %1621 = vmatpush.bf16.msra.mxu0 %v1578
      %1622 = vmatpush.bf16.msra.mxu0 %v1576
      %1623 = vmatmul.bf16.gmra.mxu0 %v1584
      %v1624 = vpop.f32.mrf.mxu0
      %v1625 = vadd.f32 0.0, %v1624
      %v1626 = vpop.f32.mrf.mxu0
      %v1627 = vadd.f32 0.0, %v1626
      %1628 = vmatmul.bf16.gmra.mxu0 %v1587
      %v1629 = vpop.f32.mrf.mxu0
      %v1630 = vadd.f32 0.0, %v1629
      %v1631 = vpop.f32.mrf.mxu0
      %v1632 = vadd.f32 0.0, %v1631
      %1633 = vmatmul.bf16.gmra.mxu0 %v1590
      %v1634 = vpop.f32.mrf.mxu0
      %v1635 = vadd.f32 0.0, %v1634
      %v1636 = vpop.f32.mrf.mxu0
      %1637 = vdwg.mxu0
      %v1638 = vadd.f32 %v1521, %v1602
      %v1639 = vadd.f32 %v1522, %v1625
      %v1640 = vadd.f32 %v1523, %v1604
      %v1641 = vadd.f32 %v1524, %v1627
      %v1642 = vadd.f32 %v1525, %v1607
      %v1643 = vadd.f32 %v1526, %v1630
      %v1644 = vadd.f32 %v1527, %v1609
      %v1645 = vadd.f32 %v1528, %v1632
      %v1646 = vadd.f32 %v1529, %v1612
      %v1647 = vadd.f32 %v1530, %v1635
      %v1648 = vld [vmem:[#allocation2 + $0x14] sm:$0x3]
      %s1649 = scalar_lea.vmem %s4, 128
      %v1650 = vld [vmem:[%s1649] sm:$0xff]
      %v1651 = vld [vmem:[%s1649 + $0x8] sm:$0xff]
      %v1652 = vld [vmem:[%s1649 + $0x10] sm:$0xff]
      %v1653 = vld [vmem:[%s1649 + $0x18] sm:$0xff]
      %v1655 = vunpack.c.l.b16 %v1648
      %v1656 = vpack.c.b16 %v1655, %v1552
      %vm1657 = vsmask.f32 4352
      %v1659 = vshrl.u32 %v1554, 16
      %v1661 = vrot.slane %v1659, 3
      %v1662 = vshll.u32 %v1554, 16
      %v1664 = vrot.slane %v1662, 4
      %v1665 = vor.u32 %v1661, %v1664
      %v1667 = vshrl.u32 %v1555, 16
      %v1669 = vrot.slane %v1667, 3
      %v1670 = vshll.u32 %v1555, 16
      %v1672 = vrot.slane %v1670, 4
      %v1673 = vor.u32 %v1669, %v1672
      %v1674 = vsel %vm1657, %v1665, %v1673
      %v1676 = vshrl.u32 %v1656, 16
      %v1678 = vrot.slane %v1676, 3
      %v1679 = vshll.u32 %v1656, 16
      %v1681 = vrot.slane %v1679, 4
      %v1682 = vor.u32 %v1678, %v1681
      %v1683 = vsel %vm1657, %v1673, %v1682
      %v1688 = vunpack.c.l.b16 %v1650
      %v1689 = vunpack.c.h.b16 %v1650
      %v1690 = vunpack.c.l.b16 %v1651
      %v1691 = vunpack.c.h.b16 %v1651
      %v1692 = vunpack.c.l.b16 %v1652
      %v1693 = vunpack.c.h.b16 %v1652
      %v1694 = vunpack.c.l.b16 %v1653
      %v1695 = vunpack.c.h.b16 %v1653
      %v1696 = vpack.c.b16 %v1690, %v1688
      %v1697 = vpack.c.b16 %v1691, %v1689
      %v1698 = vpack.c.b16 %v1694, %v1692
      %v1699 = vpack.c.b16 %v1695, %v1693
      %v1705 = vsel %vm1299, %v1674, 0
      %v1708 = vsel %vm1299, %v1683, 0
      %v1711 = vsel %vm1299, %v1682, 0
      %1713 = vmatpush.bf16.msra.mxu0 0
      %1714 = vmatpush.bf16.msra.mxu0 0
      %1715 = vmatpush.bf16.msra.mxu0 0
      %1716 = vmatpush.bf16.msra.mxu0 0
      %1717 = vmatpush.bf16.msra.mxu0 0
      %1718 = vmatpush.bf16.msra.mxu0 0
      %1719 = vmatpush.bf16.msra.mxu0 %v1698
      %1720 = vmatpush.bf16.msra.mxu0 %v1696
      %1721 = vmatmul.bf16.gmra.mxu0 %v1705
      %v1722 = vpop.f32.mrf.mxu0
      %v1723 = vadd.f32 0.0, %v1722
      %v1724 = vpop.f32.mrf.mxu0
      %v1725 = vadd.f32 0.0, %v1724
      %1726 = vmatmul.bf16.gmra.mxu0 %v1708
      %v1727 = vpop.f32.mrf.mxu0
      %v1728 = vadd.f32 0.0, %v1727
      %v1729 = vpop.f32.mrf.mxu0
      %v1730 = vadd.f32 0.0, %v1729
      %1731 = vmatmul.bf16.gmra.mxu0 %v1711
      %v1732 = vpop.f32.mrf.mxu0
      %v1733 = vadd.f32 0.0, %v1732
      %v1734 = vpop.f32.mrf.mxu0
      %1735 = vdwg.mxu0
      %1736 = vmatpush.bf16.msra.mxu0 0
      %1737 = vmatpush.bf16.msra.mxu0 0
      %1738 = vmatpush.bf16.msra.mxu0 0
      %1739 = vmatpush.bf16.msra.mxu0 0
      %1740 = vmatpush.bf16.msra.mxu0 0
      %1741 = vmatpush.bf16.msra.mxu0 0
      %1742 = vmatpush.bf16.msra.mxu0 %v1699
      %1743 = vmatpush.bf16.msra.mxu0 %v1697
      %1744 = vmatmul.bf16.gmra.mxu0 %v1705
      %v1745 = vpop.f32.mrf.mxu0
      %v1746 = vadd.f32 0.0, %v1745
      %v1747 = vpop.f32.mrf.mxu0
      %v1748 = vadd.f32 0.0, %v1747
      %1749 = vmatmul.bf16.gmra.mxu0 %v1708
      %v1750 = vpop.f32.mrf.mxu0
      %v1751 = vadd.f32 0.0, %v1750
      %v1752 = vpop.f32.mrf.mxu0
      %v1753 = vadd.f32 0.0, %v1752
      %1754 = vmatmul.bf16.gmra.mxu0 %v1711
      %v1755 = vpop.f32.mrf.mxu0
      %v1756 = vadd.f32 0.0, %v1755
      %v1757 = vpop.f32.mrf.mxu0
      %1758 = vdwg.mxu0
      %v1759 = vadd.f32 %v1638, %v1723
      %v1760 = vadd.f32 %v1639, %v1746
      %v1761 = vadd.f32 %v1640, %v1725
      %v1762 = vadd.f32 %v1641, %v1748
      %v1763 = vadd.f32 %v1642, %v1728
      %v1764 = vadd.f32 %v1643, %v1751
      %v1765 = vadd.f32 %v1644, %v1730
      %v1766 = vadd.f32 %v1645, %v1753
      %v1767 = vadd.f32 %v1646, %v1733
      %v1768 = vadd.f32 %v1647, %v1756
      %s1769 = scalar_lea.vmem %s4, 160
      %v1770 = vld [vmem:[%s1769] sm:$0xff]
      %v1771 = vld [vmem:[%s1769 + $0x8] sm:$0xff]
      %v1772 = vld [vmem:[%s1769 + $0x10] sm:$0xff]
      %v1773 = vld [vmem:[%s1769 + $0x18] sm:$0xff]
      %v1774 = vpack.c.b16 %v1550, %v1549
      %v1775 = vpack.c.b16 %v1552, %v1551
      %v1776 = vpack.c.b16 %v1655, %v1655
      %v1781 = vunpack.c.l.b16 %v1770
      %v1782 = vunpack.c.h.b16 %v1770
      %v1783 = vunpack.c.l.b16 %v1771
      %v1784 = vunpack.c.h.b16 %v1771
      %v1785 = vunpack.c.l.b16 %v1772
      %v1786 = vunpack.c.h.b16 %v1772
      %v1787 = vunpack.c.l.b16 %v1773
      %v1788 = vunpack.c.h.b16 %v1773
      %v1789 = vpack.c.b16 %v1783, %v1781
      %v1790 = vpack.c.b16 %v1784, %v1782
      %v1791 = vpack.c.b16 %v1787, %v1785
      %v1792 = vpack.c.b16 %v1788, %v1786
      %v1798 = vsel %vm1299, %v1774, 0
      %v1801 = vsel %vm1299, %v1775, 0
      %v1804 = vsel %vm1299, %v1776, 0
      %1806 = vmatpush.bf16.msra.mxu0 0
      %1807 = vmatpush.bf16.msra.mxu0 0
      %1808 = vmatpush.bf16.msra.mxu0 0
      %1809 = vmatpush.bf16.msra.mxu0 0
      %1810 = vmatpush.bf16.msra.mxu0 0
      %1811 = vmatpush.bf16.msra.mxu0 0
      %1812 = vmatpush.bf16.msra.mxu0 %v1791
      %1813 = vmatpush.bf16.msra.mxu0 %v1789
      %1814 = vmatmul.bf16.gmra.mxu0 %v1798
      %v1815 = vpop.f32.mrf.mxu0
      %v1816 = vadd.f32 0.0, %v1815
      %v1817 = vpop.f32.mrf.mxu0
      %v1818 = vadd.f32 0.0, %v1817
      %1819 = vmatmul.bf16.gmra.mxu0 %v1801
      %v1820 = vpop.f32.mrf.mxu0
      %v1821 = vadd.f32 0.0, %v1820
      %v1822 = vpop.f32.mrf.mxu0
      %v1823 = vadd.f32 0.0, %v1822
      %1824 = vmatmul.bf16.gmra.mxu0 %v1804
      %v1825 = vpop.f32.mrf.mxu0
      %v1826 = vadd.f32 0.0, %v1825
      %v1827 = vpop.f32.mrf.mxu0
      %1828 = vdwg.mxu0
      %1829 = vmatpush.bf16.msra.mxu0 0
      %1830 = vmatpush.bf16.msra.mxu0 0
      %1831 = vmatpush.bf16.msra.mxu0 0
      %1832 = vmatpush.bf16.msra.mxu0 0
      %1833 = vmatpush.bf16.msra.mxu0 0
      %1834 = vmatpush.bf16.msra.mxu0 0
      %1835 = vmatpush.bf16.msra.mxu0 %v1792
      %1836 = vmatpush.bf16.msra.mxu0 %v1790
      %1837 = vmatmul.bf16.gmra.mxu0 %v1798
      %v1838 = vpop.f32.mrf.mxu0
      %v1839 = vadd.f32 0.0, %v1838
      %v1840 = vpop.f32.mrf.mxu0
      %v1841 = vadd.f32 0.0, %v1840
      %1842 = vmatmul.bf16.gmra.mxu0 %v1801
      %v1843 = vpop.f32.mrf.mxu0
      %v1844 = vadd.f32 0.0, %v1843
      %v1845 = vpop.f32.mrf.mxu0
      %v1846 = vadd.f32 0.0, %v1845
      %1847 = vmatmul.bf16.gmra.mxu0 %v1804
      %v1848 = vpop.f32.mrf.mxu0
      %v1849 = vadd.f32 0.0, %v1848
      %v1850 = vpop.f32.mrf.mxu0
      %1851 = vdwg.mxu0
      %v1852 = vadd.f32 %v1759, %v1816
      %v1853 = vadd.f32 %v1760, %v1839
      %v1854 = vadd.f32 %v1761, %v1818
      %v1855 = vadd.f32 %v1762, %v1841
      %v1856 = vadd.f32 %v1763, %v1821
      %v1857 = vadd.f32 %v1764, %v1844
      %v1858 = vadd.f32 %v1765, %v1823
      %v1859 = vadd.f32 %v1766, %v1846
      %v1860 = vadd.f32 %v1767, %v1826
      %v1861 = vadd.f32 %v1768, %v1849
      %v1862 = vld [vmem:[#allocation2 + $0x4] sm:$0xc]
      %v1863 = vld [vmem:[#allocation2 + $0x14] sm:$0xf]
      %s1864 = scalar_lea.vmem %s4, 192
      %v1865 = vld [vmem:[%s1864] sm:$0xff]
      %v1866 = vld [vmem:[%s1864 + $0x8] sm:$0xff]
      %v1867 = vld [vmem:[%s1864 + $0x10] sm:$0xff]
      %v1868 = vld [vmem:[%s1864 + $0x18] sm:$0xff]
      %v1871 = vunpack.c.l.b16 %v1862
      %v1872 = vunpack.c.l.b16 %v1863
      %v1873 = vpack.c.b16 %v1550, %v1871
      %v1874 = vpack.c.b16 %v1872, %v1872
      %vm1875 = vcmask 1045504
      %v1876 = vrot.slane %v1873, 2
      %v1877 = vrot.slane %v1775, 2
      %v1878 = vsel %vm1875, %v1876, %v1877
      %v1879 = vrot.slane %v1874, 2
      %v1880 = vsel %vm1875, %v1877, %v1879
      %v1885 = vunpack.c.l.b16 %v1865
      %v1886 = vunpack.c.h.b16 %v1865
      %v1887 = vunpack.c.l.b16 %v1866
      %v1888 = vunpack.c.h.b16 %v1866
      %v1889 = vunpack.c.l.b16 %v1867
      %v1890 = vunpack.c.h.b16 %v1867
      %v1891 = vunpack.c.l.b16 %v1868
      %v1892 = vunpack.c.h.b16 %v1868
      %v1893 = vpack.c.b16 %v1887, %v1885
      %v1894 = vpack.c.b16 %v1888, %v1886
      %v1895 = vpack.c.b16 %v1891, %v1889
      %v1896 = vpack.c.b16 %v1892, %v1890
      %v1902 = vsel %vm1299, %v1878, 0
      %v1905 = vsel %vm1299, %v1880, 0
      %v1908 = vsel %vm1299, %v1879, 0
      %1910 = vmatpush.bf16.msra.mxu0 0
      %1911 = vmatpush.bf16.msra.mxu0 0
      %1912 = vmatpush.bf16.msra.mxu0 0
      %1913 = vmatpush.bf16.msra.mxu0 0
      %1914 = vmatpush.bf16.msra.mxu0 0
      %1915 = vmatpush.bf16.msra.mxu0 0
      %1916 = vmatpush.bf16.msra.mxu0 %v1895
      %1917 = vmatpush.bf16.msra.mxu0 %v1893
      %1918 = vmatmul.bf16.gmra.mxu0 %v1902
      %v1919 = vpop.f32.mrf.mxu0
      %v1920 = vadd.f32 0.0, %v1919
      %v1921 = vpop.f32.mrf.mxu0
      %v1922 = vadd.f32 0.0, %v1921
      %1923 = vmatmul.bf16.gmra.mxu0 %v1905
      %v1924 = vpop.f32.mrf.mxu0
      %v1925 = vadd.f32 0.0, %v1924
      %v1926 = vpop.f32.mrf.mxu0
      %v1927 = vadd.f32 0.0, %v1926
      %1928 = vmatmul.bf16.gmra.mxu0 %v1908
      %v1929 = vpop.f32.mrf.mxu0
      %v1930 = vadd.f32 0.0, %v1929
      %v1931 = vpop.f32.mrf.mxu0
      %1932 = vdwg.mxu0
      %1933 = vmatpush.bf16.msra.mxu0 0
      %1934 = vmatpush.bf16.msra.mxu0 0
      %1935 = vmatpush.bf16.msra.mxu0 0
      %1936 = vmatpush.bf16.msra.mxu0 0
      %1937 = vmatpush.bf16.msra.mxu0 0
      %1938 = vmatpush.bf16.msra.mxu0 0
      %1939 = vmatpush.bf16.msra.mxu0 %v1896
      %1940 = vmatpush.bf16.msra.mxu0 %v1894
      %1941 = vmatmul.bf16.gmra.mxu0 %v1902
      %v1942 = vpop.f32.mrf.mxu0
      %v1943 = vadd.f32 0.0, %v1942
      %v1944 = vpop.f32.mrf.mxu0
      %v1945 = vadd.f32 0.0, %v1944
      %1946 = vmatmul.bf16.gmra.mxu0 %v1905
      %v1947 = vpop.f32.mrf.mxu0
      %v1948 = vadd.f32 0.0, %v1947
      %v1949 = vpop.f32.mrf.mxu0
      %v1950 = vadd.f32 0.0, %v1949
      %1951 = vmatmul.bf16.gmra.mxu0 %v1908
      %v1952 = vpop.f32.mrf.mxu0
      %v1953 = vadd.f32 0.0, %v1952
      %v1954 = vpop.f32.mrf.mxu0
      %1955 = vdwg.mxu0
      %v1956 = vadd.f32 %v1852, %v1920
      %v1957 = vadd.f32 %v1853, %v1943
      %v1958 = vadd.f32 %v1854, %v1922
      %v1959 = vadd.f32 %v1855, %v1945
      %v1960 = vadd.f32 %v1856, %v1925
      %v1961 = vadd.f32 %v1857, %v1948
      %v1962 = vadd.f32 %v1858, %v1927
      %v1963 = vadd.f32 %v1859, %v1950
      %v1964 = vadd.f32 %v1860, %v1930
      %v1965 = vadd.f32 %v1861, %v1953
      %v1966 = vld [vmem:[#allocation2 + $0x4] sm:$0xc]
      %v1967 = vld [vmem:[#allocation2 + $0x8] sm:$0xf]
      %v1968 = vld [vmem:[#allocation2 + $0xc] sm:$0xf]
      %v1969 = vld [vmem:[#allocation2 + $0x10] sm:$0xf]
      %v1970 = vld [vmem:[#allocation2 + $0x14] sm:$0xf]
      %v1971 = vld [vmem:[#allocation2 + $0x18] sm:$0x1]
      %s1972 = scalar_lea.vmem %s4, 224
      %v1973 = vld [vmem:[%s1972] sm:$0xff]
      %v1974 = vld [vmem:[%s1972 + $0x8] sm:$0xff]
      %v1975 = vld [vmem:[%s1972 + $0x10] sm:$0xff]
      %v1976 = vld [vmem:[%s1972 + $0x18] sm:$0xff]
      %v1983 = vunpack.c.l.b16 %v1966
      %v1984 = vunpack.c.l.b16 %v1967
      %v1985 = vunpack.c.l.b16 %v1968
      %v1986 = vunpack.c.l.b16 %v1969
      %v1987 = vunpack.c.l.b16 %v1970
      %v1988 = vunpack.c.l.b16 %v1971
      %v1989 = vpack.c.b16 %v1984, %v1983
      %v1990 = vpack.c.b16 %v1986, %v1985
      %v1991 = vpack.c.b16 %v1988, %v1987
      %vm1992 = vsmask.f32 5376
      %v1994 = vshrl.u32 %v1989, 16
      %v1996 = vrot.slane %v1994, 2
      %v1997 = vshll.u32 %v1989, 16
      %v1999 = vrot.slane %v1997, 3
      %v2000 = vor.u32 %v1996, %v1999
      %v2002 = vshrl.u32 %v1990, 16
      %v2004 = vrot.slane %v2002, 2
      %v2005 = vshll.u32 %v1990, 16
      %v2007 = vrot.slane %v2005, 3
      %v2008 = vor.u32 %v2004, %v2007
      %v2009 = vsel %vm1992, %v2000, %v2008
      %v2011 = vshrl.u32 %v1991, 16
      %v2013 = vrot.slane %v2011, 2
      %v2014 = vshll.u32 %v1991, 16
      %v2016 = vrot.slane %v2014, 3
      %v2017 = vor.u32 %v2013, %v2016
      %v2018 = vsel %vm1992, %v2008, %v2017
      %v2023 = vunpack.c.l.b16 %v1973
      %v2024 = vunpack.c.h.b16 %v1973
      %v2025 = vunpack.c.l.b16 %v1974
      %v2026 = vunpack.c.h.b16 %v1974
      %v2027 = vunpack.c.l.b16 %v1975
      %v2028 = vunpack.c.h.b16 %v1975
      %v2029 = vunpack.c.l.b16 %v1976
      %v2030 = vunpack.c.h.b16 %v1976
      %v2031 = vpack.c.b16 %v2025, %v2023
      %v2032 = vpack.c.b16 %v2026, %v2024
      %v2033 = vpack.c.b16 %v2029, %v2027
      %v2034 = vpack.c.b16 %v2030, %v2028
      %v2040 = vsel %vm1299, %v2009, 0
      %v2043 = vsel %vm1299, %v2018, 0
      %v2046 = vsel %vm1299, %v2017, 0
      %2048 = vmatpush.bf16.msra.mxu0 0
      %2049 = vmatpush.bf16.msra.mxu0 0
      %2050 = vmatpush.bf16.msra.mxu0 0
      %2051 = vmatpush.bf16.msra.mxu0 0
      %2052 = vmatpush.bf16.msra.mxu0 0
      %2053 = vmatpush.bf16.msra.mxu0 0
      %2054 = vmatpush.bf16.msra.mxu0 %v2033
      %2055 = vmatpush.bf16.msra.mxu0 %v2031
      %2056 = vmatmul.bf16.gmra.mxu0 %v2040
      %v2057 = vpop.f32.mrf.mxu0
      %v2058 = vadd.f32 0.0, %v2057
      %v2059 = vpop.f32.mrf.mxu0
      %v2060 = vadd.f32 0.0, %v2059
      %2061 = vmatmul.bf16.gmra.mxu0 %v2043
      %v2062 = vpop.f32.mrf.mxu0
      %v2063 = vadd.f32 0.0, %v2062
      %v2064 = vpop.f32.mrf.mxu0
      %v2065 = vadd.f32 0.0, %v2064
      %2066 = vmatmul.bf16.gmra.mxu0 %v2046
      %v2067 = vpop.f32.mrf.mxu0
      %v2068 = vadd.f32 0.0, %v2067
      %v2069 = vpop.f32.mrf.mxu0
      %2070 = vdwg.mxu0
      %2071 = vmatpush.bf16.msra.mxu0 0
      %2072 = vmatpush.bf16.msra.mxu0 0
      %2073 = vmatpush.bf16.msra.mxu0 0
      %2074 = vmatpush.bf16.msra.mxu0 0
      %2075 = vmatpush.bf16.msra.mxu0 0
      %2076 = vmatpush.bf16.msra.mxu0 0
      %2077 = vmatpush.bf16.msra.mxu0 %v2034
      %2078 = vmatpush.bf16.msra.mxu0 %v2032
      %2079 = vmatmul.bf16.gmra.mxu0 %v2040
      %v2080 = vpop.f32.mrf.mxu0
      %v2081 = vadd.f32 0.0, %v2080
      %v2082 = vpop.f32.mrf.mxu0
      %v2083 = vadd.f32 0.0, %v2082
      %2084 = vmatmul.bf16.gmra.mxu0 %v2043
      %v2085 = vpop.f32.mrf.mxu0
      %v2086 = vadd.f32 0.0, %v2085
      %v2087 = vpop.f32.mrf.mxu0
      %v2088 = vadd.f32 0.0, %v2087
      %2089 = vmatmul.bf16.gmra.mxu0 %v2046
      %v2090 = vpop.f32.mrf.mxu0
      %v2091 = vadd.f32 0.0, %v2090
      %v2092 = vpop.f32.mrf.mxu0
      %2093 = vdwg.mxu0
      %v2094 = vadd.f32 %v1956, %v2058
      %v2095 = vadd.f32 %v1957, %v2081
      %v2096 = vadd.f32 %v1958, %v2060
      %v2097 = vadd.f32 %v1959, %v2083
      %v2098 = vadd.f32 %v1960, %v2063
      %v2099 = vadd.f32 %v1961, %v2086
      %v2100 = vadd.f32 %v1962, %v2065
      %v2101 = vadd.f32 %v1963, %v2088
      %v2102 = vadd.f32 %v1964, %v2068
      %v2103 = vadd.f32 %v1965, %v2091
      %v2104 = vld [vmem:[#allocation2 + $0x4] sm:$0x8]
      %s2105 = scalar_lea.vmem %s4, 256
      %v2106 = vld [vmem:[%s2105] sm:$0xff]
      %v2107 = vld [vmem:[%s2105 + $0x8] sm:$0xff]
      %v2108 = vld [vmem:[%s2105 + $0x10] sm:$0xff]
      %v2109 = vld [vmem:[%s2105 + $0x18] sm:$0xff]
      %v2111 = vunpack.c.l.b16 %v2104
      %v2112 = vpack.c.b16 %v1984, %v2111
      %v2113 = vrot.slane %v2112, 3
      %v2114 = vrot.slane %v1990, 3
      %v2115 = vsel %vm1557, %v2113, %v2114
      %v2116 = vrot.slane %v1991, 3
      %v2117 = vsel %vm1557, %v2114, %v2116
      %v2122 = vunpack.c.l.b16 %v2106
      %v2123 = vunpack.c.h.b16 %v2106
      %v2124 = vunpack.c.l.b16 %v2107
      %v2125 = vunpack.c.h.b16 %v2107
      %v2126 = vunpack.c.l.b16 %v2108
      %v2127 = vunpack.c.h.b16 %v2108
      %v2128 = vunpack.c.l.b16 %v2109
      %v2129 = vunpack.c.h.b16 %v2109
      %v2130 = vpack.c.b16 %v2124, %v2122
      %v2131 = vpack.c.b16 %v2125, %v2123
      %v2132 = vpack.c.b16 %v2128, %v2126
      %v2133 = vpack.c.b16 %v2129, %v2127
      %v2139 = vsel %vm1299, %v2115, 0
      %v2142 = vsel %vm1299, %v2117, 0
      %v2145 = vsel %vm1299, %v2116, 0
      %2147 = vmatpush.bf16.msra.mxu0 0
      %2148 = vmatpush.bf16.msra.mxu0 0
      %2149 = vmatpush.bf16.msra.mxu0 0
      %2150 = vmatpush.bf16.msra.mxu0 0
      %2151 = vmatpush.bf16.msra.mxu0 0
      %2152 = vmatpush.bf16.msra.mxu0 0
      %2153 = vmatpush.bf16.msra.mxu0 %v2132
      %2154 = vmatpush.bf16.msra.mxu0 %v2130
      %2155 = vmatmul.bf16.gmra.mxu0 %v2139
      %v2156 = vpop.f32.mrf.mxu0
      %v2157 = vadd.f32 0.0, %v2156
      %v2158 = vpop.f32.mrf.mxu0
      %v2159 = vadd.f32 0.0, %v2158
      %2160 = vmatmul.bf16.gmra.mxu0 %v2142
      %v2161 = vpop.f32.mrf.mxu0
      %v2162 = vadd.f32 0.0, %v2161
      %v2163 = vpop.f32.mrf.mxu0
      %v2164 = vadd.f32 0.0, %v2163
      %2165 = vmatmul.bf16.gmra.mxu0 %v2145
      %v2166 = vpop.f32.mrf.mxu0
      %v2167 = vadd.f32 0.0, %v2166
      %v2168 = vpop.f32.mrf.mxu0
      %2169 = vdwg.mxu0
      %2170 = vmatpush.bf16.msra.mxu0 0
      %2171 = vmatpush.bf16.msra.mxu0 0
      %2172 = vmatpush.bf16.msra.mxu0 0
      %2173 = vmatpush.bf16.msra.mxu0 0
      %2174 = vmatpush.bf16.msra.mxu0 0
      %2175 = vmatpush.bf16.msra.mxu0 0
      %2176 = vmatpush.bf16.msra.mxu0 %v2133
      %2177 = vmatpush.bf16.msra.mxu0 %v2131
      %2178 = vmatmul.bf16.gmra.mxu0 %v2139
      %v2179 = vpop.f32.mrf.mxu0
      %v2180 = vadd.f32 0.0, %v2179
      %v2181 = vpop.f32.mrf.mxu0
      %v2182 = vadd.f32 0.0, %v2181
      %2183 = vmatmul.bf16.gmra.mxu0 %v2142
      %v2184 = vpop.f32.mrf.mxu0
      %v2185 = vadd.f32 0.0, %v2184
      %v2186 = vpop.f32.mrf.mxu0
      %v2187 = vadd.f32 0.0, %v2186
      %2188 = vmatmul.bf16.gmra.mxu0 %v2145
      %v2189 = vpop.f32.mrf.mxu0
      %v2190 = vadd.f32 0.0, %v2189
      %v2191 = vpop.f32.mrf.mxu0
      %2192 = vdwg.mxu0
      %v2193 = vadd.f32 %v2094, %v2157
      %v2194 = vadd.f32 %v2095, %v2180
      %v2195 = vadd.f32 %v2096, %v2159
      %v2196 = vadd.f32 %v2097, %v2182
      %v2197 = vadd.f32 %v2098, %v2162
      %v2198 = vadd.f32 %v2099, %v2185
      %v2199 = vadd.f32 %v2100, %v2164
      %v2200 = vadd.f32 %v2101, %v2187
      %v2201 = vadd.f32 %v2102, %v2167
      %v2202 = vadd.f32 %v2103, %v2190
      %v2203 = vld [vmem:[%s5] sm:$0x3]
      %v2205 = vperm.slane %v2203, 0
      %v2206 = vperm.slane %v2203, 1
      %v2209 = vadd.f32 %v2193, %v2205
      %v2210 = vadd.f32 %v2194, %v2206
      %v2211 = vadd.f32 %v2195, %v2205
      %v2212 = vadd.f32 %v2196, %v2206
      %v2213 = vadd.f32 %v2197, %v2205
      %v2214 = vadd.f32 %v2198, %v2206
      %v2215 = vadd.f32 %v2199, %v2205
      %v2216 = vadd.f32 %v2200, %v2206
      %v2217 = vadd.f32 %v2201, %v2205
      %v2218 = vadd.f32 %v2202, %v2206
      %v2219 = vpack.c.bf16 %v2210, %v2209
      %v2220 = vpack.c.bf16 %v2212, %v2211
      %v2221 = vpack.c.bf16 %v2214, %v2213
      %v2222 = vpack.c.bf16 %v2216, %v2215
      %v2223 = vpack.c.bf16 %v2218, %v2217
      %2224 = vst [vmem:[%s278] sm:$0xff] %v2219
      %2225 = vst [vmem:[%s278 + $0x8] sm:$0xff] %v2220
      %2226 = vst [vmem:[%s278 + $0x10] sm:$0xff] %v2221
      %2227 = vst [vmem:[%s278 + $0x18] sm:$0xff] %v2222
      %2228 = vst [vmem:[%s278 + $0x20] sm:$0x33] %v2223
      %p2229 = scmp.lt.s32.totalorder %s18, 1
      %s2230 = scalar_select %p2229, %s18, 1
      %s2231 = smul.addr %s2230, 10
      %s2232 = smul.addr %s2231, 4
      %s2233 = scalar_lea.vmem %s7, %s2232
      // Predicated region
      $region56: #{ifblock_forward.5} parent=47 // pred_check
        %p2234 = pneg %p188
      $region57: #{ifblock_forward.5} parent=47 // pred_check_branch
        %2236 = sbr.rel (%p2234) target = $region59
      $region58: #{ifblock_forward.5} parent=47 // pred_region
        _
      $region59: #{ifblock_forward.5} parent=47 // pred_fallthru
        _
    $region48: #{ifblock_forward.5} parent=5 // pred_fallthru
      _
    %p2237 = scmp.le.s32.totalorder 2, %s13
    // Predicated region
    $region60: #{ifblock_forward.5} parent=5 // pred_check
      %p2238 = pneg %p2237
    $region61: #{ifblock_forward.5} parent=5 // pred_check_branch
      %2240 = sbr.rel (%p2238) target = $region63
    $region62: #{ifblock_forward.5} parent=5 // pred_region
      %s2241 = ssub.s32 %s13, 2
      // Predicated region
      $region64: #{ifblock_forward.5} parent=62 // pred_check
        %p2242 = pneg %p194
      $region65: #{ifblock_forward.5} parent=62 // pred_check_branch
        %2244 = sbr.rel (%p2242) target = $region67
      $region66: #{ifblock_forward.5} parent=62 // pred_region
        %p2245 = scmp.lt.s32.totalorder %s19, 1
        %s2246 = scalar_select %p2245, %s19, 1
        %s2247 = smul.addr %s2246, 10
        %s2248 = smul.addr %s2247, 4
        %s2249 = scalar_lea.vmem %s7, %s2248
      $region67: #{ifblock_forward.5} parent=62 // pred_fallthru
        _
    $region63: #{ifblock_forward.5} parent=5 // pred_fallthru
      _
  $region6: #{ifblock_forward.5} parent=0 // loop_footer
    %s17 = sadd.s32 1, %s13
  $region7: #{ifblock_forward.5} parent=0 // loop_footer_branch
    %12 = sbr.rel target = $region3
  $region8: #{ifblock_forward.5} parent=0 // loop_exit
    _

</llo_original>
